<compile_context>
chip_gen: v6e
topology: v6e:2x2x1
jax: 0.10.0
libtpu: 0.0.40
codegen_flags: <defaults>
</compile_context>

<pallas_src>
import functools

import jax
import jax.numpy as jnp
from jax.experimental import pallas as pl
from jax.experimental.pallas import tpu as pltpu


# Model hyper-parameters (true, unpadded sizes).
INPUT_DIM, HIDDEN_DIM, OUTPUT_DIM = 4, 32, 8
NUM_LAYERS = 3

# Lane-dense padded sizes (everything the kernel touches).
N_PAD = 128      # padded node count   -> attention matrices are (128, 128)
F_PAD = 128      # padded feature / hidden dim
G_PAD = 8        # padded graph count (sublane aligned)
O_PAD = 128      # padded class dim for a lane-dense final store


def _vmem():
    return pl.BlockSpec(memory_space=pltpu.MemorySpace.VMEM)


def _smem():
    return pl.BlockSpec(memory_space=pltpu.MemorySpace.SMEM)


# ----------------------------------------------------------------------------
# Fused kernel: 3 x (GATConv + ReLU [+ LayerNorm]) + mean-pool + MLP + log_softmax
# ----------------------------------------------------------------------------
def _gnn_fused_kernel(c_ref,                              # SMEM (L,) edge scalars
                      x_ref, adj_ref, ev_ref, pool_ref,
                      w_ref, asrc_ref, adst_ref, bias_ref,
                      gamma_ref, beta_ref,
                      w1_ref, b1_ref, w2_ref, b2_ref,
                      o_ref,
                      *, num_layers, h_real, out_real,
                      negative_slope=0.2, ln_eps=1e-5):
    f32 = jnp.float32
    neg_big = f32(-1e30)

    adj = adj_ref[...]                                     # (N, N)
    ev = ev_ref[...]                                       # (N, N)
    # Additive softmax mask, hoisted out of the (unrolled) layer loop.
    attn_bias = jnp.where(adj > 0, f32(0.0), neg_big)

    x = x_ref[...]                                         # (N, F_PAD)
    for l in range(num_layers):                            # unrolled in Python
        w = w_ref[l]                                       # (F_PAD, F_PAD)
        h = jnp.dot(x.astype(jnp.bfloat16), w.astype(jnp.bfloat16),
                    preferred_element_type=f32)            # (N, F_PAD)

        # Attention logits: contract the hidden dim on the MXU.
        a_dst = jax.lax.dot_general(h, adst_ref[l], (((1,), (1,)), ((), ())),
                                    preferred_element_type=f32)      # (N, 1)
        a_src = jax.lax.dot_general(asrc_ref[l], h, (((1,), (1,)), ((), ())),
                                    preferred_element_type=f32)      # (1, N)

        # edge_dim == 1  =>  alpha_edge(e) = e * (att_edge . w_edge) = e * c
        logits = a_dst + a_src + c_ref[l] * ev                       # (N, N)
        logits = jnp.where(logits > 0, logits, negative_slope * logits)  # LeakyReLU
        logits = logits + attn_bias
        logits = logits - jnp.max(logits, axis=-1, keepdims=True)
        p = jnp.exp(logits)               # masked entries underflow to exactly 0
        alpha = p * pl.reciprocal(jnp.sum(p, axis=-1, keepdims=True), approx=True)

        out = jnp.dot(alpha.astype(jnp.bfloat16), h.astype(jnp.bfloat16),
                      preferred_element_type=f32) + bias_ref[l]
        out = jnp.maximum(out, f32(0.0))                   # ReLU; dropout = id

        if l != num_layers - 1:
            # LayerNorm over the real hidden size (padded cols are zero, so the
            # sums are exact; E[x^2]-mean^2 avoids a masked subtraction).
            inv_h = f32(1.0 / h_real)
            mean = jnp.sum(out, axis=-1, keepdims=True) * inv_h
            var = jnp.sum(out * out, axis=-1, keepdims=True) * inv_h - mean * mean
            var = jnp.maximum(var, f32(0.0))
            out = (out - mean) * jax.lax.rsqrt(var + f32(ln_eps))
            out = out * gamma_ref[l] + beta_ref[l]         # padded cols -> 0
        x = out

    # global_mean_pool as a matmul with the precomputed (G, N) pooling matrix.
    pooled = jnp.dot(pool_ref[...].astype(jnp.bfloat16), x.astype(jnp.bfloat16),
                     preferred_element_type=f32)           # (G, F_PAD)
    y = jnp.dot(pooled.astype(jnp.bfloat16), w1_ref[...].astype(jnp.bfloat16),
                preferred_element_type=f32) + b1_ref[...]
    # nn.Dropout(0.25) is identity in eval mode.
    y = jnp.dot(y.astype(jnp.bfloat16), w2_ref[...].astype(jnp.bfloat16),
                preferred_element_type=f32) + b2_ref[...]  # (G, O_PAD)

    # log_softmax over the real classes only (padded classes masked off).
    col = jax.lax.broadcasted_iota(jnp.int32, y.shape, 1)
    y = jnp.where(col < out_real, y, neg_big)
    y = y - jnp.max(y, axis=-1, keepdims=True)
    y = y - jnp.log(jnp.sum(jnp.exp(y), axis=-1, keepdims=True))
    o_ref[...] = y


def gnn_forward(x_pad, adj, ev, pool_mat, packed):
    kernel = functools.partial(_gnn_fused_kernel, num_layers=NUM_LAYERS,
                               h_real=HIDDEN_DIM, out_real=OUTPUT_DIM)
    # TODO(synk): when batching many graphs beyond toy size, add a grid over
    # graph blocks with dimension_semantics=("parallel",) (v7x megacore) and a
    # blocked online softmax to stay within v7x's 64 MiB VMEM.
    return pl.pallas_call(
        kernel,
        out_shape=jax.ShapeDtypeStruct((G_PAD, O_PAD), jnp.float32),
        in_specs=[_smem()] + [_vmem()] * 14,
        out_specs=_vmem(),
    )(packed["c"], x_pad, adj, ev, pool_mat,
      packed["w"], packed["att_src"], packed["att_dst"], packed["bias"],
      packed["ln_gamma"], packed["ln_beta"],
      packed["w1"], packed["b1"], packed["w2"], packed["b2"])


# ----------------------------------------------------------------------------
# Parameter init (deterministic, mirrors GNNStack.__init__ shapes) + packing
# ----------------------------------------------------------------------------
def init_raw_params(key):
    def conv_params(k, in_dim):
        ks = jax.random.split(k, 5)
        return {
            "w": 0.2 * jax.random.normal(ks[0], (in_dim, HIDDEN_DIM), jnp.float32),
            "att_src": 0.2 * jax.random.normal(ks[1], (1, HIDDEN_DIM), jnp.float32),
            "att_dst": 0.2 * jax.random.normal(ks[2], (1, HIDDEN_DIM), jnp.float32),
            "w_edge": 0.2 * jax.random.normal(ks[3], (1, HIDDEN_DIM), jnp.float32),
            "att_edge": 0.2 * jax.random.normal(ks[4], (1, HIDDEN_DIM), jnp.float32),
            "bias": jnp.zeros((1, HIDDEN_DIM), jnp.float32),
        }

    keys = jax.random.split(key, 8)
    # __init__ builds 4 convs; forward only uses the first num_layers=3.
    convs = [conv_params(keys[0], INPUT_DIM)] + \
            [conv_params(keys[i], HIDDEN_DIM) for i in (1, 2, 3)]
    return {
        "convs": convs,
        "ln_gamma": [jnp.ones((1, HIDDEN_DIM), jnp.float32) for _ in range(2)],
        "ln_beta": [jnp.zeros((1, HIDDEN_DIM), jnp.float32) for _ in range(2)],
        "post_mp": {
            "w1": 0.2 * jax.random.normal(keys[4], (HIDDEN_DIM, HIDDEN_DIM), jnp.float32),
            "b1": jnp.zeros((1, HIDDEN_DIM), jnp.float32),
            "w2": 0.2 * jax.random.normal(keys[5], (HIDDEN_DIM, OUTPUT_DIM), jnp.float32),
            "b2": jnp.zeros((1, OUTPUT_DIM), jnp.float32),
        },
    }


def _pad2(a, rows, cols):
    return jnp.zeros((rows, cols), a.dtype).at[:a.shape[0], :a.shape[1]].set(a)


def pack_params(raw):
    convs = raw["convs"][:NUM_LAYERS]
    return {
        # Stacked, zero-padded per-layer weights (layer 0's (4,32) W pads the
        # same as the (32,32) ones, so all layers share one (L,128,128) stack).
        "w": jnp.stack([_pad2(c["w"], F_PAD, F_PAD) for c in convs]),
        "att_src": jnp.stack([_pad2(c["att_src"], 1, F_PAD) for c in convs]),
        "att_dst": jnp.stack([_pad2(c["att_dst"], 1, F_PAD) for c in convs]),
        "bias": jnp.stack([_pad2(c["bias"], 1, F_PAD) for c in convs]),
        # edge_dim == 1: one scalar per layer, read from SMEM in the kernel.
        "c": jnp.stack([jnp.sum(c["att_edge"] * c["w_edge"]) for c in convs]),
        "ln_gamma": jnp.stack([_pad2(g, 1, F_PAD) for g in raw["ln_gamma"]]),
        "ln_beta": jnp.stack([_pad2(b, 1, F_PAD) for b in raw["ln_beta"]]),
        "w1": _pad2(raw["post_mp"]["w1"], F_PAD, F_PAD),
        "b1": _pad2(raw["post_mp"]["b1"], 1, F_PAD),
        "w2": _pad2(raw["post_mp"]["w2"], F_PAD, O_PAD),
        "b2": _pad2(raw["post_mp"]["b2"], 1, O_PAD),
    }


# ----------------------------------------------------------------------------
# Graph glue: padded dense adjacency / edge-value matrices and pooling matrix
# ----------------------------------------------------------------------------
def build_dense_graph(edge_index, edge_attr, n_pad):
    src, dst = edge_index[0], edge_index[1]
    adj = jnp.zeros((n_pad, n_pad), jnp.float32).at[dst, src].set(1.0)
    ev = jnp.zeros((n_pad, n_pad), jnp.float32).at[dst, src].set(edge_attr[:, 0])
    # GATConv add_self_loops=True with fill_value='mean' for edge_attr.
    # Padded nodes also get self-loops so every softmax row is well defined;
    # they never connect to real nodes so real results are unaffected.
    mean_attr = jnp.mean(edge_attr[:, 0])
    diag = jnp.arange(n_pad)
    adj = adj.at[diag, diag].set(1.0)
    ev = ev.at[diag, diag].set(mean_attr)
    return adj, ev


def build_pool_matrix(batch, num_graphs, g_pad, n_pad):
    one_hot = (batch[None, :] == jnp.arange(num_graphs)[:, None]).astype(jnp.float32)
    pm = one_hot / jnp.sum(one_hot, axis=1, keepdims=True)       # (G, N_real)
    return (jnp.zeros((g_pad, n_pad), jnp.float32)
            .at[:num_graphs, :batch.shape[0]].set(pm))


# ----------------------------------------------------------------------------
# Example run
# ----------------------------------------------------------------------------
if __name__ == "__main__":
    NODES_PER_GRAPH, NUM_GRAPHS = 8, 2
    n_real = NODES_PER_GRAPH * NUM_GRAPHS

    key = jax.random.PRNGKey(0)
    k_param, k_x, k_e = jax.random.split(key, 3)

    raw_params = init_raw_params(k_param)
    packed = pack_params(raw_params)

    # Synthetic graph: per-graph bidirectional ring + two chords, no self loops.
    src, dst = [], []
    for g in range(NUM_GRAPHS):
        base = g * NODES_PER_GRAPH
        for i in range(NODES_PER_GRAPH):
            j = (i + 1) % NODES_PER_GRAPH
            src += [base + i, base + j]
            dst += [base + j, base + i]
        src += [base + 0, base + 3]
        dst += [base + 4, base + 7]
    edge_index = jnp.array([src, dst], dtype=jnp.int32)          # (2, E)
    num_edges = edge_index.shape[1]

    x = jax.random.normal(k_x, (n_real, INPUT_DIM), jnp.float32)
    edge_attr = jax.random.uniform(k_e, (num_edges, 1), jnp.float32)
    batch = jnp.repeat(jnp.arange(NUM_GRAPHS, dtype=jnp.int32), NODES_PER_GRAPH)

    x_pad = _pad2(x, N_PAD, F_PAD)
    adj, ev = build_dense_graph(edge_index, edge_attr, N_PAD)
    pool_mat = build_pool_matrix(batch, NUM_GRAPHS, G_PAD, N_PAD)

    out_pad = gnn_forward(x_pad, adj, ev, pool_mat, packed)
    out_pad = jax.block_until_ready(out_pad)
    out = out_pad[:NUM_GRAPHS, :OUTPUT_DIM]

    assert out.shape == (NUM_GRAPHS, OUTPUT_DIM)
    assert bool(jnp.all(jnp.isfinite(out)))
    # rows of log_softmax must exp-sum to 1
    assert bool(jnp.allclose(jnp.sum(jnp.exp(out), axis=1), 1.0, atol=1e-4))
    print("KERNEL_OK")
</pallas_src>

<mosaic_0001>
module attributes {stable_mosaic.version = 11 : i64} {
  func.func @_gnn_fused_kernel(%arg0: memref<3xf32, #tpu.memory_space<smem>>, %arg1: memref<128x128xf32, #tpu.memory_space<vmem>>, %arg2: memref<128x128xf32, #tpu.memory_space<vmem>>, %arg3: memref<128x128xf32, #tpu.memory_space<vmem>>, %arg4: memref<8x128xf32, #tpu.memory_space<vmem>>, %arg5: memref<3x128x128xf32, #tpu.memory_space<vmem>>, %arg6: memref<3x1x128xf32, #tpu.memory_space<vmem>>, %arg7: memref<3x1x128xf32, #tpu.memory_space<vmem>>, %arg8: memref<3x1x128xf32, #tpu.memory_space<vmem>>, %arg9: memref<2x1x128xf32, #tpu.memory_space<vmem>>, %arg10: memref<2x1x128xf32, #tpu.memory_space<vmem>>, %arg11: memref<128x128xf32, #tpu.memory_space<vmem>>, %arg12: memref<1x128xf32, #tpu.memory_space<vmem>>, %arg13: memref<128x128xf32, #tpu.memory_space<vmem>>, %arg14: memref<1x128xf32, #tpu.memory_space<vmem>>, %arg15: memref<8x128xf32, #tpu.memory_space<vmem>>) attributes {dimension_semantics = [], scalar_prefetch = 0 : i64, scratch_operands = 0 : i64, tpu.core_type = #tpu.core_type<tc>} {
    %c0 = arith.constant 0 : index
    %c0_0 = arith.constant 0 : index
    %0 = vector.load %arg2[%c0, %c0_0] : memref<128x128xf32, #tpu.memory_space<vmem>>, vector<128x128xf32>
    %c0_1 = arith.constant 0 : index
    %c0_2 = arith.constant 0 : index
    %1 = vector.load %arg3[%c0_1, %c0_2] : memref<128x128xf32, #tpu.memory_space<vmem>>, vector<128x128xf32>
    %cst = arith.constant 0.000000e+00 : f32
    %2 = vector.broadcast %cst : f32 to vector<128x128xf32>
    %3 = arith.cmpf ogt, %0, %2 : vector<128x128xf32>
    %cst_3 = arith.constant 0.000000e+00 : f32
    %cst_4 = arith.constant -1.000000e+30 : f32
    %4 = vector.broadcast %cst_3 : f32 to vector<128x128xf32>
    %5 = vector.broadcast %cst_4 : f32 to vector<128x128xf32>
    %6 = arith.select %3, %4, %5 : vector<128x128xi1>, vector<128x128xf32>
    %c0_5 = arith.constant 0 : index
    %c0_6 = arith.constant 0 : index
    %7 = vector.load %arg1[%c0_5, %c0_6] : memref<128x128xf32, #tpu.memory_space<vmem>>, vector<128x128xf32>
    %c0_7 = arith.constant 0 : index
    %c0_8 = arith.constant 0 : index
    %c0_9 = arith.constant 0 : index
    %8 = vector.load %arg5[%c0_7, %c0_8, %c0_9] : memref<3x128x128xf32, #tpu.memory_space<vmem>>, vector<1x128x128xf32>
    %9 = vector.shape_cast %8 : vector<1x128x128xf32> to vector<128x128xf32>
    %10 = arith.truncf %7 : vector<128x128xf32> to vector<128x128xbf16>
    %11 = arith.truncf %9 : vector<128x128xf32> to vector<128x128xbf16>
    %cst_10 = arith.constant dense<0.000000e+00> : vector<128x128xf32>
    %12 = tpu.matmul %10, %11, %cst_10 {dimension_numbers = #tpu.dot_dimension_numbers<[1], [0], [0], [1], [0, 0, 1, 1], [], []>} : vector<128x128xbf16>, vector<128x128xbf16>, vector<128x128xf32> -> vector<128x128xf32>
    %c0_11 = arith.constant 0 : index
    %c0_12 = arith.constant 0 : index
    %c0_13 = arith.constant 0 : index
    %13 = vector.load %arg7[%c0_11, %c0_12, %c0_13] : memref<3x1x128xf32, #tpu.memory_space<vmem>>, vector<1x1x128xf32>
    %14 = vector.shape_cast %13 : vector<1x1x128xf32> to vector<1x128xf32>
    %cst_14 = arith.constant dense<0.000000e+00> : vector<128x1xf32>
    %15 = tpu.matmul %12, %14, %cst_14 {dimension_numbers = #tpu.dot_dimension_numbers<[1], [1], [0], [0], [0, 0, 1, 0], [], []>} : vector<128x128xf32>, vector<1x128xf32>, vector<128x1xf32> -> vector<128x1xf32>
    %c0_15 = arith.constant 0 : index
    %c0_16 = arith.constant 0 : index
    %c0_17 = arith.constant 0 : index
    %16 = vector.load %arg6[%c0_15, %c0_16, %c0_17] : memref<3x1x128xf32, #tpu.memory_space<vmem>>, vector<1x1x128xf32>
    %17 = vector.shape_cast %16 : vector<1x1x128xf32> to vector<1x128xf32>
    %cst_18 = arith.constant dense<0.000000e+00> : vector<1x128xf32>
    %18 = tpu.matmul %17, %12, %cst_18 {dimension_numbers = #tpu.dot_dimension_numbers<[1], [1], [0], [0], [0, 0, 1, 0], [], []>} : vector<1x128xf32>, vector<128x128xf32>, vector<1x128xf32> -> vector<1x128xf32>
    %19 = vector.broadcast %15 : vector<128x1xf32> to vector<128x128xf32>
    %20 = vector.broadcast %18 : vector<1x128xf32> to vector<128x128xf32>
    %21 = arith.addf %19, %20 : vector<128x128xf32>
    %c0_19 = arith.constant 0 : index
    %22 = memref.load %arg0[%c0_19] : memref<3xf32, #tpu.memory_space<smem>>
    %23 = vector.broadcast %22 : f32 to vector<128x128xf32>
    %24 = arith.mulf %23, %1 : vector<128x128xf32>
    %25 = arith.addf %21, %24 : vector<128x128xf32>
    %cst_20 = arith.constant 0.000000e+00 : f32
    %26 = vector.broadcast %cst_20 : f32 to vector<128x128xf32>
    %27 = arith.cmpf ogt, %25, %26 : vector<128x128xf32>
    %cst_21 = arith.constant 2.000000e-01 : f32
    %28 = vector.broadcast %cst_21 : f32 to vector<128x128xf32>
    %29 = arith.mulf %28, %25 : vector<128x128xf32>
    %30 = arith.select %27, %25, %29 : vector<128x128xi1>, vector<128x128xf32>
    %31 = arith.addf %30, %6 : vector<128x128xf32>
    %cst_22 = arith.constant dense<0xFF800000> : vector<128xf32>
    %32 = vector.multi_reduction <maximumf>, %31, %cst_22 [1] : vector<128x128xf32> to vector<128xf32>
    %33 = vector.shape_cast %32 : vector<128xf32> to vector<128x1xf32>
    %34 = vector.broadcast %33 : vector<128x1xf32> to vector<128x128xf32>
    %35 = arith.subf %31, %34 : vector<128x128xf32>
    %36 = math.exp %35 : vector<128x128xf32>
    %cst_23 = arith.constant dense<0.000000e+00> : vector<128xf32>
    %37 = vector.multi_reduction <add>, %36, %cst_23 [1] : vector<128x128xf32> to vector<128xf32>
    %38 = vector.shape_cast %37 : vector<128xf32> to vector<128x1xf32>
    %39 = tpu.reciprocal %38 {approx = true} : vector<128x1xf32> -> vector<128x1xf32>
    %40 = vector.broadcast %39 : vector<128x1xf32> to vector<128x128xf32>
    %41 = arith.mulf %36, %40 : vector<128x128xf32>
    %42 = arith.truncf %41 : vector<128x128xf32> to vector<128x128xbf16>
    %43 = arith.truncf %12 : vector<128x128xf32> to vector<128x128xbf16>
    %cst_24 = arith.constant dense<0.000000e+00> : vector<128x128xf32>
    %44 = tpu.matmul %42, %43, %cst_24 {dimension_numbers = #tpu.dot_dimension_numbers<[1], [0], [0], [1], [0, 0, 1, 1], [], []>} : vector<128x128xbf16>, vector<128x128xbf16>, vector<128x128xf32> -> vector<128x128xf32>
    %c0_25 = arith.constant 0 : index
    %c0_26 = arith.constant 0 : index
    %c0_27 = arith.constant 0 : index
    %45 = vector.load %arg8[%c0_25, %c0_26, %c0_27] : memref<3x1x128xf32, #tpu.memory_space<vmem>>, vector<1x1x128xf32>
    %46 = vector.shape_cast %45 : vector<1x1x128xf32> to vector<1x128xf32>
    %47 = vector.broadcast %46 : vector<1x128xf32> to vector<128x128xf32>
    %48 = arith.addf %44, %47 : vector<128x128xf32>
    %cst_28 = arith.constant 0.000000e+00 : f32
    %49 = vector.broadcast %cst_28 : f32 to vector<128x128xf32>
    %50 = arith.maximumf %48, %49 : vector<128x128xf32>
    %cst_29 = arith.constant dense<0.000000e+00> : vector<128xf32>
    %51 = vector.multi_reduction <add>, %50, %cst_29 [1] : vector<128x128xf32> to vector<128xf32>
    %52 = vector.shape_cast %51 : vector<128xf32> to vector<128x1xf32>
    %cst_30 = arith.constant 3.125000e-02 : f32
    %53 = vector.broadcast %cst_30 : f32 to vector<128x1xf32>
    %54 = arith.mulf %52, %53 : vector<128x1xf32>
    %55 = arith.mulf %50, %50 : vector<128x128xf32>
    %cst_31 = arith.constant dense<0.000000e+00> : vector<128xf32>
    %56 = vector.multi_reduction <add>, %55, %cst_31 [1] : vector<128x128xf32> to vector<128xf32>
    %57 = vector.shape_cast %56 : vector<128xf32> to vector<128x1xf32>
    %cst_32 = arith.constant 3.125000e-02 : f32
    %58 = vector.broadcast %cst_32 : f32 to vector<128x1xf32>
    %59 = arith.mulf %57, %58 : vector<128x1xf32>
    %60 = arith.mulf %54, %54 : vector<128x1xf32>
    %61 = arith.subf %59, %60 : vector<128x1xf32>
    %cst_33 = arith.constant 0.000000e+00 : f32
    %62 = vector.broadcast %cst_33 : f32 to vector<128x1xf32>
    %63 = arith.maximumf %61, %62 : vector<128x1xf32>
    %64 = vector.broadcast %54 : vector<128x1xf32> to vector<128x128xf32>
    %65 = arith.subf %50, %64 : vector<128x128xf32>
    %cst_34 = arith.constant 9.99999974E-6 : f32
    %66 = vector.broadcast %cst_34 : f32 to vector<128x1xf32>
    %67 = arith.addf %63, %66 : vector<128x1xf32>
    %68 = math.rsqrt %67 : vector<128x1xf32>
    %69 = vector.broadcast %68 : vector<128x1xf32> to vector<128x128xf32>
    %70 = arith.mulf %65, %69 : vector<128x128xf32>
    %c0_35 = arith.constant 0 : index
    %c0_36 = arith.constant 0 : index
    %c0_37 = arith.constant 0 : index
    %71 = vector.load %arg9[%c0_35, %c0_36, %c0_37] : memref<2x1x128xf32, #tpu.memory_space<vmem>>, vector<1x1x128xf32>
    %72 = vector.shape_cast %71 : vector<1x1x128xf32> to vector<1x128xf32>
    %73 = vector.broadcast %72 : vector<1x128xf32> to vector<128x128xf32>
    %74 = arith.mulf %70, %73 : vector<128x128xf32>
    %c0_38 = arith.constant 0 : index
    %c0_39 = arith.constant 0 : index
    %c0_40 = arith.constant 0 : index
    %75 = vector.load %arg10[%c0_38, %c0_39, %c0_40] : memref<2x1x128xf32, #tpu.memory_space<vmem>>, vector<1x1x128xf32>
    %76 = vector.shape_cast %75 : vector<1x1x128xf32> to vector<1x128xf32>
    %77 = vector.broadcast %76 : vector<1x128xf32> to vector<128x128xf32>
    %78 = arith.addf %74, %77 : vector<128x128xf32>
    %c1 = arith.constant 1 : index
    %c0_41 = arith.constant 0 : index
    %c0_42 = arith.constant 0 : index
    %79 = vector.load %arg5[%c1, %c0_41, %c0_42] : memref<3x128x128xf32, #tpu.memory_space<vmem>>, vector<1x128x128xf32>
    %80 = vector.shape_cast %79 : vector<1x128x128xf32> to vector<128x128xf32>
    %81 = arith.truncf %78 : vector<128x128xf32> to vector<128x128xbf16>
    %82 = arith.truncf %80 : vector<128x128xf32> to vector<128x128xbf16>
    %cst_43 = arith.constant dense<0.000000e+00> : vector<128x128xf32>
    %83 = tpu.matmul %81, %82, %cst_43 {dimension_numbers = #tpu.dot_dimension_numbers<[1], [0], [0], [1], [0, 0, 1, 1], [], []>} : vector<128x128xbf16>, vector<128x128xbf16>, vector<128x128xf32> -> vector<128x128xf32>
    %c1_44 = arith.constant 1 : index
    %c0_45 = arith.constant 0 : index
    %c0_46 = arith.constant 0 : index
    %84 = vector.load %arg7[%c1_44, %c0_45, %c0_46] : memref<3x1x128xf32, #tpu.memory_space<vmem>>, vector<1x1x128xf32>
    %85 = vector.shape_cast %84 : vector<1x1x128xf32> to vector<1x128xf32>
    %cst_47 = arith.constant dense<0.000000e+00> : vector<128x1xf32>
    %86 = tpu.matmul %83, %85, %cst_47 {dimension_numbers = #tpu.dot_dimension_numbers<[1], [1], [0], [0], [0, 0, 1, 0], [], []>} : vector<128x128xf32>, vector<1x128xf32>, vector<128x1xf32> -> vector<128x1xf32>
    %c1_48 = arith.constant 1 : index
    %c0_49 = arith.constant 0 : index
    %c0_50 = arith.constant 0 : index
    %87 = vector.load %arg6[%c1_48, %c0_49, %c0_50] : memref<3x1x128xf32, #tpu.memory_space<vmem>>, vector<1x1x128xf32>
    %88 = vector.shape_cast %87 : vector<1x1x128xf32> to vector<1x128xf32>
    %cst_51 = arith.constant dense<0.000000e+00> : vector<1x128xf32>
    %89 = tpu.matmul %88, %83, %cst_51 {dimension_numbers = #tpu.dot_dimension_numbers<[1], [1], [0], [0], [0, 0, 1, 0], [], []>} : vector<1x128xf32>, vector<128x128xf32>, vector<1x128xf32> -> vector<1x128xf32>
    %90 = vector.broadcast %86 : vector<128x1xf32> to vector<128x128xf32>
    %91 = vector.broadcast %89 : vector<1x128xf32> to vector<128x128xf32>
    %92 = arith.addf %90, %91 : vector<128x128xf32>
    %c1_52 = arith.constant 1 : index
    %93 = memref.load %arg0[%c1_52] : memref<3xf32, #tpu.memory_space<smem>>
    %94 = vector.broadcast %93 : f32 to vector<128x128xf32>
    %95 = arith.mulf %94, %1 : vector<128x128xf32>
    %96 = arith.addf %92, %95 : vector<128x128xf32>
    %cst_53 = arith.constant 0.000000e+00 : f32
    %97 = vector.broadcast %cst_53 : f32 to vector<128x128xf32>
    %98 = arith.cmpf ogt, %96, %97 : vector<128x128xf32>
    %cst_54 = arith.constant 2.000000e-01 : f32
    %99 = vector.broadcast %cst_54 : f32 to vector<128x128xf32>
    %100 = arith.mulf %99, %96 : vector<128x128xf32>
    %101 = arith.select %98, %96, %100 : vector<128x128xi1>, vector<128x128xf32>
    %102 = arith.addf %101, %6 : vector<128x128xf32>
    %cst_55 = arith.constant dense<0xFF800000> : vector<128xf32>
    %103 = vector.multi_reduction <maximumf>, %102, %cst_55 [1] : vector<128x128xf32> to vector<128xf32>
    %104 = vector.shape_cast %103 : vector<128xf32> to vector<128x1xf32>
    %105 = vector.broadcast %104 : vector<128x1xf32> to vector<128x128xf32>
    %106 = arith.subf %102, %105 : vector<128x128xf32>
    %107 = math.exp %106 : vector<128x128xf32>
    %cst_56 = arith.constant dense<0.000000e+00> : vector<128xf32>
    %108 = vector.multi_reduction <add>, %107, %cst_56 [1] : vector<128x128xf32> to vector<128xf32>
    %109 = vector.shape_cast %108 : vector<128xf32> to vector<128x1xf32>
    %110 = tpu.reciprocal %109 {approx = true} : vector<128x1xf32> -> vector<128x1xf32>
    %111 = vector.broadcast %110 : vector<128x1xf32> to vector<128x128xf32>
    %112 = arith.mulf %107, %111 : vector<128x128xf32>
    %113 = arith.truncf %112 : vector<128x128xf32> to vector<128x128xbf16>
    %114 = arith.truncf %83 : vector<128x128xf32> to vector<128x128xbf16>
    %cst_57 = arith.constant dense<0.000000e+00> : vector<128x128xf32>
    %115 = tpu.matmul %113, %114, %cst_57 {dimension_numbers = #tpu.dot_dimension_numbers<[1], [0], [0], [1], [0, 0, 1, 1], [], []>} : vector<128x128xbf16>, vector<128x128xbf16>, vector<128x128xf32> -> vector<128x128xf32>
    %c1_58 = arith.constant 1 : index
    %c0_59 = arith.constant 0 : index
    %c0_60 = arith.constant 0 : index
    %116 = vector.load %arg8[%c1_58, %c0_59, %c0_60] : memref<3x1x128xf32, #tpu.memory_space<vmem>>, vector<1x1x128xf32>
    %117 = vector.shape_cast %116 : vector<1x1x128xf32> to vector<1x128xf32>
    %118 = vector.broadcast %117 : vector<1x128xf32> to vector<128x128xf32>
    %119 = arith.addf %115, %118 : vector<128x128xf32>
    %cst_61 = arith.constant 0.000000e+00 : f32
    %120 = vector.broadcast %cst_61 : f32 to vector<128x128xf32>
    %121 = arith.maximumf %119, %120 : vector<128x128xf32>
    %cst_62 = arith.constant dense<0.000000e+00> : vector<128xf32>
    %122 = vector.multi_reduction <add>, %121, %cst_62 [1] : vector<128x128xf32> to vector<128xf32>
    %123 = vector.shape_cast %122 : vector<128xf32> to vector<128x1xf32>
    %cst_63 = arith.constant 3.125000e-02 : f32
    %124 = vector.broadcast %cst_63 : f32 to vector<128x1xf32>
    %125 = arith.mulf %123, %124 : vector<128x1xf32>
    %126 = arith.mulf %121, %121 : vector<128x128xf32>
    %cst_64 = arith.constant dense<0.000000e+00> : vector<128xf32>
    %127 = vector.multi_reduction <add>, %126, %cst_64 [1] : vector<128x128xf32> to vector<128xf32>
    %128 = vector.shape_cast %127 : vector<128xf32> to vector<128x1xf32>
    %cst_65 = arith.constant 3.125000e-02 : f32
    %129 = vector.broadcast %cst_65 : f32 to vector<128x1xf32>
    %130 = arith.mulf %128, %129 : vector<128x1xf32>
    %131 = arith.mulf %125, %125 : vector<128x1xf32>
    %132 = arith.subf %130, %131 : vector<128x1xf32>
    %cst_66 = arith.constant 0.000000e+00 : f32
    %133 = vector.broadcast %cst_66 : f32 to vector<128x1xf32>
    %134 = arith.maximumf %132, %133 : vector<128x1xf32>
    %135 = vector.broadcast %125 : vector<128x1xf32> to vector<128x128xf32>
    %136 = arith.subf %121, %135 : vector<128x128xf32>
    %cst_67 = arith.constant 9.99999974E-6 : f32
    %137 = vector.broadcast %cst_67 : f32 to vector<128x1xf32>
    %138 = arith.addf %134, %137 : vector<128x1xf32>
    %139 = math.rsqrt %138 : vector<128x1xf32>
    %140 = vector.broadcast %139 : vector<128x1xf32> to vector<128x128xf32>
    %141 = arith.mulf %136, %140 : vector<128x128xf32>
    %c1_68 = arith.constant 1 : index
    %c0_69 = arith.constant 0 : index
    %c0_70 = arith.constant 0 : index
    %142 = vector.load %arg9[%c1_68, %c0_69, %c0_70] : memref<2x1x128xf32, #tpu.memory_space<vmem>>, vector<1x1x128xf32>
    %143 = vector.shape_cast %142 : vector<1x1x128xf32> to vector<1x128xf32>
    %144 = vector.broadcast %143 : vector<1x128xf32> to vector<128x128xf32>
    %145 = arith.mulf %141, %144 : vector<128x128xf32>
    %c1_71 = arith.constant 1 : index
    %c0_72 = arith.constant 0 : index
    %c0_73 = arith.constant 0 : index
    %146 = vector.load %arg10[%c1_71, %c0_72, %c0_73] : memref<2x1x128xf32, #tpu.memory_space<vmem>>, vector<1x1x128xf32>
    %147 = vector.shape_cast %146 : vector<1x1x128xf32> to vector<1x128xf32>
    %148 = vector.broadcast %147 : vector<1x128xf32> to vector<128x128xf32>
    %149 = arith.addf %145, %148 : vector<128x128xf32>
    %c2 = arith.constant 2 : index
    %c0_74 = arith.constant 0 : index
    %c0_75 = arith.constant 0 : index
    %150 = vector.load %arg5[%c2, %c0_74, %c0_75] : memref<3x128x128xf32, #tpu.memory_space<vmem>>, vector<1x128x128xf32>
    %151 = vector.shape_cast %150 : vector<1x128x128xf32> to vector<128x128xf32>
    %152 = arith.truncf %149 : vector<128x128xf32> to vector<128x128xbf16>
    %153 = arith.truncf %151 : vector<128x128xf32> to vector<128x128xbf16>
    %cst_76 = arith.constant dense<0.000000e+00> : vector<128x128xf32>
    %154 = tpu.matmul %152, %153, %cst_76 {dimension_numbers = #tpu.dot_dimension_numbers<[1], [0], [0], [1], [0, 0, 1, 1], [], []>} : vector<128x128xbf16>, vector<128x128xbf16>, vector<128x128xf32> -> vector<128x128xf32>
    %c2_77 = arith.constant 2 : index
    %c0_78 = arith.constant 0 : index
    %c0_79 = arith.constant 0 : index
    %155 = vector.load %arg7[%c2_77, %c0_78, %c0_79] : memref<3x1x128xf32, #tpu.memory_space<vmem>>, vector<1x1x128xf32>
    %156 = vector.shape_cast %155 : vector<1x1x128xf32> to vector<1x128xf32>
    %cst_80 = arith.constant dense<0.000000e+00> : vector<128x1xf32>
    %157 = tpu.matmul %154, %156, %cst_80 {dimension_numbers = #tpu.dot_dimension_numbers<[1], [1], [0], [0], [0, 0, 1, 0], [], []>} : vector<128x128xf32>, vector<1x128xf32>, vector<128x1xf32> -> vector<128x1xf32>
    %c2_81 = arith.constant 2 : index
    %c0_82 = arith.constant 0 : index
    %c0_83 = arith.constant 0 : index
    %158 = vector.load %arg6[%c2_81, %c0_82, %c0_83] : memref<3x1x128xf32, #tpu.memory_space<vmem>>, vector<1x1x128xf32>
    %159 = vector.shape_cast %158 : vector<1x1x128xf32> to vector<1x128xf32>
    %cst_84 = arith.constant dense<0.000000e+00> : vector<1x128xf32>
    %160 = tpu.matmul %159, %154, %cst_84 {dimension_numbers = #tpu.dot_dimension_numbers<[1], [1], [0], [0], [0, 0, 1, 0], [], []>} : vector<1x128xf32>, vector<128x128xf32>, vector<1x128xf32> -> vector<1x128xf32>
    %161 = vector.broadcast %157 : vector<128x1xf32> to vector<128x128xf32>
    %162 = vector.broadcast %160 : vector<1x128xf32> to vector<128x128xf32>
    %163 = arith.addf %161, %162 : vector<128x128xf32>
    %c2_85 = arith.constant 2 : index
    %164 = memref.load %arg0[%c2_85] : memref<3xf32, #tpu.memory_space<smem>>
    %165 = vector.broadcast %164 : f32 to vector<128x128xf32>
    %166 = arith.mulf %165, %1 : vector<128x128xf32>
    %167 = arith.addf %163, %166 : vector<128x128xf32>
    %cst_86 = arith.constant 0.000000e+00 : f32
    %168 = vector.broadcast %cst_86 : f32 to vector<128x128xf32>
    %169 = arith.cmpf ogt, %167, %168 : vector<128x128xf32>
    %cst_87 = arith.constant 2.000000e-01 : f32
    %170 = vector.broadcast %cst_87 : f32 to vector<128x128xf32>
    %171 = arith.mulf %170, %167 : vector<128x128xf32>
    %172 = arith.select %169, %167, %171 : vector<128x128xi1>, vector<128x128xf32>
    %173 = arith.addf %172, %6 : vector<128x128xf32>
    %cst_88 = arith.constant dense<0xFF800000> : vector<128xf32>
    %174 = vector.multi_reduction <maximumf>, %173, %cst_88 [1] : vector<128x128xf32> to vector<128xf32>
    %175 = vector.shape_cast %174 : vector<128xf32> to vector<128x1xf32>
    %176 = vector.broadcast %175 : vector<128x1xf32> to vector<128x128xf32>
    %177 = arith.subf %173, %176 : vector<128x128xf32>
    %178 = math.exp %177 : vector<128x128xf32>
    %cst_89 = arith.constant dense<0.000000e+00> : vector<128xf32>
    %179 = vector.multi_reduction <add>, %178, %cst_89 [1] : vector<128x128xf32> to vector<128xf32>
    %180 = vector.shape_cast %179 : vector<128xf32> to vector<128x1xf32>
    %181 = tpu.reciprocal %180 {approx = true} : vector<128x1xf32> -> vector<128x1xf32>
    %182 = vector.broadcast %181 : vector<128x1xf32> to vector<128x128xf32>
    %183 = arith.mulf %178, %182 : vector<128x128xf32>
    %184 = arith.truncf %183 : vector<128x128xf32> to vector<128x128xbf16>
    %185 = arith.truncf %154 : vector<128x128xf32> to vector<128x128xbf16>
    %cst_90 = arith.constant dense<0.000000e+00> : vector<128x128xf32>
    %186 = tpu.matmul %184, %185, %cst_90 {dimension_numbers = #tpu.dot_dimension_numbers<[1], [0], [0], [1], [0, 0, 1, 1], [], []>} : vector<128x128xbf16>, vector<128x128xbf16>, vector<128x128xf32> -> vector<128x128xf32>
    %c2_91 = arith.constant 2 : index
    %c0_92 = arith.constant 0 : index
    %c0_93 = arith.constant 0 : index
    %187 = vector.load %arg8[%c2_91, %c0_92, %c0_93] : memref<3x1x128xf32, #tpu.memory_space<vmem>>, vector<1x1x128xf32>
    %188 = vector.shape_cast %187 : vector<1x1x128xf32> to vector<1x128xf32>
    %189 = vector.broadcast %188 : vector<1x128xf32> to vector<128x128xf32>
    %190 = arith.addf %186, %189 : vector<128x128xf32>
    %cst_94 = arith.constant 0.000000e+00 : f32
    %191 = vector.broadcast %cst_94 : f32 to vector<128x128xf32>
    %192 = arith.maximumf %190, %191 : vector<128x128xf32>
    %c0_95 = arith.constant 0 : index
    %c0_96 = arith.constant 0 : index
    %193 = vector.load %arg4[%c0_95, %c0_96] : memref<8x128xf32, #tpu.memory_space<vmem>>, vector<8x128xf32>
    %194 = arith.truncf %193 : vector<8x128xf32> to vector<8x128xbf16>
    %195 = arith.truncf %192 : vector<128x128xf32> to vector<128x128xbf16>
    %cst_97 = arith.constant dense<0.000000e+00> : vector<8x128xf32>
    %196 = tpu.matmul %194, %195, %cst_97 {dimension_numbers = #tpu.dot_dimension_numbers<[1], [0], [0], [1], [0, 0, 1, 1], [], []>} : vector<8x128xbf16>, vector<128x128xbf16>, vector<8x128xf32> -> vector<8x128xf32>
    %197 = arith.truncf %196 : vector<8x128xf32> to vector<8x128xbf16>
    %c0_98 = arith.constant 0 : index
    %c0_99 = arith.constant 0 : index
    %198 = vector.load %arg11[%c0_98, %c0_99] : memref<128x128xf32, #tpu.memory_space<vmem>>, vector<128x128xf32>
    %199 = arith.truncf %198 : vector<128x128xf32> to vector<128x128xbf16>
    %cst_100 = arith.constant dense<0.000000e+00> : vector<8x128xf32>
    %200 = tpu.matmul %197, %199, %cst_100 {dimension_numbers = #tpu.dot_dimension_numbers<[1], [0], [0], [1], [0, 0, 1, 1], [], []>} : vector<8x128xbf16>, vector<128x128xbf16>, vector<8x128xf32> -> vector<8x128xf32>
    %c0_101 = arith.constant 0 : index
    %c0_102 = arith.constant 0 : index
    %201 = vector.load %arg12[%c0_101, %c0_102] : memref<1x128xf32, #tpu.memory_space<vmem>>, vector<1x128xf32>
    %202 = vector.broadcast %201 : vector<1x128xf32> to vector<8x128xf32>
    %203 = arith.addf %200, %202 : vector<8x128xf32>
    %204 = arith.truncf %203 : vector<8x128xf32> to vector<8x128xbf16>
    %c0_103 = arith.constant 0 : index
    %c0_104 = arith.constant 0 : index
    %205 = vector.load %arg13[%c0_103, %c0_104] : memref<128x128xf32, #tpu.memory_space<vmem>>, vector<128x128xf32>
    %206 = arith.truncf %205 : vector<128x128xf32> to vector<128x128xbf16>
    %cst_105 = arith.constant dense<0.000000e+00> : vector<8x128xf32>
    %207 = tpu.matmul %204, %206, %cst_105 {dimension_numbers = #tpu.dot_dimension_numbers<[1], [0], [0], [1], [0, 0, 1, 1], [], []>} : vector<8x128xbf16>, vector<128x128xbf16>, vector<8x128xf32> -> vector<8x128xf32>
    %c0_106 = arith.constant 0 : index
    %c0_107 = arith.constant 0 : index
    %208 = vector.load %arg14[%c0_106, %c0_107] : memref<1x128xf32, #tpu.memory_space<vmem>>, vector<1x128xf32>
    %209 = vector.broadcast %208 : vector<1x128xf32> to vector<8x128xf32>
    %210 = arith.addf %207, %209 : vector<8x128xf32>
    %211 = tpu.iota {dimensions = array<i32: 1>} : vector<8x128xi32>
    %c8_i32 = arith.constant 8 : i32
    %212 = vector.broadcast %c8_i32 : i32 to vector<8x128xi32>
    %213 = arith.cmpi slt, %211, %212 : vector<8x128xi32>
    %cst_108 = arith.constant -1.000000e+30 : f32
    %214 = vector.broadcast %cst_108 : f32 to vector<8x128xf32>
    %215 = arith.select %213, %210, %214 : vector<8x128xi1>, vector<8x128xf32>
    %cst_109 = arith.constant dense<0xFF800000> : vector<8xf32>
    %216 = vector.multi_reduction <maximumf>, %215, %cst_109 [1] : vector<8x128xf32> to vector<8xf32>
    %217 = vector.shape_cast %216 : vector<8xf32> to vector<8x1xf32>
    %218 = vector.broadcast %217 : vector<8x1xf32> to vector<8x128xf32>
    %219 = arith.subf %215, %218 : vector<8x128xf32>
    %220 = math.exp %219 : vector<8x128xf32>
    %cst_110 = arith.constant dense<0.000000e+00> : vector<8xf32>
    %221 = vector.multi_reduction <add>, %220, %cst_110 [1] : vector<8x128xf32> to vector<8xf32>
    %222 = vector.shape_cast %221 : vector<8xf32> to vector<8x1xf32>
    %223 = math.log %222 : vector<8x1xf32>
    %224 = vector.broadcast %223 : vector<8x1xf32> to vector<8x128xf32>
    %225 = arith.subf %219, %224 : vector<8x128xf32>
    %c0_111 = arith.constant 0 : index
    %c0_112 = arith.constant 0 : index
    %226 = vector.load %arg15[%c0_111, %c0_112] : memref<8x128xf32, #tpu.memory_space<vmem>>, vector<8x128xf32>
    tpu.vector_store %arg15[%c0_111, %c0_112], %225 {strides = array<i32>} : memref<8x128xf32, #tpu.memory_space<vmem>>, vector<8x128xf32>,
    return
  }
}

</mosaic_0001>

<llo_original>
// kernel: tpu_custom_call.1
$region0: #{tpu_custom_call.1}
  #allocation0 [shape = 'u32[]', space=smem, size = 0x4, offset = 0x4, fixed_abs, tag = 'smem constant byte address 0x4 - core index']
  #allocation1 [shape = 'u32[144,128]{1,0:T(1,128)}', space=vmem, size = 0x12000, scoped, tag = 'internal scratch']
  %s0 = inlined_call_operand.hbm [shape: f32[3], index: 0, kind: input, shape index: {}]
  %s1 = inlined_call_operand.hbm [shape: f32[128,128], index: 1, kind: input, shape index: {}]
  %s2 = inlined_call_operand.hbm [shape: f32[128,128], index: 2, kind: input, shape index: {}]
  %s3 = inlined_call_operand.hbm [shape: f32[128,128], index: 3, kind: input, shape index: {}]
  %s4 = inlined_call_operand.hbm [shape: f32[8,128], index: 4, kind: input, shape index: {}]
  %s5 = inlined_call_operand.hbm [shape: f32[3,128,128], index: 5, kind: input, shape index: {}]
  %s6 = inlined_call_operand.vmem [shape: f32[3,1,128], index: 6, kind: input, shape index: {}]
  %s7 = inlined_call_operand.vmem [shape: f32[3,1,128], index: 7, kind: input, shape index: {}]
  %s8 = inlined_call_operand.vmem [shape: f32[3,1,128], index: 8, kind: input, shape index: {}]
  %s9 = inlined_call_operand.vmem [shape: f32[2,1,128], index: 9, kind: input, shape index: {}]
  %s10 = inlined_call_operand.vmem [shape: f32[2,1,128], index: 10, kind: input, shape index: {}]
  %s11 = inlined_call_operand.hbm [shape: f32[128,128], index: 11, kind: input, shape index: {}]
  %s12 = inlined_call_operand.vmem [shape: f32[1,128], index: 12, kind: input, shape index: {}]
  %s13 = inlined_call_operand.hbm [shape: f32[128,128], index: 13, kind: input, shape index: {}]
  %s14 = inlined_call_operand.vmem [shape: f32[1,128], index: 14, kind: input, shape index: {}]
  %s15 = inlined_call_operand.hbm [shape: f32[8,128], index: 15, kind: output, shape index: {}]
  %s16 = sld [smem:[#allocation0]]
  $region102: #{tpu_custom_call.1} parent=0
    _
  %s18 = ssub.s32 1, %s16
  %s19 = scalar_select 0, %s18, %s16
  $region1: #{tpu_custom_call.1} parent=0
    #allocation2 [shape = 'u8[512]{0}', space=smem, size = 0x200, scoped, tag = 'input window, operand 0, single buffered']
    #allocation3 [shape = 's32[1]{0}', space=sflag, size = 0x4, scoped, tag = 'scoped memory for tpu_custom_call.1']
    #allocation4 [shape = 's32[1]{0}', space=sflag, size = 0x4, scoped, tag = 'scoped memory for tpu_custom_call.1']
    #allocation5 [shape = 's32[1]{0}', space=sflag, size = 0x4, scoped, tag = 'scoped memory for tpu_custom_call.1']
    #allocation6 [shape = 'u8[65536]{0}', space=vmem, size = 0x10000, scoped, tag = 'input window, operand 1, single buffered']
    #allocation7 [shape = 'u8[65536]{0}', space=vmem, size = 0x10000, scoped, tag = 'input window, operand 2, single buffered']
    #allocation8 [shape = 's32[1]{0}', space=sflag, size = 0x4, scoped, tag = 'scoped memory for tpu_custom_call.1']
    #allocation9 [shape = 'u8[65536]{0}', space=vmem, size = 0x10000, scoped, tag = 'input window, operand 3, single buffered']
    #allocation10 [shape = 'u8[4096]{0}', space=vmem, size = 0x1000, scoped, tag = 'input window, operand 4, single buffered']
    #allocation11 [shape = 's32[1]{0}', space=sflag, size = 0x4, scoped, tag = 'scoped memory for tpu_custom_call.1']
    #allocation12 [shape = 'u8[196608]{0}', space=vmem, size = 0x30000, scoped, tag = 'input window, operand 5, single buffered']
    #allocation13 [shape = 'u8[65536]{0}', space=vmem, size = 0x10000, scoped, tag = 'input window, operand 11, single buffered']
    #allocation14 [shape = 's32[1]{0}', space=sflag, size = 0x4, scoped, tag = 'scoped memory for tpu_custom_call.1']
    #allocation15 [shape = 'u8[65536]{0}', space=vmem, size = 0x10000, scoped, tag = 'input window, operand 13, single buffered']
    #allocation16 [shape = 'u8[4096]{0}', space=vmem, size = 0x1000, scoped, tag = 'output window, operand 0, single buffered']
    %20 = vsyncpa [#allocation5], 0
    %21 = vsyncpa [#allocation3], 0
    %22 = vsyncpa [#allocation8], 0
    %23 = vsyncpa [#allocation11], 0
    %24 = vsyncpa [#allocation14], 0
    %25 = vsyncpa [#allocation4], 0
    // Predicated region
    $region2: #{tpu_custom_call.1} parent=1 // pred_check
      _
    $region3: #{tpu_custom_call.1} parent=1 // pred_check_branch
      %27 = sbr.rel (0) target = $region5
    $region4: #{tpu_custom_call.1} parent=1 // pred_region
      %s29 = ssub.s32 16, 16
      %30 = vsyncadd [#allocation5], %s29
      %33 = dma.hbm_to_smem %s0, 16, [#allocation2], [#allocation5]
    $region5: #{tpu_custom_call.1} parent=1 // pred_fallthru
      _
    // Predicated region
    $region6: #{tpu_custom_call.1} parent=1 // pred_check
      _
    $region7: #{tpu_custom_call.1} parent=1 // pred_check_branch
      %35 = sbr.rel (0) target = $region9
    $region8: #{tpu_custom_call.1} parent=1 // pred_region
      %s37 = ssub.s32 2048, 2048
      %38 = vsyncadd [#allocation3], %s37
      %s39 = sshll.u32 [#allocation6], 4
      %s40 = int_to_ptr.vmem [resolvable:$true] %s39
      %45 = dma.hbm_to_vmem [thread:$0]  %s1, 2048, %s40, [#allocation3], 128, 128, 8
    $region9: #{tpu_custom_call.1} parent=1 // pred_fallthru
      _
    // Predicated region
    $region10: #{tpu_custom_call.1} parent=1 // pred_check
      _
    $region11: #{tpu_custom_call.1} parent=1 // pred_check_branch
      %47 = sbr.rel (0) target = $region13
    $region12: #{tpu_custom_call.1} parent=1 // pred_region
      %s49 = ssub.s32 2048, 2048
      %50 = vsyncadd [#allocation8], %s49
      %s51 = sshll.u32 [#allocation7], 4
      %s52 = int_to_ptr.vmem [resolvable:$true] %s51
      %57 = dma.hbm_to_vmem [thread:$0]  %s2, 2048, %s52, [#allocation8], 128, 128, 8
    $region13: #{tpu_custom_call.1} parent=1 // pred_fallthru
      _
    // Predicated region
    $region14: #{tpu_custom_call.1} parent=1 // pred_check
      _
    $region15: #{tpu_custom_call.1} parent=1 // pred_check_branch
      %59 = sbr.rel (0) target = $region17
    $region16: #{tpu_custom_call.1} parent=1 // pred_region
      %s61 = ssub.s32 2048, 2048
      %62 = vsyncadd [#allocation8], %s61
      %s63 = sshll.u32 [#allocation9], 4
      %s64 = int_to_ptr.vmem [resolvable:$true] %s63
      %69 = dma.hbm_to_vmem [thread:$0]  %s3, 2048, %s64, [#allocation8], 128, 128, 8
    $region17: #{tpu_custom_call.1} parent=1 // pred_fallthru
      _
    // Predicated region
    $region18: #{tpu_custom_call.1} parent=1 // pred_check
      _
    $region19: #{tpu_custom_call.1} parent=1 // pred_check_branch
      %71 = sbr.rel (0) target = $region21
    $region20: #{tpu_custom_call.1} parent=1 // pred_region
      %s73 = ssub.s32 128, 128
      %74 = vsyncadd [#allocation11], %s73
      %s76 = sshll.u32 [#allocation10], 4
      %s77 = int_to_ptr.vmem [resolvable:$true] %s76
      %79 = dma.hbm_to_vmem [thread:$0]  %s4, 128, %s77, [#allocation11]
    $region21: #{tpu_custom_call.1} parent=1 // pred_fallthru
      _
    // Predicated region
    $region22: #{tpu_custom_call.1} parent=1 // pred_check
      _
    $region23: #{tpu_custom_call.1} parent=1 // pred_check_branch
      %81 = sbr.rel (0) target = $region25
    $region24: #{tpu_custom_call.1} parent=1 // pred_region
      %s83 = ssub.s32 6144, 6144
      %84 = vsyncadd [#allocation11], %s83
      %s85 = sshll.u32 [#allocation12], 4
      %s86 = int_to_ptr.vmem [resolvable:$true] %s85
      %91 = dma.hbm_to_vmem [thread:$0]  %s5, 6144, %s86, [#allocation11], 128, 128, 8
    $region25: #{tpu_custom_call.1} parent=1 // pred_fallthru
      _
    // Predicated region
    $region26: #{tpu_custom_call.1} parent=1 // pred_check
      _
    $region27: #{tpu_custom_call.1} parent=1 // pred_check_branch
      %93 = sbr.rel (0) target = $region29
    $region28: #{tpu_custom_call.1} parent=1 // pred_region
      _
    $region29: #{tpu_custom_call.1} parent=1 // pred_fallthru
      _
    // Predicated region
    $region30: #{tpu_custom_call.1} parent=1 // pred_check
      _
    $region31: #{tpu_custom_call.1} parent=1 // pred_check_branch
      %95 = sbr.rel (0) target = $region33
    $region32: #{tpu_custom_call.1} parent=1 // pred_region
      _
    $region33: #{tpu_custom_call.1} parent=1 // pred_fallthru
      _
    // Predicated region
    $region34: #{tpu_custom_call.1} parent=1 // pred_check
      _
    $region35: #{tpu_custom_call.1} parent=1 // pred_check_branch
      %97 = sbr.rel (0) target = $region37
    $region36: #{tpu_custom_call.1} parent=1 // pred_region
      _
    $region37: #{tpu_custom_call.1} parent=1 // pred_fallthru
      _
    // Predicated region
    $region38: #{tpu_custom_call.1} parent=1 // pred_check
      _
    $region39: #{tpu_custom_call.1} parent=1 // pred_check_branch
      %99 = sbr.rel (0) target = $region41
    $region40: #{tpu_custom_call.1} parent=1 // pred_region
      _
    $region41: #{tpu_custom_call.1} parent=1 // pred_fallthru
      _
    // Predicated region
    $region42: #{tpu_custom_call.1} parent=1 // pred_check
      _
    $region43: #{tpu_custom_call.1} parent=1 // pred_check_branch
      %101 = sbr.rel (0) target = $region45
    $region44: #{tpu_custom_call.1} parent=1 // pred_region
      _
    $region45: #{tpu_custom_call.1} parent=1 // pred_fallthru
      _
    // Predicated region
    $region46: #{tpu_custom_call.1} parent=1 // pred_check
      _
    $region47: #{tpu_custom_call.1} parent=1 // pred_check_branch
      %103 = sbr.rel (0) target = $region49
    $region48: #{tpu_custom_call.1} parent=1 // pred_region
      %s105 = ssub.s32 2048, 2048
      %106 = vsyncadd [#allocation14], %s105
      %s107 = sshll.u32 [#allocation13], 4
      %s108 = int_to_ptr.vmem [resolvable:$true] %s107
      %113 = dma.hbm_to_vmem [thread:$0]  %s11, 2048, %s108, [#allocation14], 128, 128, 8
    $region49: #{tpu_custom_call.1} parent=1 // pred_fallthru
      _
    // Predicated region
    $region50: #{tpu_custom_call.1} parent=1 // pred_check
      _
    $region51: #{tpu_custom_call.1} parent=1 // pred_check_branch
      %115 = sbr.rel (0) target = $region53
    $region52: #{tpu_custom_call.1} parent=1 // pred_region
      _
    $region53: #{tpu_custom_call.1} parent=1 // pred_fallthru
      _
    // Predicated region
    $region54: #{tpu_custom_call.1} parent=1 // pred_check
      _
    $region55: #{tpu_custom_call.1} parent=1 // pred_check_branch
      %117 = sbr.rel (0) target = $region57
    $region56: #{tpu_custom_call.1} parent=1 // pred_region
      %s119 = ssub.s32 2048, 2048
      %120 = vsyncadd [#allocation14], %s119
      %s121 = sshll.u32 [#allocation15], 4
      %s122 = int_to_ptr.vmem [resolvable:$true] %s121
      %127 = dma.hbm_to_vmem [thread:$0]  %s13, 2048, %s122, [#allocation14], 128, 128, 8
    $region57: #{tpu_custom_call.1} parent=1 // pred_fallthru
      _
    // Predicated region
    $region58: #{tpu_custom_call.1} parent=1 // pred_check
      _
    $region59: #{tpu_custom_call.1} parent=1 // pred_check_branch
      %129 = sbr.rel (0) target = $region61
    $region60: #{tpu_custom_call.1} parent=1 // pred_region
      _
    $region61: #{tpu_custom_call.1} parent=1 // pred_fallthru
      _
    // Predicated region
    $region62: #{tpu_custom_call.1} parent=1 // pred_check
      _
    $region63: #{tpu_custom_call.1} parent=1 // pred_check_branch
      %131 = sbr.rel (0) target = $region65
    $region64: #{tpu_custom_call.1} parent=1 // pred_region
      %132 = dma.done [#allocation5], 16
    $region65: #{tpu_custom_call.1} parent=1 // pred_fallthru
      _
    // Predicated region
    $region66: #{tpu_custom_call.1} parent=1 // pred_check
      _
    $region67: #{tpu_custom_call.1} parent=1 // pred_check_branch
      %134 = sbr.rel (0) target = $region69
    $region68: #{tpu_custom_call.1} parent=1 // pred_region
      %135 = dma.done [#allocation3], 2048
    $region69: #{tpu_custom_call.1} parent=1 // pred_fallthru
      _
    // Predicated region
    $region70: #{tpu_custom_call.1} parent=1 // pred_check
      _
    $region71: #{tpu_custom_call.1} parent=1 // pred_check_branch
      %137 = sbr.rel (0) target = $region73
    $region72: #{tpu_custom_call.1} parent=1 // pred_region
      %138 = dma.done [#allocation8], 2048
    $region73: #{tpu_custom_call.1} parent=1 // pred_fallthru
      _
    // Predicated region
    $region74: #{tpu_custom_call.1} parent=1 // pred_check
      _
    $region75: #{tpu_custom_call.1} parent=1 // pred_check_branch
      %140 = sbr.rel (0) target = $region77
    $region76: #{tpu_custom_call.1} parent=1 // pred_region
      %141 = dma.done [#allocation8], 2048
    $region77: #{tpu_custom_call.1} parent=1 // pred_fallthru
      _
    // Predicated region
    $region78: #{tpu_custom_call.1} parent=1 // pred_check
      _
    $region79: #{tpu_custom_call.1} parent=1 // pred_check_branch
      %143 = sbr.rel (0) target = $region81
    $region80: #{tpu_custom_call.1} parent=1 // pred_region
      %144 = dma.done [#allocation11], 128
    $region81: #{tpu_custom_call.1} parent=1 // pred_fallthru
      _
    // Predicated region
    $region82: #{tpu_custom_call.1} parent=1 // pred_check
      _
    $region83: #{tpu_custom_call.1} parent=1 // pred_check_branch
      %146 = sbr.rel (0) target = $region85
    $region84: #{tpu_custom_call.1} parent=1 // pred_region
      %147 = dma.done [#allocation11], 6144
    $region85: #{tpu_custom_call.1} parent=1 // pred_fallthru
      _
    // Predicated region
    $region86: #{tpu_custom_call.1} parent=1 // pred_check
      _
    $region87: #{tpu_custom_call.1} parent=1 // pred_check_branch
      %149 = sbr.rel (0) target = $region89
    $region88: #{tpu_custom_call.1} parent=1 // pred_region
      %150 = dma.done [#allocation14], 2048
    $region89: #{tpu_custom_call.1} parent=1 // pred_fallthru
      _
    // Predicated region
    $region90: #{tpu_custom_call.1} parent=1 // pred_check
      _
    $region91: #{tpu_custom_call.1} parent=1 // pred_check_branch
      %152 = sbr.rel (0) target = $region93
    $region92: #{tpu_custom_call.1} parent=1 // pred_region
      %153 = dma.done [#allocation14], 2048
    $region93: #{tpu_custom_call.1} parent=1 // pred_fallthru
      _
    %154 = sfence
    %v156 = vld [vmem:[#allocation7] sm:$0xff]
    %v157 = vld [vmem:[#allocation7 + $0x8] sm:$0xff]
    %v158 = vld [vmem:[#allocation7 + $0x10] sm:$0xff]
    %v159 = vld [vmem:[#allocation7 + $0x18] sm:$0xff]
    %v160 = vld [vmem:[#allocation7 + $0x20] sm:$0xff]
    %v161 = vld [vmem:[#allocation7 + $0x28] sm:$0xff]
    %v162 = vld [vmem:[#allocation7 + $0x30] sm:$0xff]
    %v163 = vld [vmem:[#allocation7 + $0x38] sm:$0xff]
    %v164 = vld [vmem:[#allocation7 + $0x40] sm:$0xff]
    %v165 = vld [vmem:[#allocation7 + $0x48] sm:$0xff]
    %v166 = vld [vmem:[#allocation7 + $0x50] sm:$0xff]
    %v167 = vld [vmem:[#allocation7 + $0x58] sm:$0xff]
    %v168 = vld [vmem:[#allocation7 + $0x60] sm:$0xff]
    %v169 = vld [vmem:[#allocation7 + $0x68] sm:$0xff]
    %v170 = vld [vmem:[#allocation7 + $0x70] sm:$0xff]
    %v171 = vld [vmem:[#allocation7 + $0x78] sm:$0xff]
    %v172 = vld [vmem:[#allocation9] sm:$0xff]
    %v173 = vld [vmem:[#allocation9 + $0x8] sm:$0xff]
    %v174 = vld [vmem:[#allocation9 + $0x10] sm:$0xff]
    %v175 = vld [vmem:[#allocation9 + $0x18] sm:$0xff]
    %v176 = vld [vmem:[#allocation9 + $0x20] sm:$0xff]
    %v177 = vld [vmem:[#allocation9 + $0x28] sm:$0xff]
    %v178 = vld [vmem:[#allocation9 + $0x30] sm:$0xff]
    %v179 = vld [vmem:[#allocation9 + $0x38] sm:$0xff]
    %v180 = vld [vmem:[#allocation9 + $0x40] sm:$0xff]
    %v181 = vld [vmem:[#allocation9 + $0x48] sm:$0xff]
    %v182 = vld [vmem:[#allocation9 + $0x50] sm:$0xff]
    %v183 = vld [vmem:[#allocation9 + $0x58] sm:$0xff]
    %v184 = vld [vmem:[#allocation9 + $0x60] sm:$0xff]
    %v185 = vld [vmem:[#allocation9 + $0x68] sm:$0xff]
    %v186 = vld [vmem:[#allocation9 + $0x70] sm:$0xff]
    %v187 = vld [vmem:[#allocation9 + $0x78] sm:$0xff]
    %vm188 = vcmp.gt.f32.partialorder %v156, 0.0
    %vm189 = vcmp.gt.f32.partialorder %v157, 0.0
    %vm190 = vcmp.gt.f32.partialorder %v158, 0.0
    %vm191 = vcmp.gt.f32.partialorder %v159, 0.0
    %vm192 = vcmp.gt.f32.partialorder %v160, 0.0
    %vm193 = vcmp.gt.f32.partialorder %v161, 0.0
    %vm194 = vcmp.gt.f32.partialorder %v162, 0.0
    %vm195 = vcmp.gt.f32.partialorder %v163, 0.0
    %vm196 = vcmp.gt.f32.partialorder %v164, 0.0
    %vm197 = vcmp.gt.f32.partialorder %v165, 0.0
    %vm198 = vcmp.gt.f32.partialorder %v166, 0.0
    %vm199 = vcmp.gt.f32.partialorder %v167, 0.0
    %vm200 = vcmp.gt.f32.partialorder %v168, 0.0
    %vm201 = vcmp.gt.f32.partialorder %v169, 0.0
    %vm202 = vcmp.gt.f32.partialorder %v170, 0.0
    %vm203 = vcmp.gt.f32.partialorder %v171, 0.0
    %v204 = vsel %vm188, 0.0, -1e+30
    %v205 = vsel %vm189, 0.0, -1e+30
    %v206 = vsel %vm190, 0.0, -1e+30
    %v207 = vsel %vm191, 0.0, -1e+30
    %v208 = vsel %vm192, 0.0, -1e+30
    %v209 = vsel %vm193, 0.0, -1e+30
    %v210 = vsel %vm194, 0.0, -1e+30
    %v211 = vsel %vm195, 0.0, -1e+30
    %v212 = vsel %vm196, 0.0, -1e+30
    %v213 = vsel %vm197, 0.0, -1e+30
    %v214 = vsel %vm198, 0.0, -1e+30
    %v215 = vsel %vm199, 0.0, -1e+30
    %v216 = vsel %vm200, 0.0, -1e+30
    %v217 = vsel %vm201, 0.0, -1e+30
    %v218 = vsel %vm202, 0.0, -1e+30
    %v219 = vsel %vm203, 0.0, -1e+30
    %v220 = vld [vmem:[#allocation6] sm:$0xff]
    %v221 = vld [vmem:[#allocation6 + $0x8] sm:$0xff]
    %v222 = vld [vmem:[#allocation6 + $0x10] sm:$0xff]
    %v223 = vld [vmem:[#allocation6 + $0x18] sm:$0xff]
    %v224 = vld [vmem:[#allocation6 + $0x20] sm:$0xff]
    %v225 = vld [vmem:[#allocation6 + $0x28] sm:$0xff]
    %v226 = vld [vmem:[#allocation6 + $0x30] sm:$0xff]
    %v227 = vld [vmem:[#allocation6 + $0x38] sm:$0xff]
    %v228 = vld [vmem:[#allocation6 + $0x40] sm:$0xff]
    %v229 = vld [vmem:[#allocation6 + $0x48] sm:$0xff]
    %v230 = vld [vmem:[#allocation6 + $0x50] sm:$0xff]
    %v231 = vld [vmem:[#allocation6 + $0x58] sm:$0xff]
    %v232 = vld [vmem:[#allocation6 + $0x60] sm:$0xff]
    %v233 = vld [vmem:[#allocation6 + $0x68] sm:$0xff]
    %v234 = vld [vmem:[#allocation6 + $0x70] sm:$0xff]
    %v235 = vld [vmem:[#allocation6 + $0x78] sm:$0xff]
    %v236 = vld [vmem:[#allocation12] sm:$0xff]
    %v237 = vld [vmem:[#allocation12 + $0x8] sm:$0xff]
    %v238 = vld [vmem:[#allocation12 + $0x10] sm:$0xff]
    %v239 = vld [vmem:[#allocation12 + $0x18] sm:$0xff]
    %v240 = vld [vmem:[#allocation12 + $0x20] sm:$0xff]
    %v241 = vld [vmem:[#allocation12 + $0x28] sm:$0xff]
    %v242 = vld [vmem:[#allocation12 + $0x30] sm:$0xff]
    %v243 = vld [vmem:[#allocation12 + $0x38] sm:$0xff]
    %v244 = vld [vmem:[#allocation12 + $0x40] sm:$0xff]
    %v245 = vld [vmem:[#allocation12 + $0x48] sm:$0xff]
    %v246 = vld [vmem:[#allocation12 + $0x50] sm:$0xff]
    %v247 = vld [vmem:[#allocation12 + $0x58] sm:$0xff]
    %v248 = vld [vmem:[#allocation12 + $0x60] sm:$0xff]
    %v249 = vld [vmem:[#allocation12 + $0x68] sm:$0xff]
    %v250 = vld [vmem:[#allocation12 + $0x70] sm:$0xff]
    %v251 = vld [vmem:[#allocation12 + $0x78] sm:$0xff]
    %v252 = vpack.c.bf16 %v221, %v220
    %v253 = vpack.c.bf16 %v223, %v222
    %v254 = vpack.c.bf16 %v225, %v224
    %v255 = vpack.c.bf16 %v227, %v226
    %v256 = vpack.c.bf16 %v229, %v228
    %v257 = vpack.c.bf16 %v231, %v230
    %v258 = vpack.c.bf16 %v233, %v232
    %v259 = vpack.c.bf16 %v235, %v234
    %v260 = vpack.c.bf16 %v237, %v236
    %v261 = vpack.c.bf16 %v239, %v238
    %v262 = vpack.c.bf16 %v241, %v240
    %v263 = vpack.c.bf16 %v243, %v242
    %v264 = vpack.c.bf16 %v245, %v244
    %v265 = vpack.c.bf16 %v247, %v246
    %v266 = vpack.c.bf16 %v249, %v248
    %v267 = vpack.c.bf16 %v251, %v250
    %268 = vmatprep.subr.bf16.mxu0 0
    %269 = vmatpush1.bf16.msra.mxu0 %v267
    %270 = vmatprep.subr.bf16.mxu0 0
    %271 = vmatpush1.bf16.msra.mxu0 %v266
    %272 = vmatprep.subr.bf16.mxu0 0
    %273 = vmatpush1.bf16.msra.mxu0 %v265
    %274 = vmatprep.subr.bf16.mxu0 0
    %275 = vmatpush1.bf16.msra.mxu0 %v264
    %276 = vmatprep.subr.bf16.mxu0 0
    %277 = vmatpush1.bf16.msra.mxu0 %v263
    %278 = vmatprep.subr.bf16.mxu0 0
    %279 = vmatpush1.bf16.msra.mxu0 %v262
    %280 = vmatprep.subr.bf16.mxu0 0
    %281 = vmatpush1.bf16.msra.mxu0 %v261
    %282 = vmatprep.subr.bf16.mxu0 0
    %283 = vmatpush1.bf16.msra.mxu0 %v260
    %284 = vmatprep.subr.bf16.mxu0 0
    %285 = vmatpush2.bf16.msra.mxu0 0
    %286 = vmatprep.subr.bf16.mxu0 0
    %287 = vmatpush2.bf16.msra.mxu0 0
    %288 = vmatprep.subr.bf16.mxu0 0
    %289 = vmatpush2.bf16.msra.mxu0 0
    %290 = vmatprep.subr.bf16.mxu0 0
    %291 = vmatpush2.bf16.msra.mxu0 0
    %292 = vmatprep.subr.bf16.mxu0 0
    %293 = vmatpush2.bf16.msra.mxu0 0
    %294 = vmatprep.subr.bf16.mxu0 0
    %295 = vmatpush2.bf16.msra.mxu0 0
    %296 = vmatprep.subr.bf16.mxu0 0
    %297 = vmatpush2.bf16.msra.mxu0 0
    %298 = vmatprep.subr.bf16.mxu0 0
    %299 = vmatpush2.bf16.msra.mxu0 0
    %300 = vmatprep.mubr.bf16.mxu0 0
    %301 = vmatmul.mubr.bf16.gmra.mxu0 %v252
    %v302 = vpop.f32.mrf.mxu0
    %v303 = vadd.f32 0.0, %v302
    %v304 = vpop.f32.mrf.mxu0
    %v305 = vpop.f32.mrf.mxu0
    %v306 = vadd.f32 0.0, %v305
    %v307 = vpop.f32.mrf.mxu0
    %308 = vmatprep.mubr.bf16.mxu0 0
    %309 = vmatmul.mubr.bf16.gmra.mxu0 %v253
    %v310 = vpop.f32.mrf.mxu0
    %v311 = vadd.f32 0.0, %v310
    %v312 = vpop.f32.mrf.mxu0
    %v313 = vpop.f32.mrf.mxu0
    %v314 = vadd.f32 0.0, %v313
    %v315 = vpop.f32.mrf.mxu0
    %316 = vmatprep.mubr.bf16.mxu0 0
    %317 = vmatmul.mubr.bf16.gmra.mxu0 %v254
    %v318 = vpop.f32.mrf.mxu0
    %v319 = vadd.f32 0.0, %v318
    %v320 = vpop.f32.mrf.mxu0
    %v321 = vpop.f32.mrf.mxu0
    %v322 = vadd.f32 0.0, %v321
    %v323 = vpop.f32.mrf.mxu0
    %324 = vmatprep.mubr.bf16.mxu0 0
    %325 = vmatmul.mubr.bf16.gmra.mxu0 %v255
    %v326 = vpop.f32.mrf.mxu0
    %v327 = vadd.f32 0.0, %v326
    %v328 = vpop.f32.mrf.mxu0
    %v329 = vpop.f32.mrf.mxu0
    %v330 = vadd.f32 0.0, %v329
    %v331 = vpop.f32.mrf.mxu0
    %332 = vmatprep.mubr.bf16.mxu0 0
    %333 = vmatmul.mubr.bf16.gmra.mxu0 %v256
    %v334 = vpop.f32.mrf.mxu0
    %v335 = vadd.f32 0.0, %v334
    %v336 = vpop.f32.mrf.mxu0
    %v337 = vpop.f32.mrf.mxu0
    %v338 = vadd.f32 0.0, %v337
    %v339 = vpop.f32.mrf.mxu0
    %340 = vmatprep.mubr.bf16.mxu0 0
    %341 = vmatmul.mubr.bf16.gmra.mxu0 %v257
    %v342 = vpop.f32.mrf.mxu0
    %v343 = vadd.f32 0.0, %v342
    %v344 = vpop.f32.mrf.mxu0
    %v345 = vpop.f32.mrf.mxu0
    %v346 = vadd.f32 0.0, %v345
    %v347 = vpop.f32.mrf.mxu0
    %348 = vmatprep.mubr.bf16.mxu0 0
    %349 = vmatmul.mubr.bf16.gmra.mxu0 %v258
    %v350 = vpop.f32.mrf.mxu0
    %v351 = vadd.f32 0.0, %v350
    %v352 = vpop.f32.mrf.mxu0
    %v353 = vpop.f32.mrf.mxu0
    %v354 = vadd.f32 0.0, %v353
    %v355 = vpop.f32.mrf.mxu0
    %356 = vmatprep.mubr.bf16.mxu0 0
    %357 = vmatmul.mubr.bf16.gmra.mxu0 %v259
    %v358 = vpop.f32.mrf.mxu0
    %v359 = vadd.f32 0.0, %v358
    %v360 = vpop.f32.mrf.mxu0
    %v361 = vpop.f32.mrf.mxu0
    %v362 = vadd.f32 0.0, %v361
    %v363 = vpop.f32.mrf.mxu0
    %364 = vdwg.mxu0
    %v365 = vld [vmem:[%s7] sm:$0x1]
    %v367 = vlaneseq
    %v368 = vshrl.u32 %v367, 7
    %v369 = vsub.s32 0, %v368
    %v370 = vrot.slane %v365, %v369
    %v372 = vmul.f32 %v303, %v370
    %v373 = vmul.f32 %v306, %v370
    %v374 = vmul.f32 %v311, %v370
    %v375 = vmul.f32 %v314, %v370
    %v376 = vmul.f32 %v319, %v370
    %v377 = vmul.f32 %v322, %v370
    %v378 = vmul.f32 %v327, %v370
    %v379 = vmul.f32 %v330, %v370
    %v380 = vmul.f32 %v335, %v370
    %v381 = vmul.f32 %v338, %v370
    %v382 = vmul.f32 %v343, %v370
    %v383 = vmul.f32 %v346, %v370
    %v384 = vmul.f32 %v351, %v370
    %v385 = vmul.f32 %v354, %v370
    %v386 = vmul.f32 %v359, %v370
    %v387 = vmul.f32 %v362, %v370
    %388 = vadd.xlane.f32.xlu0 %v372
    %v389 = vpop.xlane.xlu0 %388
    %390 = vadd.xlane.f32.xlu0 %v373
    %v391 = vpop.xlane.xlu0 %390
    %392 = vadd.xlane.f32.xlu0 %v374
    %v393 = vpop.xlane.xlu0 %392
    %394 = vadd.xlane.f32.xlu0 %v375
    %v395 = vpop.xlane.xlu0 %394
    %396 = vadd.xlane.f32.xlu0 %v376
    %v397 = vpop.xlane.xlu0 %396
    %398 = vadd.xlane.f32.xlu0 %v377
    %v399 = vpop.xlane.xlu0 %398
    %400 = vadd.xlane.f32.xlu0 %v378
    %v401 = vpop.xlane.xlu0 %400
    %402 = vadd.xlane.f32.xlu0 %v379
    %v403 = vpop.xlane.xlu0 %402
    %404 = vadd.xlane.f32.xlu0 %v380
    %v405 = vpop.xlane.xlu0 %404
    %406 = vadd.xlane.f32.xlu0 %v381
    %v407 = vpop.xlane.xlu0 %406
    %408 = vadd.xlane.f32.xlu0 %v382
    %v409 = vpop.xlane.xlu0 %408
    %410 = vadd.xlane.f32.xlu0 %v383
    %v411 = vpop.xlane.xlu0 %410
    %412 = vadd.xlane.f32.xlu0 %v384
    %v413 = vpop.xlane.xlu0 %412
    %414 = vadd.xlane.f32.xlu0 %v385
    %v415 = vpop.xlane.xlu0 %414
    %416 = vadd.xlane.f32.xlu0 %v386
    %v417 = vpop.xlane.xlu0 %416
    %418 = vadd.xlane.f32.xlu0 %v387
    %v419 = vpop.xlane.xlu0 %418
    %v420 = vld [vmem:[%s6] sm:$0x1]
    %421 = vmatprep.subr.mxu0 0.0
    %422 = vmatpush1.xpose.msra.mxu0 %v362
    %423 = vmatprep.subr.mxu0 0.0
    %424 = vmatpush1.xpose.msra.mxu0 %v359
    %425 = vmatprep.subr.mxu0 0.0
    %426 = vmatpush1.xpose.msra.mxu0 %v354
    %427 = vmatprep.subr.mxu0 0.0
    %428 = vmatpush1.xpose.msra.mxu0 %v351
    %429 = vmatprep.subr.mxu0 0.0
    %430 = vmatpush1.xpose.msra.mxu0 %v346
    %431 = vmatprep.subr.mxu0 0.0
    %432 = vmatpush1.xpose.msra.mxu0 %v343
    %433 = vmatprep.subr.mxu0 0.0
    %434 = vmatpush1.xpose.msra.mxu0 %v338
    %435 = vmatprep.subr.mxu0 0.0
    %436 = vmatpush1.xpose.msra.mxu0 %v335
    %437 = vmatprep.subr.mxu0 0.0
    %438 = vmatpush1.xpose.msra.mxu0 %v330
    %439 = vmatprep.subr.mxu0 0.0
    %440 = vmatpush1.xpose.msra.mxu0 %v327
    %441 = vmatprep.subr.mxu0 0.0
    %442 = vmatpush1.xpose.msra.mxu0 %v322
    %443 = vmatprep.subr.mxu0 0.0
    %444 = vmatpush1.xpose.msra.mxu0 %v319
    %445 = vmatprep.subr.mxu0 0.0
    %446 = vmatpush1.xpose.msra.mxu0 %v314
    %447 = vmatprep.subr.mxu0 0.0
    %448 = vmatpush1.xpose.msra.mxu0 %v311
    %449 = vmatprep.subr.mxu0 0.0
    %450 = vmatpush1.xpose.msra.mxu0 %v306
    %451 = vmatprep.subr.mxu0 0.0
    %452 = vmatpush1.xpose.msra.mxu0 %v303
    %453 = vmatprep.subr.mxu0 0.0
    %454 = vmatpush2.xpose.msra.mxu0 0.0
    %455 = vmatprep.subr.mxu0 0.0
    %456 = vmatpush2.xpose.msra.mxu0 0.0
    %457 = vmatprep.subr.mxu0 0.0
    %458 = vmatpush2.xpose.msra.mxu0 0.0
    %459 = vmatprep.subr.mxu0 0.0
    %460 = vmatpush2.xpose.msra.mxu0 0.0
    %461 = vmatprep.subr.mxu0 0.0
    %462 = vmatpush2.xpose.msra.mxu0 0.0
    %463 = vmatprep.subr.mxu0 0.0
    %464 = vmatpush2.xpose.msra.mxu0 0.0
    %465 = vmatprep.subr.mxu0 0.0
    %466 = vmatpush2.xpose.msra.mxu0 0.0
    %467 = vmatprep.subr.mxu0 0.0
    %468 = vmatpush2.xpose.msra.mxu0 0.0
    %469 = vmatprep.subr.mxu0 0.0
    %470 = vmatpush2.xpose.msra.mxu0 0.0
    %471 = vmatprep.subr.mxu0 0.0
    %472 = vmatpush2.xpose.msra.mxu0 0.0
    %473 = vmatprep.subr.mxu0 0.0
    %474 = vmatpush2.xpose.msra.mxu0 0.0
    %475 = vmatprep.subr.mxu0 0.0
    %476 = vmatpush2.xpose.msra.mxu0 0.0
    %477 = vmatprep.subr.mxu0 0.0
    %478 = vmatpush2.xpose.msra.mxu0 0.0
    %479 = vmatprep.subr.mxu0 0.0
    %480 = vmatpush2.xpose.msra.mxu0 0.0
    %481 = vmatprep.subr.mxu0 0.0
    %482 = vmatpush2.xpose.msra.mxu0 0.0
    %483 = vmatprep.subr.mxu0 0.0
    %484 = vmatpush2.xpose.msra.mxu0 0.0
    %485 = vmatprep.mubr.f32.mxu0 0.0
    %486 = vmatmul.mubr.f32.gmra.mxu0 %v420
    %v487 = vpop.f32.mrf.mxu0
    %v488 = vadd.f32 0.0, %v487
    %v489 = vpop.f32.mrf.mxu0
    %490 = vdwg.mxu0
    %v491 = vlaneseq
    %v492 = vshrl.u32 %v491, 7
    %v493 = vsub.s32 0, %v492
    %v494 = vrot.slane %v488, %v493
    %v495 = vadd.f32 %v389, %v494
    %v496 = vadd.f32 %v391, %v494
    %v497 = vadd.f32 %v393, %v494
    %v498 = vadd.f32 %v395, %v494
    %v499 = vadd.f32 %v397, %v494
    %v500 = vadd.f32 %v399, %v494
    %v501 = vadd.f32 %v401, %v494
    %v502 = vadd.f32 %v403, %v494
    %v503 = vadd.f32 %v405, %v494
    %v504 = vadd.f32 %v407, %v494
    %v505 = vadd.f32 %v409, %v494
    %v506 = vadd.f32 %v411, %v494
    %v507 = vadd.f32 %v413, %v494
    %v508 = vadd.f32 %v415, %v494
    %v509 = vadd.f32 %v417, %v494
    %v510 = vadd.f32 %v419, %v494
    %s511 = sld [smem:[#allocation2]]
    %v512 = vstv %s511
    %v513 = vmul.f32 %v512, %v172
    %v514 = vmul.f32 %v512, %v173
    %v515 = vmul.f32 %v512, %v174
    %v516 = vmul.f32 %v512, %v175
    %v517 = vmul.f32 %v512, %v176
    %v518 = vmul.f32 %v512, %v177
    %v519 = vmul.f32 %v512, %v178
    %v520 = vmul.f32 %v512, %v179
    %v521 = vmul.f32 %v512, %v180
    %v522 = vmul.f32 %v512, %v181
    %v523 = vmul.f32 %v512, %v182
    %v524 = vmul.f32 %v512, %v183
    %v525 = vmul.f32 %v512, %v184
    %v526 = vmul.f32 %v512, %v185
    %v527 = vmul.f32 %v512, %v186
    %v528 = vmul.f32 %v512, %v187
    %v529 = vadd.f32 %v495, %v513
    %v530 = vadd.f32 %v496, %v514
    %v531 = vadd.f32 %v497, %v515
    %v532 = vadd.f32 %v498, %v516
    %v533 = vadd.f32 %v499, %v517
    %v534 = vadd.f32 %v500, %v518
    %v535 = vadd.f32 %v501, %v519
    %v536 = vadd.f32 %v502, %v520
    %v537 = vadd.f32 %v503, %v521
    %v538 = vadd.f32 %v504, %v522
    %v539 = vadd.f32 %v505, %v523
    %v540 = vadd.f32 %v506, %v524
    %v541 = vadd.f32 %v507, %v525
    %v542 = vadd.f32 %v508, %v526
    %v543 = vadd.f32 %v509, %v527
    %v544 = vadd.f32 %v510, %v528
    %vm545 = vcmp.gt.f32.partialorder %v529, 0.0
    %vm546 = vcmp.gt.f32.partialorder %v530, 0.0
    %vm547 = vcmp.gt.f32.partialorder %v531, 0.0
    %vm548 = vcmp.gt.f32.partialorder %v532, 0.0
    %vm549 = vcmp.gt.f32.partialorder %v533, 0.0
    %vm550 = vcmp.gt.f32.partialorder %v534, 0.0
    %vm551 = vcmp.gt.f32.partialorder %v535, 0.0
    %vm552 = vcmp.gt.f32.partialorder %v536, 0.0
    %vm553 = vcmp.gt.f32.partialorder %v537, 0.0
    %vm554 = vcmp.gt.f32.partialorder %v538, 0.0
    %vm555 = vcmp.gt.f32.partialorder %v539, 0.0
    %vm556 = vcmp.gt.f32.partialorder %v540, 0.0
    %vm557 = vcmp.gt.f32.partialorder %v541, 0.0
    %vm558 = vcmp.gt.f32.partialorder %v542, 0.0
    %vm559 = vcmp.gt.f32.partialorder %v543, 0.0
    %vm560 = vcmp.gt.f32.partialorder %v544, 0.0
    %v561 = vmul.f32 %v529, 0.2
    %v562 = vmul.f32 %v530, 0.2
    %v563 = vmul.f32 %v531, 0.2
    %v564 = vmul.f32 %v532, 0.2
    %v565 = vmul.f32 %v533, 0.2
    %v566 = vmul.f32 %v534, 0.2
    %v567 = vmul.f32 %v535, 0.2
    %v568 = vmul.f32 %v536, 0.2
    %v569 = vmul.f32 %v537, 0.2
    %v570 = vmul.f32 %v538, 0.2
    %v571 = vmul.f32 %v539, 0.2
    %v572 = vmul.f32 %v540, 0.2
    %v573 = vmul.f32 %v541, 0.2
    %v574 = vmul.f32 %v542, 0.2
    %v575 = vmul.f32 %v543, 0.2
    %v576 = vmul.f32 %v544, 0.2
    %v577 = vsel %vm545, %v529, %v561
    %v578 = vsel %vm546, %v530, %v562
    %v579 = vsel %vm547, %v531, %v563
    %v580 = vsel %vm548, %v532, %v564
    %v581 = vsel %vm549, %v533, %v565
    %v582 = vsel %vm550, %v534, %v566
    %v583 = vsel %vm551, %v535, %v567
    %v584 = vsel %vm552, %v536, %v568
    %v585 = vsel %vm553, %v537, %v569
    %v586 = vsel %vm554, %v538, %v570
    %v587 = vsel %vm555, %v539, %v571
    %v588 = vsel %vm556, %v540, %v572
    %v589 = vsel %vm557, %v541, %v573
    %v590 = vsel %vm558, %v542, %v574
    %v591 = vsel %vm559, %v543, %v575
    %v592 = vsel %vm560, %v544, %v576
    %v593 = vadd.f32 %v577, %v204
    %v594 = vadd.f32 %v578, %v205
    %v595 = vadd.f32 %v579, %v206
    %v596 = vadd.f32 %v580, %v207
    %v597 = vadd.f32 %v581, %v208
    %v598 = vadd.f32 %v582, %v209
    %v599 = vadd.f32 %v583, %v210
    %v600 = vadd.f32 %v584, %v211
    %v601 = vadd.f32 %v585, %v212
    %v602 = vadd.f32 %v586, %v213
    %v603 = vadd.f32 %v587, %v214
    %v604 = vadd.f32 %v588, %v215
    %v605 = vadd.f32 %v589, %v216
    %v606 = vadd.f32 %v590, %v217
    %v607 = vadd.f32 %v591, %v218
    %v608 = vadd.f32 %v592, %v219
    %609 = vmax.xlane.f32.xlu0 %v593
    %v610 = vpop.xlane.xlu0 %609
    %611 = vmax.xlane.f32.xlu0 %v594
    %v612 = vpop.xlane.xlu0 %611
    %613 = vmax.xlane.f32.xlu0 %v595
    %v614 = vpop.xlane.xlu0 %613
    %615 = vmax.xlane.f32.xlu0 %v596
    %v616 = vpop.xlane.xlu0 %615
    %617 = vmax.xlane.f32.xlu0 %v597
    %v618 = vpop.xlane.xlu0 %617
    %619 = vmax.xlane.f32.xlu0 %v598
    %v620 = vpop.xlane.xlu0 %619
    %621 = vmax.xlane.f32.xlu0 %v599
    %v622 = vpop.xlane.xlu0 %621
    %623 = vmax.xlane.f32.xlu0 %v600
    %v624 = vpop.xlane.xlu0 %623
    %625 = vmax.xlane.f32.xlu0 %v601
    %v626 = vpop.xlane.xlu0 %625
    %627 = vmax.xlane.f32.xlu0 %v602
    %v628 = vpop.xlane.xlu0 %627
    %629 = vmax.xlane.f32.xlu0 %v603
    %v630 = vpop.xlane.xlu0 %629
    %631 = vmax.xlane.f32.xlu0 %v604
    %v632 = vpop.xlane.xlu0 %631
    %633 = vmax.xlane.f32.xlu0 %v605
    %v634 = vpop.xlane.xlu0 %633
    %635 = vmax.xlane.f32.xlu0 %v606
    %v636 = vpop.xlane.xlu0 %635
    %637 = vmax.xlane.f32.xlu0 %v607
    %v638 = vpop.xlane.xlu0 %637
    %639 = vmax.xlane.f32.xlu0 %v608
    %v640 = vpop.xlane.xlu0 %639
    %v641 = vsub.f32 %v593, %v610
    %v642 = vsub.f32 %v594, %v612
    %v643 = vsub.f32 %v595, %v614
    %v644 = vsub.f32 %v596, %v616
    %v645 = vsub.f32 %v597, %v618
    %v646 = vsub.f32 %v598, %v620
    %v647 = vsub.f32 %v599, %v622
    %v648 = vsub.f32 %v600, %v624
    %v649 = vsub.f32 %v601, %v626
    %v650 = vsub.f32 %v602, %v628
    %v651 = vsub.f32 %v603, %v630
    %v652 = vsub.f32 %v604, %v632
    %v653 = vsub.f32 %v605, %v634
    %v654 = vsub.f32 %v606, %v636
    %v655 = vsub.f32 %v607, %v638
    %v656 = vsub.f32 %v608, %v640
    %v657 = vmul.f32 %v641, 1.442695
    %v658 = vpow.pop %v657
    %v659 = vmul.f32 %v642, 1.442695
    %v660 = vpow.pop %v659
    %v661 = vmul.f32 %v643, 1.442695
    %v662 = vpow.pop %v661
    %v663 = vmul.f32 %v644, 1.442695
    %v664 = vpow.pop %v663
    %v665 = vmul.f32 %v645, 1.442695
    %v666 = vpow.pop %v665
    %v667 = vmul.f32 %v646, 1.442695
    %v668 = vpow.pop %v667
    %v669 = vmul.f32 %v647, 1.442695
    %v670 = vpow.pop %v669
    %v671 = vmul.f32 %v648, 1.442695
    %v672 = vpow.pop %v671
    %v673 = vmul.f32 %v649, 1.442695
    %v674 = vpow.pop %v673
    %v675 = vmul.f32 %v650, 1.442695
    %v676 = vpow.pop %v675
    %v677 = vmul.f32 %v651, 1.442695
    %v678 = vpow.pop %v677
    %v679 = vmul.f32 %v652, 1.442695
    %v680 = vpow.pop %v679
    %v681 = vmul.f32 %v653, 1.442695
    %v682 = vpow.pop %v681
    %v683 = vmul.f32 %v654, 1.442695
    %v684 = vpow.pop %v683
    %v685 = vmul.f32 %v655, 1.442695
    %v686 = vpow.pop %v685
    %v687 = vmul.f32 %v656, 1.442695
    %v688 = vpow.pop %v687
    %689 = vadd.xlane.f32.xlu0 %v658
    %v690 = vpop.xlane.xlu0 %689
    %691 = vadd.xlane.f32.xlu0 %v660
    %v692 = vpop.xlane.xlu0 %691
    %693 = vadd.xlane.f32.xlu0 %v662
    %v694 = vpop.xlane.xlu0 %693
    %695 = vadd.xlane.f32.xlu0 %v664
    %v696 = vpop.xlane.xlu0 %695
    %697 = vadd.xlane.f32.xlu0 %v666
    %v698 = vpop.xlane.xlu0 %697
    %699 = vadd.xlane.f32.xlu0 %v668
    %v700 = vpop.xlane.xlu0 %699
    %701 = vadd.xlane.f32.xlu0 %v670
    %v702 = vpop.xlane.xlu0 %701
    %703 = vadd.xlane.f32.xlu0 %v672
    %v704 = vpop.xlane.xlu0 %703
    %705 = vadd.xlane.f32.xlu0 %v674
    %v706 = vpop.xlane.xlu0 %705
    %707 = vadd.xlane.f32.xlu0 %v676
    %v708 = vpop.xlane.xlu0 %707
    %709 = vadd.xlane.f32.xlu0 %v678
    %v710 = vpop.xlane.xlu0 %709
    %711 = vadd.xlane.f32.xlu0 %v680
    %v712 = vpop.xlane.xlu0 %711
    %713 = vadd.xlane.f32.xlu0 %v682
    %v714 = vpop.xlane.xlu0 %713
    %715 = vadd.xlane.f32.xlu0 %v684
    %v716 = vpop.xlane.xlu0 %715
    %717 = vadd.xlane.f32.xlu0 %v686
    %v718 = vpop.xlane.xlu0 %717
    %719 = vadd.xlane.f32.xlu0 %v688
    %v720 = vpop.xlane.xlu0 %719
    %v721 = vrcp.pop %v690
    %v722 = vrcp.pop %v692
    %v723 = vrcp.pop %v694
    %v724 = vrcp.pop %v696
    %v725 = vrcp.pop %v698
    %v726 = vrcp.pop %v700
    %v727 = vrcp.pop %v702
    %v728 = vrcp.pop %v704
    %v729 = vrcp.pop %v706
    %v730 = vrcp.pop %v708
    %v731 = vrcp.pop %v710
    %v732 = vrcp.pop %v712
    %v733 = vrcp.pop %v714
    %v734 = vrcp.pop %v716
    %v735 = vrcp.pop %v718
    %v736 = vrcp.pop %v720
    %v737 = vmul.f32 %v658, %v721
    %v738 = vmul.f32 %v660, %v722
    %v739 = vmul.f32 %v662, %v723
    %v740 = vmul.f32 %v664, %v724
    %v741 = vmul.f32 %v666, %v725
    %v742 = vmul.f32 %v668, %v726
    %v743 = vmul.f32 %v670, %v727
    %v744 = vmul.f32 %v672, %v728
    %v745 = vmul.f32 %v674, %v729
    %v746 = vmul.f32 %v676, %v730
    %v747 = vmul.f32 %v678, %v731
    %v748 = vmul.f32 %v680, %v732
    %v749 = vmul.f32 %v682, %v733
    %v750 = vmul.f32 %v684, %v734
    %v751 = vmul.f32 %v686, %v735
    %v752 = vmul.f32 %v688, %v736
    %v753 = vpack.c.bf16 %v738, %v737
    %v754 = vpack.c.bf16 %v740, %v739
    %v755 = vpack.c.bf16 %v742, %v741
    %v756 = vpack.c.bf16 %v744, %v743
    %v757 = vpack.c.bf16 %v746, %v745
    %v758 = vpack.c.bf16 %v748, %v747
    %v759 = vpack.c.bf16 %v750, %v749
    %v760 = vpack.c.bf16 %v752, %v751
    %v761 = vpack.c.bf16 %v306, %v303
    %v762 = vpack.c.bf16 %v314, %v311
    %v763 = vpack.c.bf16 %v322, %v319
    %v764 = vpack.c.bf16 %v330, %v327
    %v765 = vpack.c.bf16 %v338, %v335
    %v766 = vpack.c.bf16 %v346, %v343
    %v767 = vpack.c.bf16 %v354, %v351
    %v768 = vpack.c.bf16 %v362, %v359
    %v769 = vld [vmem:[%s8] sm:$0x1]
    %v771 = vlaneseq
    %v772 = vshrl.u32 %v771, 7
    %v773 = vsub.s32 0, %v772
    %v774 = vrot.slane %v769, %v773
    %776 = vmatprep.subr.bf16.mxu0 0
    %777 = vmatpush1.bf16.msra.mxu0 %v768
    %778 = vmatprep.subr.bf16.mxu0 0
    %779 = vmatpush1.bf16.msra.mxu0 %v767
    %780 = vmatprep.subr.bf16.mxu0 0
    %781 = vmatpush1.bf16.msra.mxu0 %v766
    %782 = vmatprep.subr.bf16.mxu0 0
    %783 = vmatpush1.bf16.msra.mxu0 %v765
    %784 = vmatprep.subr.bf16.mxu0 0
    %785 = vmatpush1.bf16.msra.mxu0 %v764
    %786 = vmatprep.subr.bf16.mxu0 0
    %787 = vmatpush1.bf16.msra.mxu0 %v763
    %788 = vmatprep.subr.bf16.mxu0 0
    %789 = vmatpush1.bf16.msra.mxu0 %v762
    %790 = vmatprep.subr.bf16.mxu0 0
    %791 = vmatpush1.bf16.msra.mxu0 %v761
    %792 = vmatprep.subr.bf16.mxu0 0
    %793 = vmatpush2.bf16.msra.mxu0 0
    %794 = vmatprep.subr.bf16.mxu0 0
    %795 = vmatpush2.bf16.msra.mxu0 0
    %796 = vmatprep.subr.bf16.mxu0 0
    %797 = vmatpush2.bf16.msra.mxu0 0
    %798 = vmatprep.subr.bf16.mxu0 0
    %799 = vmatpush2.bf16.msra.mxu0 0
    %800 = vmatprep.subr.bf16.mxu0 0
    %801 = vmatpush2.bf16.msra.mxu0 0
    %802 = vmatprep.subr.bf16.mxu0 0
    %803 = vmatpush2.bf16.msra.mxu0 0
    %804 = vmatprep.subr.bf16.mxu0 0
    %805 = vmatpush2.bf16.msra.mxu0 0
    %806 = vmatprep.subr.bf16.mxu0 0
    %807 = vmatpush2.bf16.msra.mxu0 0
    %808 = vmatprep.mubr.bf16.mxu0 0
    %809 = vmatmul.mubr.bf16.gmra.mxu0 %v753
    %v810 = vpop.f32.mrf.mxu0
    %v811 = vadd.f32 %v774, %v810
    %v812 = vpop.f32.mrf.mxu0
    %v813 = vpop.f32.mrf.mxu0
    %v814 = vadd.f32 %v774, %v813
    %v815 = vpop.f32.mrf.mxu0
    %816 = vmatprep.mubr.bf16.mxu0 0
    %817 = vmatmul.mubr.bf16.gmra.mxu0 %v754
    %v818 = vpop.f32.mrf.mxu0
    %v819 = vadd.f32 %v774, %v818
    %v820 = vpop.f32.mrf.mxu0
    %v821 = vpop.f32.mrf.mxu0
    %v822 = vadd.f32 %v774, %v821
    %v823 = vpop.f32.mrf.mxu0
    %824 = vmatprep.mubr.bf16.mxu0 0
    %825 = vmatmul.mubr.bf16.gmra.mxu0 %v755
    %v826 = vpop.f32.mrf.mxu0
    %v827 = vadd.f32 %v774, %v826
    %v828 = vpop.f32.mrf.mxu0
    %v829 = vpop.f32.mrf.mxu0
    %v830 = vadd.f32 %v774, %v829
    %v831 = vpop.f32.mrf.mxu0
    %832 = vmatprep.mubr.bf16.mxu0 0
    %833 = vmatmul.mubr.bf16.gmra.mxu0 %v756
    %v834 = vpop.f32.mrf.mxu0
    %v835 = vadd.f32 %v774, %v834
    %v836 = vpop.f32.mrf.mxu0
    %v837 = vpop.f32.mrf.mxu0
    %v838 = vadd.f32 %v774, %v837
    %v839 = vpop.f32.mrf.mxu0
    %840 = vmatprep.mubr.bf16.mxu0 0
    %841 = vmatmul.mubr.bf16.gmra.mxu0 %v757
    %v842 = vpop.f32.mrf.mxu0
    %v843 = vadd.f32 %v774, %v842
    %v844 = vpop.f32.mrf.mxu0
    %v845 = vpop.f32.mrf.mxu0
    %v846 = vadd.f32 %v774, %v845
    %v847 = vpop.f32.mrf.mxu0
    %848 = vmatprep.mubr.bf16.mxu0 0
    %849 = vmatmul.mubr.bf16.gmra.mxu0 %v758
    %v850 = vpop.f32.mrf.mxu0
    %v851 = vadd.f32 %v774, %v850
    %v852 = vpop.f32.mrf.mxu0
    %v853 = vpop.f32.mrf.mxu0
    %v854 = vadd.f32 %v774, %v853
    %v855 = vpop.f32.mrf.mxu0
    %856 = vmatprep.mubr.bf16.mxu0 0
    %857 = vmatmul.mubr.bf16.gmra.mxu0 %v759
    %v858 = vpop.f32.mrf.mxu0
    %v859 = vadd.f32 %v774, %v858
    %v860 = vpop.f32.mrf.mxu0
    %v861 = vpop.f32.mrf.mxu0
    %v862 = vadd.f32 %v774, %v861
    %v863 = vpop.f32.mrf.mxu0
    %864 = vmatprep.mubr.bf16.mxu0 0
    %865 = vmatmul.mubr.bf16.gmra.mxu0 %v760
    %v866 = vpop.f32.mrf.mxu0
    %v867 = vadd.f32 %v774, %v866
    %v868 = vpop.f32.mrf.mxu0
    %v869 = vpop.f32.mrf.mxu0
    %v870 = vadd.f32 %v774, %v869
    %v871 = vpop.f32.mrf.mxu0
    %872 = vdwg.mxu0
    %v873 = vmax.f32 %v811, 0.0
    %v874 = vmax.f32 %v814, 0.0
    %v875 = vmax.f32 %v819, 0.0
    %v876 = vmax.f32 %v822, 0.0
    %v877 = vmax.f32 %v827, 0.0
    %v878 = vmax.f32 %v830, 0.0
    %v879 = vmax.f32 %v835, 0.0
    %v880 = vmax.f32 %v838, 0.0
    %v881 = vmax.f32 %v843, 0.0
    %v882 = vmax.f32 %v846, 0.0
    %v883 = vmax.f32 %v851, 0.0
    %v884 = vmax.f32 %v854, 0.0
    %v885 = vmax.f32 %v859, 0.0
    %v886 = vmax.f32 %v862, 0.0
    %v887 = vmax.f32 %v867, 0.0
    %v888 = vmax.f32 %v870, 0.0
    %889 = vadd.xlane.f32.xlu0 %v873
    %v890 = vpop.xlane.xlu0 %889
    %891 = vadd.xlane.f32.xlu0 %v874
    %v892 = vpop.xlane.xlu0 %891
    %893 = vadd.xlane.f32.xlu0 %v875
    %v894 = vpop.xlane.xlu0 %893
    %895 = vadd.xlane.f32.xlu0 %v876
    %v896 = vpop.xlane.xlu0 %895
    %897 = vadd.xlane.f32.xlu0 %v877
    %v898 = vpop.xlane.xlu0 %897
    %899 = vadd.xlane.f32.xlu0 %v878
    %v900 = vpop.xlane.xlu0 %899
    %901 = vadd.xlane.f32.xlu0 %v879
    %v902 = vpop.xlane.xlu0 %901
    %903 = vadd.xlane.f32.xlu0 %v880
    %v904 = vpop.xlane.xlu0 %903
    %905 = vadd.xlane.f32.xlu0 %v881
    %v906 = vpop.xlane.xlu0 %905
    %907 = vadd.xlane.f32.xlu0 %v882
    %v908 = vpop.xlane.xlu0 %907
    %909 = vadd.xlane.f32.xlu0 %v883
    %v910 = vpop.xlane.xlu0 %909
    %911 = vadd.xlane.f32.xlu0 %v884
    %v912 = vpop.xlane.xlu0 %911
    %913 = vadd.xlane.f32.xlu0 %v885
    %v914 = vpop.xlane.xlu0 %913
    %915 = vadd.xlane.f32.xlu0 %v886
    %v916 = vpop.xlane.xlu0 %915
    %917 = vadd.xlane.f32.xlu0 %v887
    %v918 = vpop.xlane.xlu0 %917
    %919 = vadd.xlane.f32.xlu0 %v888
    %v920 = vpop.xlane.xlu0 %919
    %v921 = vmul.f32 %v890, 0.03125
    %v922 = vmul.f32 %v892, 0.03125
    %v923 = vmul.f32 %v894, 0.03125
    %v924 = vmul.f32 %v896, 0.03125
    %v925 = vmul.f32 %v898, 0.03125
    %v926 = vmul.f32 %v900, 0.03125
    %v927 = vmul.f32 %v902, 0.03125
    %v928 = vmul.f32 %v904, 0.03125
    %v929 = vmul.f32 %v906, 0.03125
    %v930 = vmul.f32 %v908, 0.03125
    %v931 = vmul.f32 %v910, 0.03125
    %v932 = vmul.f32 %v912, 0.03125
    %v933 = vmul.f32 %v914, 0.03125
    %v934 = vmul.f32 %v916, 0.03125
    %v935 = vmul.f32 %v918, 0.03125
    %v936 = vmul.f32 %v920, 0.03125
    %v937 = vmul.f32 %v873, %v873
    %v938 = vmul.f32 %v874, %v874
    %v939 = vmul.f32 %v875, %v875
    %v940 = vmul.f32 %v876, %v876
    %v941 = vmul.f32 %v877, %v877
    %v942 = vmul.f32 %v878, %v878
    %v943 = vmul.f32 %v879, %v879
    %v944 = vmul.f32 %v880, %v880
    %v945 = vmul.f32 %v881, %v881
    %v946 = vmul.f32 %v882, %v882
    %v947 = vmul.f32 %v883, %v883
    %v948 = vmul.f32 %v884, %v884
    %v949 = vmul.f32 %v885, %v885
    %v950 = vmul.f32 %v886, %v886
    %v951 = vmul.f32 %v887, %v887
    %v952 = vmul.f32 %v888, %v888
    %953 = vadd.xlane.f32.xlu0 %v937
    %v954 = vpop.xlane.xlu0 %953
    %955 = vadd.xlane.f32.xlu0 %v938
    %v956 = vpop.xlane.xlu0 %955
    %957 = vadd.xlane.f32.xlu0 %v939
    %v958 = vpop.xlane.xlu0 %957
    %959 = vadd.xlane.f32.xlu0 %v940
    %v960 = vpop.xlane.xlu0 %959
    %961 = vadd.xlane.f32.xlu0 %v941
    %v962 = vpop.xlane.xlu0 %961
    %963 = vadd.xlane.f32.xlu0 %v942
    %v964 = vpop.xlane.xlu0 %963
    %965 = vadd.xlane.f32.xlu0 %v943
    %v966 = vpop.xlane.xlu0 %965
    %967 = vadd.xlane.f32.xlu0 %v944
    %v968 = vpop.xlane.xlu0 %967
    %969 = vadd.xlane.f32.xlu0 %v945
    %v970 = vpop.xlane.xlu0 %969
    %971 = vadd.xlane.f32.xlu0 %v946
    %v972 = vpop.xlane.xlu0 %971
    %973 = vadd.xlane.f32.xlu0 %v947
    %v974 = vpop.xlane.xlu0 %973
    %975 = vadd.xlane.f32.xlu0 %v948
    %v976 = vpop.xlane.xlu0 %975
    %977 = vadd.xlane.f32.xlu0 %v949
    %v978 = vpop.xlane.xlu0 %977
    %979 = vadd.xlane.f32.xlu0 %v950
    %v980 = vpop.xlane.xlu0 %979
    %981 = vadd.xlane.f32.xlu0 %v951
    %v982 = vpop.xlane.xlu0 %981
    %983 = vadd.xlane.f32.xlu0 %v952
    %v984 = vpop.xlane.xlu0 %983
    %v985 = vmul.f32 %v954, 0.03125
    %v986 = vmul.f32 %v956, 0.03125
    %v987 = vmul.f32 %v958, 0.03125
    %v988 = vmul.f32 %v960, 0.03125
    %v989 = vmul.f32 %v962, 0.03125
    %v990 = vmul.f32 %v964, 0.03125
    %v991 = vmul.f32 %v966, 0.03125
    %v992 = vmul.f32 %v968, 0.03125
    %v993 = vmul.f32 %v970, 0.03125
    %v994 = vmul.f32 %v972, 0.03125
    %v995 = vmul.f32 %v974, 0.03125
    %v996 = vmul.f32 %v976, 0.03125
    %v997 = vmul.f32 %v978, 0.03125
    %v998 = vmul.f32 %v980, 0.03125
    %v999 = vmul.f32 %v982, 0.03125
    %v1000 = vmul.f32 %v984, 0.03125
    %v1001 = vmul.f32 %v921, %v921
    %v1002 = vmul.f32 %v922, %v922
    %v1003 = vmul.f32 %v923, %v923
    %v1004 = vmul.f32 %v924, %v924
    %v1005 = vmul.f32 %v925, %v925
    %v1006 = vmul.f32 %v926, %v926
    %v1007 = vmul.f32 %v927, %v927
    %v1008 = vmul.f32 %v928, %v928
    %v1009 = vmul.f32 %v929, %v929
    %v1010 = vmul.f32 %v930, %v930
    %v1011 = vmul.f32 %v931, %v931
    %v1012 = vmul.f32 %v932, %v932
    %v1013 = vmul.f32 %v933, %v933
    %v1014 = vmul.f32 %v934, %v934
    %v1015 = vmul.f32 %v935, %v935
    %v1016 = vmul.f32 %v936, %v936
    %v1017 = vsub.f32 %v985, %v1001
    %v1018 = vsub.f32 %v986, %v1002
    %v1019 = vsub.f32 %v987, %v1003
    %v1020 = vsub.f32 %v988, %v1004
    %v1021 = vsub.f32 %v989, %v1005
    %v1022 = vsub.f32 %v990, %v1006
    %v1023 = vsub.f32 %v991, %v1007
    %v1024 = vsub.f32 %v992, %v1008
    %v1025 = vsub.f32 %v993, %v1009
    %v1026 = vsub.f32 %v994, %v1010
    %v1027 = vsub.f32 %v995, %v1011
    %v1028 = vsub.f32 %v996, %v1012
    %v1029 = vsub.f32 %v997, %v1013
    %v1030 = vsub.f32 %v998, %v1014
    %v1031 = vsub.f32 %v999, %v1015
    %v1032 = vsub.f32 %v1000, %v1016
    %v1033 = vmax.f32 %v1017, 0.0
    %v1034 = vmax.f32 %v1018, 0.0
    %v1035 = vmax.f32 %v1019, 0.0
    %v1036 = vmax.f32 %v1020, 0.0
    %v1037 = vmax.f32 %v1021, 0.0
    %v1038 = vmax.f32 %v1022, 0.0
    %v1039 = vmax.f32 %v1023, 0.0
    %v1040 = vmax.f32 %v1024, 0.0
    %v1041 = vmax.f32 %v1025, 0.0
    %v1042 = vmax.f32 %v1026, 0.0
    %v1043 = vmax.f32 %v1027, 0.0
    %v1044 = vmax.f32 %v1028, 0.0
    %v1045 = vmax.f32 %v1029, 0.0
    %v1046 = vmax.f32 %v1030, 0.0
    %v1047 = vmax.f32 %v1031, 0.0
    %v1048 = vmax.f32 %v1032, 0.0
    %v1049 = vsub.f32 %v873, %v921
    %v1050 = vsub.f32 %v874, %v922
    %v1051 = vsub.f32 %v875, %v923
    %v1052 = vsub.f32 %v876, %v924
    %v1053 = vsub.f32 %v877, %v925
    %v1054 = vsub.f32 %v878, %v926
    %v1055 = vsub.f32 %v879, %v927
    %v1056 = vsub.f32 %v880, %v928
    %v1057 = vsub.f32 %v881, %v929
    %v1058 = vsub.f32 %v882, %v930
    %v1059 = vsub.f32 %v883, %v931
    %v1060 = vsub.f32 %v884, %v932
    %v1061 = vsub.f32 %v885, %v933
    %v1062 = vsub.f32 %v886, %v934
    %v1063 = vsub.f32 %v887, %v935
    %v1064 = vsub.f32 %v888, %v936
    %v1065 = vadd.f32 %v1033, 1e-05
    %v1066 = vadd.f32 %v1034, 1e-05
    %v1067 = vadd.f32 %v1035, 1e-05
    %v1068 = vadd.f32 %v1036, 1e-05
    %v1069 = vadd.f32 %v1037, 1e-05
    %v1070 = vadd.f32 %v1038, 1e-05
    %v1071 = vadd.f32 %v1039, 1e-05
    %v1072 = vadd.f32 %v1040, 1e-05
    %v1073 = vadd.f32 %v1041, 1e-05
    %v1074 = vadd.f32 %v1042, 1e-05
    %v1075 = vadd.f32 %v1043, 1e-05
    %v1076 = vadd.f32 %v1044, 1e-05
    %v1077 = vadd.f32 %v1045, 1e-05
    %v1078 = vadd.f32 %v1046, 1e-05
    %v1079 = vadd.f32 %v1047, 1e-05
    %v1080 = vadd.f32 %v1048, 1e-05
    %v1081 = vrsqrt.pop %v1065
    %v1082 = vrsqrt.pop %v1066
    %v1083 = vrsqrt.pop %v1067
    %v1084 = vrsqrt.pop %v1068
    %v1085 = vrsqrt.pop %v1069
    %v1086 = vrsqrt.pop %v1070
    %v1087 = vrsqrt.pop %v1071
    %v1088 = vrsqrt.pop %v1072
    %v1089 = vrsqrt.pop %v1073
    %v1090 = vrsqrt.pop %v1074
    %v1091 = vrsqrt.pop %v1075
    %v1092 = vrsqrt.pop %v1076
    %v1093 = vrsqrt.pop %v1077
    %v1094 = vrsqrt.pop %v1078
    %v1095 = vrsqrt.pop %v1079
    %v1096 = vrsqrt.pop %v1080
    %v1097 = vmul.f32 %v1049, %v1081
    %v1098 = vmul.f32 %v1050, %v1082
    %v1099 = vmul.f32 %v1051, %v1083
    %v1100 = vmul.f32 %v1052, %v1084
    %v1101 = vmul.f32 %v1053, %v1085
    %v1102 = vmul.f32 %v1054, %v1086
    %v1103 = vmul.f32 %v1055, %v1087
    %v1104 = vmul.f32 %v1056, %v1088
    %v1105 = vmul.f32 %v1057, %v1089
    %v1106 = vmul.f32 %v1058, %v1090
    %v1107 = vmul.f32 %v1059, %v1091
    %v1108 = vmul.f32 %v1060, %v1092
    %v1109 = vmul.f32 %v1061, %v1093
    %v1110 = vmul.f32 %v1062, %v1094
    %v1111 = vmul.f32 %v1063, %v1095
    %v1112 = vmul.f32 %v1064, %v1096
    %v1113 = vld [vmem:[%s9] sm:$0x1]
    %v1115 = vlaneseq
    %v1116 = vshrl.u32 %v1115, 7
    %v1117 = vsub.s32 0, %v1116
    %v1118 = vrot.slane %v1113, %v1117
    %v1120 = vmul.f32 %v1097, %v1118
    %v1121 = vmul.f32 %v1098, %v1118
    %v1122 = vmul.f32 %v1099, %v1118
    %v1123 = vmul.f32 %v1100, %v1118
    %v1124 = vmul.f32 %v1101, %v1118
    %v1125 = vmul.f32 %v1102, %v1118
    %v1126 = vmul.f32 %v1103, %v1118
    %v1127 = vmul.f32 %v1104, %v1118
    %v1128 = vmul.f32 %v1105, %v1118
    %v1129 = vmul.f32 %v1106, %v1118
    %v1130 = vmul.f32 %v1107, %v1118
    %v1131 = vmul.f32 %v1108, %v1118
    %v1132 = vmul.f32 %v1109, %v1118
    %v1133 = vmul.f32 %v1110, %v1118
    %v1134 = vmul.f32 %v1111, %v1118
    %v1135 = vmul.f32 %v1112, %v1118
    %v1136 = vld [vmem:[%s10] sm:$0x1]
    %v1138 = vlaneseq
    %v1139 = vshrl.u32 %v1138, 7
    %v1140 = vsub.s32 0, %v1139
    %v1141 = vrot.slane %v1136, %v1140
    %v1143 = vadd.f32 %v1120, %v1141
    %v1144 = vadd.f32 %v1121, %v1141
    %v1145 = vadd.f32 %v1122, %v1141
    %v1146 = vadd.f32 %v1123, %v1141
    %v1147 = vadd.f32 %v1124, %v1141
    %v1148 = vadd.f32 %v1125, %v1141
    %v1149 = vadd.f32 %v1126, %v1141
    %v1150 = vadd.f32 %v1127, %v1141
    %v1151 = vadd.f32 %v1128, %v1141
    %v1152 = vadd.f32 %v1129, %v1141
    %v1153 = vadd.f32 %v1130, %v1141
    %v1154 = vadd.f32 %v1131, %v1141
    %v1155 = vadd.f32 %v1132, %v1141
    %v1156 = vadd.f32 %v1133, %v1141
    %v1157 = vadd.f32 %v1134, %v1141
    %v1158 = vadd.f32 %v1135, %v1141
    %s1159 = scalar_lea.vmem [#allocation12], 128
    %v1160 = vld [vmem:[%s1159] sm:$0xff]
    %v1161 = vld [vmem:[%s1159 + $0x8] sm:$0xff]
    %v1162 = vld [vmem:[%s1159 + $0x10] sm:$0xff]
    %v1163 = vld [vmem:[%s1159 + $0x18] sm:$0xff]
    %v1164 = vld [vmem:[%s1159 + $0x20] sm:$0xff]
    %v1165 = vld [vmem:[%s1159 + $0x28] sm:$0xff]
    %v1166 = vld [vmem:[%s1159 + $0x30] sm:$0xff]
    %v1167 = vld [vmem:[%s1159 + $0x38] sm:$0xff]
    %v1168 = vld [vmem:[%s1159 + $0x40] sm:$0xff]
    %v1169 = vld [vmem:[%s1159 + $0x48] sm:$0xff]
    %v1170 = vld [vmem:[%s1159 + $0x50] sm:$0xff]
    %v1171 = vld [vmem:[%s1159 + $0x58] sm:$0xff]
    %v1172 = vld [vmem:[%s1159 + $0x60] sm:$0xff]
    %v1173 = vld [vmem:[%s1159 + $0x68] sm:$0xff]
    %v1174 = vld [vmem:[%s1159 + $0x70] sm:$0xff]
    %v1175 = vld [vmem:[%s1159 + $0x78] sm:$0xff]
    %v1176 = vpack.c.bf16 %v1144, %v1143
    %v1177 = vpack.c.bf16 %v1146, %v1145
    %v1178 = vpack.c.bf16 %v1148, %v1147
    %v1179 = vpack.c.bf16 %v1150, %v1149
    %v1180 = vpack.c.bf16 %v1152, %v1151
    %v1181 = vpack.c.bf16 %v1154, %v1153
    %v1182 = vpack.c.bf16 %v1156, %v1155
    %v1183 = vpack.c.bf16 %v1158, %v1157
    %v1184 = vpack.c.bf16 %v1161, %v1160
    %v1185 = vpack.c.bf16 %v1163, %v1162
    %v1186 = vpack.c.bf16 %v1165, %v1164
    %v1187 = vpack.c.bf16 %v1167, %v1166
    %v1188 = vpack.c.bf16 %v1169, %v1168
    %v1189 = vpack.c.bf16 %v1171, %v1170
    %v1190 = vpack.c.bf16 %v1173, %v1172
    %v1191 = vpack.c.bf16 %v1175, %v1174
    %1192 = vmatprep.subr.bf16.mxu0 0
    %1193 = vmatpush1.bf16.msra.mxu0 %v1191
    %1194 = vmatprep.subr.bf16.mxu0 0
    %1195 = vmatpush1.bf16.msra.mxu0 %v1190
    %1196 = vmatprep.subr.bf16.mxu0 0
    %1197 = vmatpush1.bf16.msra.mxu0 %v1189
    %1198 = vmatprep.subr.bf16.mxu0 0
    %1199 = vmatpush1.bf16.msra.mxu0 %v1188
    %1200 = vmatprep.subr.bf16.mxu0 0
    %1201 = vmatpush1.bf16.msra.mxu0 %v1187
    %1202 = vmatprep.subr.bf16.mxu0 0
    %1203 = vmatpush1.bf16.msra.mxu0 %v1186
    %1204 = vmatprep.subr.bf16.mxu0 0
    %1205 = vmatpush1.bf16.msra.mxu0 %v1185
    %1206 = vmatprep.subr.bf16.mxu0 0
    %1207 = vmatpush1.bf16.msra.mxu0 %v1184
    %1208 = vmatprep.subr.bf16.mxu0 0
    %1209 = vmatpush2.bf16.msra.mxu0 0
    %1210 = vmatprep.subr.bf16.mxu0 0
    %1211 = vmatpush2.bf16.msra.mxu0 0
    %1212 = vmatprep.subr.bf16.mxu0 0
    %1213 = vmatpush2.bf16.msra.mxu0 0
    %1214 = vmatprep.subr.bf16.mxu0 0
    %1215 = vmatpush2.bf16.msra.mxu0 0
    %1216 = vmatprep.subr.bf16.mxu0 0
    %1217 = vmatpush2.bf16.msra.mxu0 0
    %1218 = vmatprep.subr.bf16.mxu0 0
    %1219 = vmatpush2.bf16.msra.mxu0 0
    %1220 = vmatprep.subr.bf16.mxu0 0
    %1221 = vmatpush2.bf16.msra.mxu0 0
    %1222 = vmatprep.subr.bf16.mxu0 0
    %1223 = vmatpush2.bf16.msra.mxu0 0
    %1224 = vmatprep.mubr.bf16.mxu0 0
    %1225 = vmatmul.mubr.bf16.gmra.mxu0 %v1176
    %v1226 = vpop.f32.mrf.mxu0
    %v1227 = vadd.f32 0.0, %v1226
    %v1228 = vpop.f32.mrf.mxu0
    %v1229 = vpop.f32.mrf.mxu0
    %v1230 = vadd.f32 0.0, %v1229
    %v1231 = vpop.f32.mrf.mxu0
    %1232 = vmatprep.mubr.bf16.mxu0 0
    %1233 = vmatmul.mubr.bf16.gmra.mxu0 %v1177
    %v1234 = vpop.f32.mrf.mxu0
    %v1235 = vadd.f32 0.0, %v1234
    %v1236 = vpop.f32.mrf.mxu0
    %v1237 = vpop.f32.mrf.mxu0
    %v1238 = vadd.f32 0.0, %v1237
    %v1239 = vpop.f32.mrf.mxu0
    %1240 = vmatprep.mubr.bf16.mxu0 0
    %1241 = vmatmul.mubr.bf16.gmra.mxu0 %v1178
    %v1242 = vpop.f32.mrf.mxu0
    %v1243 = vadd.f32 0.0, %v1242
    %v1244 = vpop.f32.mrf.mxu0
    %v1245 = vpop.f32.mrf.mxu0
    %v1246 = vadd.f32 0.0, %v1245
    %v1247 = vpop.f32.mrf.mxu0
    %1248 = vmatprep.mubr.bf16.mxu0 0
    %1249 = vmatmul.mubr.bf16.gmra.mxu0 %v1179
    %v1250 = vpop.f32.mrf.mxu0
    %v1251 = vadd.f32 0.0, %v1250
    %v1252 = vpop.f32.mrf.mxu0
    %v1253 = vpop.f32.mrf.mxu0
    %v1254 = vadd.f32 0.0, %v1253
    %v1255 = vpop.f32.mrf.mxu0
    %1256 = vmatprep.mubr.bf16.mxu0 0
    %1257 = vmatmul.mubr.bf16.gmra.mxu0 %v1180
    %v1258 = vpop.f32.mrf.mxu0
    %v1259 = vadd.f32 0.0, %v1258
    %v1260 = vpop.f32.mrf.mxu0
    %v1261 = vpop.f32.mrf.mxu0
    %v1262 = vadd.f32 0.0, %v1261
    %v1263 = vpop.f32.mrf.mxu0
    %1264 = vmatprep.mubr.bf16.mxu0 0
    %1265 = vmatmul.mubr.bf16.gmra.mxu0 %v1181
    %v1266 = vpop.f32.mrf.mxu0
    %v1267 = vadd.f32 0.0, %v1266
    %v1268 = vpop.f32.mrf.mxu0
    %v1269 = vpop.f32.mrf.mxu0
    %v1270 = vadd.f32 0.0, %v1269
    %v1271 = vpop.f32.mrf.mxu0
    %1272 = vmatprep.mubr.bf16.mxu0 0
    %1273 = vmatmul.mubr.bf16.gmra.mxu0 %v1182
    %v1274 = vpop.f32.mrf.mxu0
    %v1275 = vadd.f32 0.0, %v1274
    %v1276 = vpop.f32.mrf.mxu0
    %v1277 = vpop.f32.mrf.mxu0
    %v1278 = vadd.f32 0.0, %v1277
    %v1279 = vpop.f32.mrf.mxu0
    %1280 = vmatprep.mubr.bf16.mxu0 0
    %1281 = vmatmul.mubr.bf16.gmra.mxu0 %v1183
    %v1282 = vpop.f32.mrf.mxu0
    %v1283 = vadd.f32 0.0, %v1282
    %v1284 = vpop.f32.mrf.mxu0
    %v1285 = vpop.f32.mrf.mxu0
    %v1286 = vadd.f32 0.0, %v1285
    %v1287 = vpop.f32.mrf.mxu0
    %1288 = vdwg.mxu0
    %s1289 = scalar_lea.vmem %s7, 1
    %v1290 = vld [vmem:[%s1289] sm:$0x1]
    %v1292 = vlaneseq
    %v1293 = vshrl.u32 %v1292, 7
    %v1294 = vsub.s32 0, %v1293
    %v1295 = vrot.slane %v1290, %v1294
    %v1297 = vmul.f32 %v1227, %v1295
    %v1298 = vmul.f32 %v1230, %v1295
    %v1299 = vmul.f32 %v1235, %v1295
    %v1300 = vmul.f32 %v1238, %v1295
    %v1301 = vmul.f32 %v1243, %v1295
    %v1302 = vmul.f32 %v1246, %v1295
    %v1303 = vmul.f32 %v1251, %v1295
    %v1304 = vmul.f32 %v1254, %v1295
    %v1305 = vmul.f32 %v1259, %v1295
    %v1306 = vmul.f32 %v1262, %v1295
    %v1307 = vmul.f32 %v1267, %v1295
    %v1308 = vmul.f32 %v1270, %v1295
    %v1309 = vmul.f32 %v1275, %v1295
    %v1310 = vmul.f32 %v1278, %v1295
    %v1311 = vmul.f32 %v1283, %v1295
    %v1312 = vmul.f32 %v1286, %v1295
    %1313 = vadd.xlane.f32.xlu0 %v1297
    %v1314 = vpop.xlane.xlu0 %1313
    %1315 = vadd.xlane.f32.xlu0 %v1298
    %v1316 = vpop.xlane.xlu0 %1315
    %1317 = vadd.xlane.f32.xlu0 %v1299
    %v1318 = vpop.xlane.xlu0 %1317
    %1319 = vadd.xlane.f32.xlu0 %v1300
    %v1320 = vpop.xlane.xlu0 %1319
    %1321 = vadd.xlane.f32.xlu0 %v1301
    %v1322 = vpop.xlane.xlu0 %1321
    %1323 = vadd.xlane.f32.xlu0 %v1302
    %v1324 = vpop.xlane.xlu0 %1323
    %1325 = vadd.xlane.f32.xlu0 %v1303
    %v1326 = vpop.xlane.xlu0 %1325
    %1327 = vadd.xlane.f32.xlu0 %v1304
    %v1328 = vpop.xlane.xlu0 %1327
    %1329 = vadd.xlane.f32.xlu0 %v1305
    %v1330 = vpop.xlane.xlu0 %1329
    %1331 = vadd.xlane.f32.xlu0 %v1306
    %v1332 = vpop.xlane.xlu0 %1331
    %1333 = vadd.xlane.f32.xlu0 %v1307
    %v1334 = vpop.xlane.xlu0 %1333
    %1335 = vadd.xlane.f32.xlu0 %v1308
    %v1336 = vpop.xlane.xlu0 %1335
    %1337 = vadd.xlane.f32.xlu0 %v1309
    %v1338 = vpop.xlane.xlu0 %1337
    %1339 = vadd.xlane.f32.xlu0 %v1310
    %v1340 = vpop.xlane.xlu0 %1339
    %1341 = vadd.xlane.f32.xlu0 %v1311
    %v1342 = vpop.xlane.xlu0 %1341
    %1343 = vadd.xlane.f32.xlu0 %v1312
    %v1344 = vpop.xlane.xlu0 %1343
    %s1345 = scalar_lea.vmem %s6, 1
    %v1346 = vld [vmem:[%s1345] sm:$0x1]
    %1347 = vmatprep.subr.mxu0 0.0
    %1348 = vmatpush1.xpose.msra.mxu0 %v1286
    %1349 = vmatprep.subr.mxu0 0.0
    %1350 = vmatpush1.xpose.msra.mxu0 %v1283
    %1351 = vmatprep.subr.mxu0 0.0
    %1352 = vmatpush1.xpose.msra.mxu0 %v1278
    %1353 = vmatprep.subr.mxu0 0.0
    %1354 = vmatpush1.xpose.msra.mxu0 %v1275
    %1355 = vmatprep.subr.mxu0 0.0
    %1356 = vmatpush1.xpose.msra.mxu0 %v1270
    %1357 = vmatprep.subr.mxu0 0.0
    %1358 = vmatpush1.xpose.msra.mxu0 %v1267
    %1359 = vmatprep.subr.mxu0 0.0
    %1360 = vmatpush1.xpose.msra.mxu0 %v1262
    %1361 = vmatprep.subr.mxu0 0.0
    %1362 = vmatpush1.xpose.msra.mxu0 %v1259
    %1363 = vmatprep.subr.mxu0 0.0
    %1364 = vmatpush1.xpose.msra.mxu0 %v1254
    %1365 = vmatprep.subr.mxu0 0.0
    %1366 = vmatpush1.xpose.msra.mxu0 %v1251
    %1367 = vmatprep.subr.mxu0 0.0
    %1368 = vmatpush1.xpose.msra.mxu0 %v1246
    %1369 = vmatprep.subr.mxu0 0.0
    %1370 = vmatpush1.xpose.msra.mxu0 %v1243
    %1371 = vmatprep.subr.mxu0 0.0
    %1372 = vmatpush1.xpose.msra.mxu0 %v1238
    %1373 = vmatprep.subr.mxu0 0.0
    %1374 = vmatpush1.xpose.msra.mxu0 %v1235
    %1375 = vmatprep.subr.mxu0 0.0
    %1376 = vmatpush1.xpose.msra.mxu0 %v1230
    %1377 = vmatprep.subr.mxu0 0.0
    %1378 = vmatpush1.xpose.msra.mxu0 %v1227
    %1379 = vmatprep.subr.mxu0 0.0
    %1380 = vmatpush2.xpose.msra.mxu0 0.0
    %1381 = vmatprep.subr.mxu0 0.0
    %1382 = vmatpush2.xpose.msra.mxu0 0.0
    %1383 = vmatprep.subr.mxu0 0.0
    %1384 = vmatpush2.xpose.msra.mxu0 0.0
    %1385 = vmatprep.subr.mxu0 0.0
    %1386 = vmatpush2.xpose.msra.mxu0 0.0
    %1387 = vmatprep.subr.mxu0 0.0
    %1388 = vmatpush2.xpose.msra.mxu0 0.0
    %1389 = vmatprep.subr.mxu0 0.0
    %1390 = vmatpush2.xpose.msra.mxu0 0.0
    %1391 = vmatprep.subr.mxu0 0.0
    %1392 = vmatpush2.xpose.msra.mxu0 0.0
    %1393 = vmatprep.subr.mxu0 0.0
    %1394 = vmatpush2.xpose.msra.mxu0 0.0
    %1395 = vmatprep.subr.mxu0 0.0
    %1396 = vmatpush2.xpose.msra.mxu0 0.0
    %1397 = vmatprep.subr.mxu0 0.0
    %1398 = vmatpush2.xpose.msra.mxu0 0.0
    %1399 = vmatprep.subr.mxu0 0.0
    %1400 = vmatpush2.xpose.msra.mxu0 0.0
    %1401 = vmatprep.subr.mxu0 0.0
    %1402 = vmatpush2.xpose.msra.mxu0 0.0
    %1403 = vmatprep.subr.mxu0 0.0
    %1404 = vmatpush2.xpose.msra.mxu0 0.0
    %1405 = vmatprep.subr.mxu0 0.0
    %1406 = vmatpush2.xpose.msra.mxu0 0.0
    %1407 = vmatprep.subr.mxu0 0.0
    %1408 = vmatpush2.xpose.msra.mxu0 0.0
    %1409 = vmatprep.subr.mxu0 0.0
    %1410 = vmatpush2.xpose.msra.mxu0 0.0
    %1411 = vmatprep.mubr.f32.mxu0 0.0
    %1412 = vmatmul.mubr.f32.gmra.mxu0 %v1346
    %v1413 = vpop.f32.mrf.mxu0
    %v1414 = vadd.f32 0.0, %v1413
    %v1415 = vpop.f32.mrf.mxu0
    %1416 = vdwg.mxu0
    %v1417 = vlaneseq
    %v1418 = vshrl.u32 %v1417, 7
    %v1419 = vsub.s32 0, %v1418
    %v1420 = vrot.slane %v1414, %v1419
    %v1421 = vadd.f32 %v1314, %v1420
    %v1422 = vadd.f32 %v1316, %v1420
    %v1423 = vadd.f32 %v1318, %v1420
    %v1424 = vadd.f32 %v1320, %v1420
    %v1425 = vadd.f32 %v1322, %v1420
    %v1426 = vadd.f32 %v1324, %v1420
    %v1427 = vadd.f32 %v1326, %v1420
    %v1428 = vadd.f32 %v1328, %v1420
    %v1429 = vadd.f32 %v1330, %v1420
    %v1430 = vadd.f32 %v1332, %v1420
    %v1431 = vadd.f32 %v1334, %v1420
    %v1432 = vadd.f32 %v1336, %v1420
    %v1433 = vadd.f32 %v1338, %v1420
    %v1434 = vadd.f32 %v1340, %v1420
    %v1435 = vadd.f32 %v1342, %v1420
    %v1436 = vadd.f32 %v1344, %v1420
    %s1437 = sld [smem:[#allocation2 + $0x1]]
    %v1438 = vstv %s1437
    %v1439 = vmul.f32 %v1438, %v172
    %v1440 = vmul.f32 %v1438, %v173
    %v1441 = vmul.f32 %v1438, %v174
    %v1442 = vmul.f32 %v1438, %v175
    %v1443 = vmul.f32 %v1438, %v176
    %v1444 = vmul.f32 %v1438, %v177
    %v1445 = vmul.f32 %v1438, %v178
    %v1446 = vmul.f32 %v1438, %v179
    %v1447 = vmul.f32 %v1438, %v180
    %v1448 = vmul.f32 %v1438, %v181
    %v1449 = vmul.f32 %v1438, %v182
    %v1450 = vmul.f32 %v1438, %v183
    %v1451 = vmul.f32 %v1438, %v184
    %v1452 = vmul.f32 %v1438, %v185
    %v1453 = vmul.f32 %v1438, %v186
    %v1454 = vmul.f32 %v1438, %v187
    %v1455 = vadd.f32 %v1421, %v1439
    %v1456 = vadd.f32 %v1422, %v1440
    %v1457 = vadd.f32 %v1423, %v1441
    %v1458 = vadd.f32 %v1424, %v1442
    %v1459 = vadd.f32 %v1425, %v1443
    %v1460 = vadd.f32 %v1426, %v1444
    %v1461 = vadd.f32 %v1427, %v1445
    %v1462 = vadd.f32 %v1428, %v1446
    %v1463 = vadd.f32 %v1429, %v1447
    %v1464 = vadd.f32 %v1430, %v1448
    %v1465 = vadd.f32 %v1431, %v1449
    %v1466 = vadd.f32 %v1432, %v1450
    %v1467 = vadd.f32 %v1433, %v1451
    %v1468 = vadd.f32 %v1434, %v1452
    %v1469 = vadd.f32 %v1435, %v1453
    %v1470 = vadd.f32 %v1436, %v1454
    %vm1471 = vcmp.gt.f32.partialorder %v1455, 0.0
    %vm1472 = vcmp.gt.f32.partialorder %v1456, 0.0
    %vm1473 = vcmp.gt.f32.partialorder %v1457, 0.0
    %vm1474 = vcmp.gt.f32.partialorder %v1458, 0.0
    %vm1475 = vcmp.gt.f32.partialorder %v1459, 0.0
    %vm1476 = vcmp.gt.f32.partialorder %v1460, 0.0
    %vm1477 = vcmp.gt.f32.partialorder %v1461, 0.0
    %vm1478 = vcmp.gt.f32.partialorder %v1462, 0.0
    %vm1479 = vcmp.gt.f32.partialorder %v1463, 0.0
    %vm1480 = vcmp.gt.f32.partialorder %v1464, 0.0
    %vm1481 = vcmp.gt.f32.partialorder %v1465, 0.0
    %vm1482 = vcmp.gt.f32.partialorder %v1466, 0.0
    %vm1483 = vcmp.gt.f32.partialorder %v1467, 0.0
    %vm1484 = vcmp.gt.f32.partialorder %v1468, 0.0
    %vm1485 = vcmp.gt.f32.partialorder %v1469, 0.0
    %vm1486 = vcmp.gt.f32.partialorder %v1470, 0.0
    %v1487 = vmul.f32 %v1455, 0.2
    %v1488 = vmul.f32 %v1456, 0.2
    %v1489 = vmul.f32 %v1457, 0.2
    %v1490 = vmul.f32 %v1458, 0.2
    %v1491 = vmul.f32 %v1459, 0.2
    %v1492 = vmul.f32 %v1460, 0.2
    %v1493 = vmul.f32 %v1461, 0.2
    %v1494 = vmul.f32 %v1462, 0.2
    %v1495 = vmul.f32 %v1463, 0.2
    %v1496 = vmul.f32 %v1464, 0.2
    %v1497 = vmul.f32 %v1465, 0.2
    %v1498 = vmul.f32 %v1466, 0.2
    %v1499 = vmul.f32 %v1467, 0.2
    %v1500 = vmul.f32 %v1468, 0.2
    %v1501 = vmul.f32 %v1469, 0.2
    %v1502 = vmul.f32 %v1470, 0.2
    %v1503 = vsel %vm1471, %v1455, %v1487
    %v1504 = vsel %vm1472, %v1456, %v1488
    %v1505 = vsel %vm1473, %v1457, %v1489
    %v1506 = vsel %vm1474, %v1458, %v1490
    %v1507 = vsel %vm1475, %v1459, %v1491
    %v1508 = vsel %vm1476, %v1460, %v1492
    %v1509 = vsel %vm1477, %v1461, %v1493
    %v1510 = vsel %vm1478, %v1462, %v1494
    %v1511 = vsel %vm1479, %v1463, %v1495
    %v1512 = vsel %vm1480, %v1464, %v1496
    %v1513 = vsel %vm1481, %v1465, %v1497
    %v1514 = vsel %vm1482, %v1466, %v1498
    %v1515 = vsel %vm1483, %v1467, %v1499
    %v1516 = vsel %vm1484, %v1468, %v1500
    %v1517 = vsel %vm1485, %v1469, %v1501
    %v1518 = vsel %vm1486, %v1470, %v1502
    %v1519 = vadd.f32 %v1503, %v204
    %v1520 = vadd.f32 %v1504, %v205
    %v1521 = vadd.f32 %v1505, %v206
    %v1522 = vadd.f32 %v1506, %v207
    %v1523 = vadd.f32 %v1507, %v208
    %v1524 = vadd.f32 %v1508, %v209
    %v1525 = vadd.f32 %v1509, %v210
    %v1526 = vadd.f32 %v1510, %v211
    %v1527 = vadd.f32 %v1511, %v212
    %v1528 = vadd.f32 %v1512, %v213
    %v1529 = vadd.f32 %v1513, %v214
    %v1530 = vadd.f32 %v1514, %v215
    %v1531 = vadd.f32 %v1515, %v216
    %v1532 = vadd.f32 %v1516, %v217
    %v1533 = vadd.f32 %v1517, %v218
    %v1534 = vadd.f32 %v1518, %v219
    %1535 = vmax.xlane.f32.xlu0 %v1519
    %v1536 = vpop.xlane.xlu0 %1535
    %1537 = vmax.xlane.f32.xlu0 %v1520
    %v1538 = vpop.xlane.xlu0 %1537
    %1539 = vmax.xlane.f32.xlu0 %v1521
    %v1540 = vpop.xlane.xlu0 %1539
    %1541 = vmax.xlane.f32.xlu0 %v1522
    %v1542 = vpop.xlane.xlu0 %1541
    %1543 = vmax.xlane.f32.xlu0 %v1523
    %v1544 = vpop.xlane.xlu0 %1543
    %1545 = vmax.xlane.f32.xlu0 %v1524
    %v1546 = vpop.xlane.xlu0 %1545
    %1547 = vmax.xlane.f32.xlu0 %v1525
    %v1548 = vpop.xlane.xlu0 %1547
    %1549 = vmax.xlane.f32.xlu0 %v1526
    %v1550 = vpop.xlane.xlu0 %1549
    %1551 = vmax.xlane.f32.xlu0 %v1527
    %v1552 = vpop.xlane.xlu0 %1551
    %1553 = vmax.xlane.f32.xlu0 %v1528
    %v1554 = vpop.xlane.xlu0 %1553
    %1555 = vmax.xlane.f32.xlu0 %v1529
    %v1556 = vpop.xlane.xlu0 %1555
    %1557 = vmax.xlane.f32.xlu0 %v1530
    %v1558 = vpop.xlane.xlu0 %1557
    %1559 = vmax.xlane.f32.xlu0 %v1531
    %v1560 = vpop.xlane.xlu0 %1559
    %1561 = vmax.xlane.f32.xlu0 %v1532
    %v1562 = vpop.xlane.xlu0 %1561
    %1563 = vmax.xlane.f32.xlu0 %v1533
    %v1564 = vpop.xlane.xlu0 %1563
    %1565 = vmax.xlane.f32.xlu0 %v1534
    %v1566 = vpop.xlane.xlu0 %1565
    %v1567 = vsub.f32 %v1519, %v1536
    %v1568 = vsub.f32 %v1520, %v1538
    %v1569 = vsub.f32 %v1521, %v1540
    %v1570 = vsub.f32 %v1522, %v1542
    %v1571 = vsub.f32 %v1523, %v1544
    %v1572 = vsub.f32 %v1524, %v1546
    %v1573 = vsub.f32 %v1525, %v1548
    %v1574 = vsub.f32 %v1526, %v1550
    %v1575 = vsub.f32 %v1527, %v1552
    %v1576 = vsub.f32 %v1528, %v1554
    %v1577 = vsub.f32 %v1529, %v1556
    %v1578 = vsub.f32 %v1530, %v1558
    %v1579 = vsub.f32 %v1531, %v1560
    %v1580 = vsub.f32 %v1532, %v1562
    %v1581 = vsub.f32 %v1533, %v1564
    %v1582 = vsub.f32 %v1534, %v1566
    %v1583 = vmul.f32 %v1567, 1.442695
    %v1584 = vpow.pop %v1583
    %v1585 = vmul.f32 %v1568, 1.442695
    %v1586 = vpow.pop %v1585
    %v1587 = vmul.f32 %v1569, 1.442695
    %v1588 = vpow.pop %v1587
    %v1589 = vmul.f32 %v1570, 1.442695
    %v1590 = vpow.pop %v1589
    %v1591 = vmul.f32 %v1571, 1.442695
    %v1592 = vpow.pop %v1591
    %v1593 = vmul.f32 %v1572, 1.442695
    %v1594 = vpow.pop %v1593
    %v1595 = vmul.f32 %v1573, 1.442695
    %v1596 = vpow.pop %v1595
    %v1597 = vmul.f32 %v1574, 1.442695
    %v1598 = vpow.pop %v1597
    %v1599 = vmul.f32 %v1575, 1.442695
    %v1600 = vpow.pop %v1599
    %v1601 = vmul.f32 %v1576, 1.442695
    %v1602 = vpow.pop %v1601
    %v1603 = vmul.f32 %v1577, 1.442695
    %v1604 = vpow.pop %v1603
    %v1605 = vmul.f32 %v1578, 1.442695
    %v1606 = vpow.pop %v1605
    %v1607 = vmul.f32 %v1579, 1.442695
    %v1608 = vpow.pop %v1607
    %v1609 = vmul.f32 %v1580, 1.442695
    %v1610 = vpow.pop %v1609
    %v1611 = vmul.f32 %v1581, 1.442695
    %v1612 = vpow.pop %v1611
    %v1613 = vmul.f32 %v1582, 1.442695
    %v1614 = vpow.pop %v1613
    %1615 = vadd.xlane.f32.xlu0 %v1584
    %v1616 = vpop.xlane.xlu0 %1615
    %1617 = vadd.xlane.f32.xlu0 %v1586
    %v1618 = vpop.xlane.xlu0 %1617
    %1619 = vadd.xlane.f32.xlu0 %v1588
    %v1620 = vpop.xlane.xlu0 %1619
    %1621 = vadd.xlane.f32.xlu0 %v1590
    %v1622 = vpop.xlane.xlu0 %1621
    %1623 = vadd.xlane.f32.xlu0 %v1592
    %v1624 = vpop.xlane.xlu0 %1623
    %1625 = vadd.xlane.f32.xlu0 %v1594
    %v1626 = vpop.xlane.xlu0 %1625
    %1627 = vadd.xlane.f32.xlu0 %v1596
    %v1628 = vpop.xlane.xlu0 %1627
    %1629 = vadd.xlane.f32.xlu0 %v1598
    %v1630 = vpop.xlane.xlu0 %1629
    %1631 = vadd.xlane.f32.xlu0 %v1600
    %v1632 = vpop.xlane.xlu0 %1631
    %1633 = vadd.xlane.f32.xlu0 %v1602
    %v1634 = vpop.xlane.xlu0 %1633
    %1635 = vadd.xlane.f32.xlu0 %v1604
    %v1636 = vpop.xlane.xlu0 %1635
    %1637 = vadd.xlane.f32.xlu0 %v1606
    %v1638 = vpop.xlane.xlu0 %1637
    %1639 = vadd.xlane.f32.xlu0 %v1608
    %v1640 = vpop.xlane.xlu0 %1639
    %1641 = vadd.xlane.f32.xlu0 %v1610
    %v1642 = vpop.xlane.xlu0 %1641
    %1643 = vadd.xlane.f32.xlu0 %v1612
    %v1644 = vpop.xlane.xlu0 %1643
    %1645 = vadd.xlane.f32.xlu0 %v1614
    %v1646 = vpop.xlane.xlu0 %1645
    %v1647 = vrcp.pop %v1616
    %v1648 = vrcp.pop %v1618
    %v1649 = vrcp.pop %v1620
    %v1650 = vrcp.pop %v1622
    %v1651 = vrcp.pop %v1624
    %v1652 = vrcp.pop %v1626
    %v1653 = vrcp.pop %v1628
    %v1654 = vrcp.pop %v1630
    %v1655 = vrcp.pop %v1632
    %v1656 = vrcp.pop %v1634
    %v1657 = vrcp.pop %v1636
    %v1658 = vrcp.pop %v1638
    %v1659 = vrcp.pop %v1640
    %v1660 = vrcp.pop %v1642
    %v1661 = vrcp.pop %v1644
    %v1662 = vrcp.pop %v1646
    %v1663 = vmul.f32 %v1584, %v1647
    %v1664 = vmul.f32 %v1586, %v1648
    %v1665 = vmul.f32 %v1588, %v1649
    %v1666 = vmul.f32 %v1590, %v1650
    %v1667 = vmul.f32 %v1592, %v1651
    %v1668 = vmul.f32 %v1594, %v1652
    %v1669 = vmul.f32 %v1596, %v1653
    %v1670 = vmul.f32 %v1598, %v1654
    %v1671 = vmul.f32 %v1600, %v1655
    %v1672 = vmul.f32 %v1602, %v1656
    %v1673 = vmul.f32 %v1604, %v1657
    %v1674 = vmul.f32 %v1606, %v1658
    %v1675 = vmul.f32 %v1608, %v1659
    %v1676 = vmul.f32 %v1610, %v1660
    %v1677 = vmul.f32 %v1612, %v1661
    %v1678 = vmul.f32 %v1614, %v1662
    %v1679 = vpack.c.bf16 %v1664, %v1663
    %v1680 = vpack.c.bf16 %v1666, %v1665
    %v1681 = vpack.c.bf16 %v1668, %v1667
    %v1682 = vpack.c.bf16 %v1670, %v1669
    %v1683 = vpack.c.bf16 %v1672, %v1671
    %v1684 = vpack.c.bf16 %v1674, %v1673
    %v1685 = vpack.c.bf16 %v1676, %v1675
    %v1686 = vpack.c.bf16 %v1678, %v1677
    %v1687 = vpack.c.bf16 %v1230, %v1227
    %v1688 = vpack.c.bf16 %v1238, %v1235
    %v1689 = vpack.c.bf16 %v1246, %v1243
    %v1690 = vpack.c.bf16 %v1254, %v1251
    %v1691 = vpack.c.bf16 %v1262, %v1259
    %v1692 = vpack.c.bf16 %v1270, %v1267
    %v1693 = vpack.c.bf16 %v1278, %v1275
    %v1694 = vpack.c.bf16 %v1286, %v1283
    %s1695 = scalar_lea.vmem %s8, 1
    %v1696 = vld [vmem:[%s1695] sm:$0x1]
    %v1698 = vlaneseq
    %v1699 = vshrl.u32 %v1698, 7
    %v1700 = vsub.s32 0, %v1699
    %v1701 = vrot.slane %v1696, %v1700
    %1703 = vmatprep.subr.bf16.mxu0 0
    %1704 = vmatpush1.bf16.msra.mxu0 %v1694
    %1705 = vmatprep.subr.bf16.mxu0 0
    %1706 = vmatpush1.bf16.msra.mxu0 %v1693
    %1707 = vmatprep.subr.bf16.mxu0 0
    %1708 = vmatpush1.bf16.msra.mxu0 %v1692
    %1709 = vmatprep.subr.bf16.mxu0 0
    %1710 = vmatpush1.bf16.msra.mxu0 %v1691
    %1711 = vmatprep.subr.bf16.mxu0 0
    %1712 = vmatpush1.bf16.msra.mxu0 %v1690
    %1713 = vmatprep.subr.bf16.mxu0 0
    %1714 = vmatpush1.bf16.msra.mxu0 %v1689
    %1715 = vmatprep.subr.bf16.mxu0 0
    %1716 = vmatpush1.bf16.msra.mxu0 %v1688
    %1717 = vmatprep.subr.bf16.mxu0 0
    %1718 = vmatpush1.bf16.msra.mxu0 %v1687
    %1719 = vmatprep.subr.bf16.mxu0 0
    %1720 = vmatpush2.bf16.msra.mxu0 0
    %1721 = vmatprep.subr.bf16.mxu0 0
    %1722 = vmatpush2.bf16.msra.mxu0 0
    %1723 = vmatprep.subr.bf16.mxu0 0
    %1724 = vmatpush2.bf16.msra.mxu0 0
    %1725 = vmatprep.subr.bf16.mxu0 0
    %1726 = vmatpush2.bf16.msra.mxu0 0
    %1727 = vmatprep.subr.bf16.mxu0 0
    %1728 = vmatpush2.bf16.msra.mxu0 0
    %1729 = vmatprep.subr.bf16.mxu0 0
    %1730 = vmatpush2.bf16.msra.mxu0 0
    %1731 = vmatprep.subr.bf16.mxu0 0
    %1732 = vmatpush2.bf16.msra.mxu0 0
    %1733 = vmatprep.subr.bf16.mxu0 0
    %1734 = vmatpush2.bf16.msra.mxu0 0
    %1735 = vmatprep.mubr.bf16.mxu0 0
    %1736 = vmatmul.mubr.bf16.gmra.mxu0 %v1679
    %v1737 = vpop.f32.mrf.mxu0
    %v1738 = vadd.f32 %v1701, %v1737
    %v1739 = vpop.f32.mrf.mxu0
    %v1740 = vpop.f32.mrf.mxu0
    %v1741 = vadd.f32 %v1701, %v1740
    %v1742 = vpop.f32.mrf.mxu0
    %1743 = vmatprep.mubr.bf16.mxu0 0
    %1744 = vmatmul.mubr.bf16.gmra.mxu0 %v1680
    %v1745 = vpop.f32.mrf.mxu0
    %v1746 = vadd.f32 %v1701, %v1745
    %v1747 = vpop.f32.mrf.mxu0
    %v1748 = vpop.f32.mrf.mxu0
    %v1749 = vadd.f32 %v1701, %v1748
    %v1750 = vpop.f32.mrf.mxu0
    %1751 = vmatprep.mubr.bf16.mxu0 0
    %1752 = vmatmul.mubr.bf16.gmra.mxu0 %v1681
    %v1753 = vpop.f32.mrf.mxu0
    %v1754 = vadd.f32 %v1701, %v1753
    %v1755 = vpop.f32.mrf.mxu0
    %v1756 = vpop.f32.mrf.mxu0
    %v1757 = vadd.f32 %v1701, %v1756
    %v1758 = vpop.f32.mrf.mxu0
    %1759 = vmatprep.mubr.bf16.mxu0 0
    %1760 = vmatmul.mubr.bf16.gmra.mxu0 %v1682
    %v1761 = vpop.f32.mrf.mxu0
    %v1762 = vadd.f32 %v1701, %v1761
    %v1763 = vpop.f32.mrf.mxu0
    %v1764 = vpop.f32.mrf.mxu0
    %v1765 = vadd.f32 %v1701, %v1764
    %v1766 = vpop.f32.mrf.mxu0
    %1767 = vmatprep.mubr.bf16.mxu0 0
    %1768 = vmatmul.mubr.bf16.gmra.mxu0 %v1683
    %v1769 = vpop.f32.mrf.mxu0
    %v1770 = vadd.f32 %v1701, %v1769
    %v1771 = vpop.f32.mrf.mxu0
    %v1772 = vpop.f32.mrf.mxu0
    %v1773 = vadd.f32 %v1701, %v1772
    %v1774 = vpop.f32.mrf.mxu0
    %1775 = vmatprep.mubr.bf16.mxu0 0
    %1776 = vmatmul.mubr.bf16.gmra.mxu0 %v1684
    %v1777 = vpop.f32.mrf.mxu0
    %v1778 = vadd.f32 %v1701, %v1777
    %v1779 = vpop.f32.mrf.mxu0
    %v1780 = vpop.f32.mrf.mxu0
    %v1781 = vadd.f32 %v1701, %v1780
    %v1782 = vpop.f32.mrf.mxu0
    %1783 = vmatprep.mubr.bf16.mxu0 0
    %1784 = vmatmul.mubr.bf16.gmra.mxu0 %v1685
    %v1785 = vpop.f32.mrf.mxu0
    %v1786 = vadd.f32 %v1701, %v1785
    %v1787 = vpop.f32.mrf.mxu0
    %v1788 = vpop.f32.mrf.mxu0
    %v1789 = vadd.f32 %v1701, %v1788
    %v1790 = vpop.f32.mrf.mxu0
    %1791 = vmatprep.mubr.bf16.mxu0 0
    %1792 = vmatmul.mubr.bf16.gmra.mxu0 %v1686
    %v1793 = vpop.f32.mrf.mxu0
    %v1794 = vadd.f32 %v1701, %v1793
    %v1795 = vpop.f32.mrf.mxu0
    %v1796 = vpop.f32.mrf.mxu0
    %v1797 = vadd.f32 %v1701, %v1796
    %v1798 = vpop.f32.mrf.mxu0
    %1799 = vdwg.mxu0
    %v1800 = vmax.f32 %v1738, 0.0
    %v1801 = vmax.f32 %v1741, 0.0
    %v1802 = vmax.f32 %v1746, 0.0
    %v1803 = vmax.f32 %v1749, 0.0
    %v1804 = vmax.f32 %v1754, 0.0
    %v1805 = vmax.f32 %v1757, 0.0
    %v1806 = vmax.f32 %v1762, 0.0
    %v1807 = vmax.f32 %v1765, 0.0
    %v1808 = vmax.f32 %v1770, 0.0
    %v1809 = vmax.f32 %v1773, 0.0
    %v1810 = vmax.f32 %v1778, 0.0
    %v1811 = vmax.f32 %v1781, 0.0
    %v1812 = vmax.f32 %v1786, 0.0
    %v1813 = vmax.f32 %v1789, 0.0
    %v1814 = vmax.f32 %v1794, 0.0
    %v1815 = vmax.f32 %v1797, 0.0
    %1816 = vadd.xlane.f32.xlu0 %v1800
    %v1817 = vpop.xlane.xlu0 %1816
    %1818 = vadd.xlane.f32.xlu0 %v1801
    %v1819 = vpop.xlane.xlu0 %1818
    %1820 = vadd.xlane.f32.xlu0 %v1802
    %v1821 = vpop.xlane.xlu0 %1820
    %1822 = vadd.xlane.f32.xlu0 %v1803
    %v1823 = vpop.xlane.xlu0 %1822
    %1824 = vadd.xlane.f32.xlu0 %v1804
    %v1825 = vpop.xlane.xlu0 %1824
    %1826 = vadd.xlane.f32.xlu0 %v1805
    %v1827 = vpop.xlane.xlu0 %1826
    %1828 = vadd.xlane.f32.xlu0 %v1806
    %v1829 = vpop.xlane.xlu0 %1828
    %1830 = vadd.xlane.f32.xlu0 %v1807
    %v1831 = vpop.xlane.xlu0 %1830
    %1832 = vadd.xlane.f32.xlu0 %v1808
    %v1833 = vpop.xlane.xlu0 %1832
    %1834 = vadd.xlane.f32.xlu0 %v1809
    %v1835 = vpop.xlane.xlu0 %1834
    %1836 = vadd.xlane.f32.xlu0 %v1810
    %v1837 = vpop.xlane.xlu0 %1836
    %1838 = vadd.xlane.f32.xlu0 %v1811
    %v1839 = vpop.xlane.xlu0 %1838
    %1840 = vadd.xlane.f32.xlu0 %v1812
    %v1841 = vpop.xlane.xlu0 %1840
    %1842 = vadd.xlane.f32.xlu0 %v1813
    %v1843 = vpop.xlane.xlu0 %1842
    %1844 = vadd.xlane.f32.xlu0 %v1814
    %v1845 = vpop.xlane.xlu0 %1844
    %1846 = vadd.xlane.f32.xlu0 %v1815
    %v1847 = vpop.xlane.xlu0 %1846
    %v1848 = vmul.f32 %v1817, 0.03125
    %v1849 = vmul.f32 %v1819, 0.03125
    %v1850 = vmul.f32 %v1821, 0.03125
    %v1851 = vmul.f32 %v1823, 0.03125
    %v1852 = vmul.f32 %v1825, 0.03125
    %v1853 = vmul.f32 %v1827, 0.03125
    %v1854 = vmul.f32 %v1829, 0.03125
    %v1855 = vmul.f32 %v1831, 0.03125
    %v1856 = vmul.f32 %v1833, 0.03125
    %v1857 = vmul.f32 %v1835, 0.03125
    %v1858 = vmul.f32 %v1837, 0.03125
    %v1859 = vmul.f32 %v1839, 0.03125
    %v1860 = vmul.f32 %v1841, 0.03125
    %v1861 = vmul.f32 %v1843, 0.03125
    %v1862 = vmul.f32 %v1845, 0.03125
    %v1863 = vmul.f32 %v1847, 0.03125
    %v1864 = vmul.f32 %v1800, %v1800
    %v1865 = vmul.f32 %v1801, %v1801
    %v1866 = vmul.f32 %v1802, %v1802
    %v1867 = vmul.f32 %v1803, %v1803
    %v1868 = vmul.f32 %v1804, %v1804
    %v1869 = vmul.f32 %v1805, %v1805
    %v1870 = vmul.f32 %v1806, %v1806
    %v1871 = vmul.f32 %v1807, %v1807
    %v1872 = vmul.f32 %v1808, %v1808
    %v1873 = vmul.f32 %v1809, %v1809
    %v1874 = vmul.f32 %v1810, %v1810
    %v1875 = vmul.f32 %v1811, %v1811
    %v1876 = vmul.f32 %v1812, %v1812
    %v1877 = vmul.f32 %v1813, %v1813
    %v1878 = vmul.f32 %v1814, %v1814
    %v1879 = vmul.f32 %v1815, %v1815
    %1880 = vadd.xlane.f32.xlu0 %v1864
    %v1881 = vpop.xlane.xlu0 %1880
    %1882 = vadd.xlane.f32.xlu0 %v1865
    %v1883 = vpop.xlane.xlu0 %1882
    %1884 = vadd.xlane.f32.xlu0 %v1866
    %v1885 = vpop.xlane.xlu0 %1884
    %1886 = vadd.xlane.f32.xlu0 %v1867
    %v1887 = vpop.xlane.xlu0 %1886
    %1888 = vadd.xlane.f32.xlu0 %v1868
    %v1889 = vpop.xlane.xlu0 %1888
    %1890 = vadd.xlane.f32.xlu0 %v1869
    %v1891 = vpop.xlane.xlu0 %1890
    %1892 = vadd.xlane.f32.xlu0 %v1870
    %v1893 = vpop.xlane.xlu0 %1892
    %1894 = vadd.xlane.f32.xlu0 %v1871
    %v1895 = vpop.xlane.xlu0 %1894
    %1896 = vadd.xlane.f32.xlu0 %v1872
    %v1897 = vpop.xlane.xlu0 %1896
    %1898 = vadd.xlane.f32.xlu0 %v1873
    %v1899 = vpop.xlane.xlu0 %1898
    %1900 = vadd.xlane.f32.xlu0 %v1874
    %v1901 = vpop.xlane.xlu0 %1900
    %1902 = vadd.xlane.f32.xlu0 %v1875
    %v1903 = vpop.xlane.xlu0 %1902
    %1904 = vadd.xlane.f32.xlu0 %v1876
    %v1905 = vpop.xlane.xlu0 %1904
    %1906 = vadd.xlane.f32.xlu0 %v1877
    %v1907 = vpop.xlane.xlu0 %1906
    %1908 = vadd.xlane.f32.xlu0 %v1878
    %v1909 = vpop.xlane.xlu0 %1908
    %1910 = vadd.xlane.f32.xlu0 %v1879
    %v1911 = vpop.xlane.xlu0 %1910
    %v1912 = vmul.f32 %v1881, 0.03125
    %v1913 = vmul.f32 %v1883, 0.03125
    %v1914 = vmul.f32 %v1885, 0.03125
    %v1915 = vmul.f32 %v1887, 0.03125
    %v1916 = vmul.f32 %v1889, 0.03125
    %v1917 = vmul.f32 %v1891, 0.03125
    %v1918 = vmul.f32 %v1893, 0.03125
    %v1919 = vmul.f32 %v1895, 0.03125
    %v1920 = vmul.f32 %v1897, 0.03125
    %v1921 = vmul.f32 %v1899, 0.03125
    %v1922 = vmul.f32 %v1901, 0.03125
    %v1923 = vmul.f32 %v1903, 0.03125
    %v1924 = vmul.f32 %v1905, 0.03125
    %v1925 = vmul.f32 %v1907, 0.03125
    %v1926 = vmul.f32 %v1909, 0.03125
    %v1927 = vmul.f32 %v1911, 0.03125
    %v1928 = vmul.f32 %v1848, %v1848
    %v1929 = vmul.f32 %v1849, %v1849
    %v1930 = vmul.f32 %v1850, %v1850
    %v1931 = vmul.f32 %v1851, %v1851
    %v1932 = vmul.f32 %v1852, %v1852
    %v1933 = vmul.f32 %v1853, %v1853
    %v1934 = vmul.f32 %v1854, %v1854
    %v1935 = vmul.f32 %v1855, %v1855
    %v1936 = vmul.f32 %v1856, %v1856
    %v1937 = vmul.f32 %v1857, %v1857
    %v1938 = vmul.f32 %v1858, %v1858
    %v1939 = vmul.f32 %v1859, %v1859
    %v1940 = vmul.f32 %v1860, %v1860
    %v1941 = vmul.f32 %v1861, %v1861
    %v1942 = vmul.f32 %v1862, %v1862
    %v1943 = vmul.f32 %v1863, %v1863
    %v1944 = vsub.f32 %v1912, %v1928
    %v1945 = vsub.f32 %v1913, %v1929
    %v1946 = vsub.f32 %v1914, %v1930
    %v1947 = vsub.f32 %v1915, %v1931
    %v1948 = vsub.f32 %v1916, %v1932
    %v1949 = vsub.f32 %v1917, %v1933
    %v1950 = vsub.f32 %v1918, %v1934
    %v1951 = vsub.f32 %v1919, %v1935
    %v1952 = vsub.f32 %v1920, %v1936
    %v1953 = vsub.f32 %v1921, %v1937
    %v1954 = vsub.f32 %v1922, %v1938
    %v1955 = vsub.f32 %v1923, %v1939
    %v1956 = vsub.f32 %v1924, %v1940
    %v1957 = vsub.f32 %v1925, %v1941
    %v1958 = vsub.f32 %v1926, %v1942
    %v1959 = vsub.f32 %v1927, %v1943
    %v1960 = vmax.f32 %v1944, 0.0
    %v1961 = vmax.f32 %v1945, 0.0
    %v1962 = vmax.f32 %v1946, 0.0
    %v1963 = vmax.f32 %v1947, 0.0
    %v1964 = vmax.f32 %v1948, 0.0
    %v1965 = vmax.f32 %v1949, 0.0
    %v1966 = vmax.f32 %v1950, 0.0
    %v1967 = vmax.f32 %v1951, 0.0
    %v1968 = vmax.f32 %v1952, 0.0
    %v1969 = vmax.f32 %v1953, 0.0
    %v1970 = vmax.f32 %v1954, 0.0
    %v1971 = vmax.f32 %v1955, 0.0
    %v1972 = vmax.f32 %v1956, 0.0
    %v1973 = vmax.f32 %v1957, 0.0
    %v1974 = vmax.f32 %v1958, 0.0
    %v1975 = vmax.f32 %v1959, 0.0
    %v1976 = vsub.f32 %v1800, %v1848
    %v1977 = vsub.f32 %v1801, %v1849
    %v1978 = vsub.f32 %v1802, %v1850
    %v1979 = vsub.f32 %v1803, %v1851
    %v1980 = vsub.f32 %v1804, %v1852
    %v1981 = vsub.f32 %v1805, %v1853
    %v1982 = vsub.f32 %v1806, %v1854
    %v1983 = vsub.f32 %v1807, %v1855
    %v1984 = vsub.f32 %v1808, %v1856
    %v1985 = vsub.f32 %v1809, %v1857
    %v1986 = vsub.f32 %v1810, %v1858
    %v1987 = vsub.f32 %v1811, %v1859
    %v1988 = vsub.f32 %v1812, %v1860
    %v1989 = vsub.f32 %v1813, %v1861
    %v1990 = vsub.f32 %v1814, %v1862
    %v1991 = vsub.f32 %v1815, %v1863
    %v1992 = vadd.f32 %v1960, 1e-05
    %v1993 = vadd.f32 %v1961, 1e-05
    %v1994 = vadd.f32 %v1962, 1e-05
    %v1995 = vadd.f32 %v1963, 1e-05
    %v1996 = vadd.f32 %v1964, 1e-05
    %v1997 = vadd.f32 %v1965, 1e-05
    %v1998 = vadd.f32 %v1966, 1e-05
    %v1999 = vadd.f32 %v1967, 1e-05
    %v2000 = vadd.f32 %v1968, 1e-05
    %v2001 = vadd.f32 %v1969, 1e-05
    %v2002 = vadd.f32 %v1970, 1e-05
    %v2003 = vadd.f32 %v1971, 1e-05
    %v2004 = vadd.f32 %v1972, 1e-05
    %v2005 = vadd.f32 %v1973, 1e-05
    %v2006 = vadd.f32 %v1974, 1e-05
    %v2007 = vadd.f32 %v1975, 1e-05
    %v2008 = vrsqrt.pop %v1992
    %v2009 = vrsqrt.pop %v1993
    %v2010 = vrsqrt.pop %v1994
    %v2011 = vrsqrt.pop %v1995
    %v2012 = vrsqrt.pop %v1996
    %v2013 = vrsqrt.pop %v1997
    %v2014 = vrsqrt.pop %v1998
    %v2015 = vrsqrt.pop %v1999
    %v2016 = vrsqrt.pop %v2000
    %v2017 = vrsqrt.pop %v2001
    %v2018 = vrsqrt.pop %v2002
    %v2019 = vrsqrt.pop %v2003
    %v2020 = vrsqrt.pop %v2004
    %v2021 = vrsqrt.pop %v2005
    %v2022 = vrsqrt.pop %v2006
    %v2023 = vrsqrt.pop %v2007
    %v2024 = vmul.f32 %v1976, %v2008
    %v2025 = vmul.f32 %v1977, %v2009
    %v2026 = vmul.f32 %v1978, %v2010
    %v2027 = vmul.f32 %v1979, %v2011
    %v2028 = vmul.f32 %v1980, %v2012
    %v2029 = vmul.f32 %v1981, %v2013
    %v2030 = vmul.f32 %v1982, %v2014
    %v2031 = vmul.f32 %v1983, %v2015
    %v2032 = vmul.f32 %v1984, %v2016
    %v2033 = vmul.f32 %v1985, %v2017
    %v2034 = vmul.f32 %v1986, %v2018
    %v2035 = vmul.f32 %v1987, %v2019
    %v2036 = vmul.f32 %v1988, %v2020
    %v2037 = vmul.f32 %v1989, %v2021
    %v2038 = vmul.f32 %v1990, %v2022
    %v2039 = vmul.f32 %v1991, %v2023
    %s2040 = scalar_lea.vmem %s9, 1
    %v2041 = vld [vmem:[%s2040] sm:$0x1]
    %v2043 = vlaneseq
    %v2044 = vshrl.u32 %v2043, 7
    %v2045 = vsub.s32 0, %v2044
    %v2046 = vrot.slane %v2041, %v2045
    %v2048 = vmul.f32 %v2024, %v2046
    %v2049 = vmul.f32 %v2025, %v2046
    %v2050 = vmul.f32 %v2026, %v2046
    %v2051 = vmul.f32 %v2027, %v2046
    %v2052 = vmul.f32 %v2028, %v2046
    %v2053 = vmul.f32 %v2029, %v2046
    %v2054 = vmul.f32 %v2030, %v2046
    %v2055 = vmul.f32 %v2031, %v2046
    %v2056 = vmul.f32 %v2032, %v2046
    %v2057 = vmul.f32 %v2033, %v2046
    %v2058 = vmul.f32 %v2034, %v2046
    %v2059 = vmul.f32 %v2035, %v2046
    %v2060 = vmul.f32 %v2036, %v2046
    %v2061 = vmul.f32 %v2037, %v2046
    %v2062 = vmul.f32 %v2038, %v2046
    %v2063 = vmul.f32 %v2039, %v2046
    %s2064 = scalar_lea.vmem %s10, 1
    %v2065 = vld [vmem:[%s2064] sm:$0x1]
    %v2067 = vlaneseq
    %v2068 = vshrl.u32 %v2067, 7
    %v2069 = vsub.s32 0, %v2068
    %v2070 = vrot.slane %v2065, %v2069
    %v2072 = vadd.f32 %v2048, %v2070
    %v2073 = vadd.f32 %v2049, %v2070
    %v2074 = vadd.f32 %v2050, %v2070
    %v2075 = vadd.f32 %v2051, %v2070
    %v2076 = vadd.f32 %v2052, %v2070
    %v2077 = vadd.f32 %v2053, %v2070
    %v2078 = vadd.f32 %v2054, %v2070
    %v2079 = vadd.f32 %v2055, %v2070
    %v2080 = vadd.f32 %v2056, %v2070
    %v2081 = vadd.f32 %v2057, %v2070
    %v2082 = vadd.f32 %v2058, %v2070
    %v2083 = vadd.f32 %v2059, %v2070
    %v2084 = vadd.f32 %v2060, %v2070
    %v2085 = vadd.f32 %v2061, %v2070
    %v2086 = vadd.f32 %v2062, %v2070
    %v2087 = vadd.f32 %v2063, %v2070
    %s2088 = scalar_lea.vmem [#allocation12], 256
    %v2089 = vld [vmem:[%s2088] sm:$0xff]
    %v2090 = vld [vmem:[%s2088 + $0x8] sm:$0xff]
    %v2091 = vld [vmem:[%s2088 + $0x10] sm:$0xff]
    %v2092 = vld [vmem:[%s2088 + $0x18] sm:$0xff]
    %v2093 = vld [vmem:[%s2088 + $0x20] sm:$0xff]
    %v2094 = vld [vmem:[%s2088 + $0x28] sm:$0xff]
    %v2095 = vld [vmem:[%s2088 + $0x30] sm:$0xff]
    %v2096 = vld [vmem:[%s2088 + $0x38] sm:$0xff]
    %v2097 = vld [vmem:[%s2088 + $0x40] sm:$0xff]
    %v2098 = vld [vmem:[%s2088 + $0x48] sm:$0xff]
    %v2099 = vld [vmem:[%s2088 + $0x50] sm:$0xff]
    %v2100 = vld [vmem:[%s2088 + $0x58] sm:$0xff]
    %v2101 = vld [vmem:[%s2088 + $0x60] sm:$0xff]
    %v2102 = vld [vmem:[%s2088 + $0x68] sm:$0xff]
    %v2103 = vld [vmem:[%s2088 + $0x70] sm:$0xff]
    %v2104 = vld [vmem:[%s2088 + $0x78] sm:$0xff]
    %v2105 = vpack.c.bf16 %v2073, %v2072
    %v2106 = vpack.c.bf16 %v2075, %v2074
    %v2107 = vpack.c.bf16 %v2077, %v2076
    %v2108 = vpack.c.bf16 %v2079, %v2078
    %v2109 = vpack.c.bf16 %v2081, %v2080
    %v2110 = vpack.c.bf16 %v2083, %v2082
    %v2111 = vpack.c.bf16 %v2085, %v2084
    %v2112 = vpack.c.bf16 %v2087, %v2086
    %v2113 = vpack.c.bf16 %v2090, %v2089
    %v2114 = vpack.c.bf16 %v2092, %v2091
    %v2115 = vpack.c.bf16 %v2094, %v2093
    %v2116 = vpack.c.bf16 %v2096, %v2095
    %v2117 = vpack.c.bf16 %v2098, %v2097
    %v2118 = vpack.c.bf16 %v2100, %v2099
    %v2119 = vpack.c.bf16 %v2102, %v2101
    %v2120 = vpack.c.bf16 %v2104, %v2103
    %2121 = vmatprep.subr.bf16.mxu0 0
    %2122 = vmatpush1.bf16.msra.mxu0 %v2120
    %2123 = vmatprep.subr.bf16.mxu0 0
    %2124 = vmatpush1.bf16.msra.mxu0 %v2119
    %2125 = vmatprep.subr.bf16.mxu0 0
    %2126 = vmatpush1.bf16.msra.mxu0 %v2118
    %2127 = vmatprep.subr.bf16.mxu0 0
    %2128 = vmatpush1.bf16.msra.mxu0 %v2117
    %2129 = vmatprep.subr.bf16.mxu0 0
    %2130 = vmatpush1.bf16.msra.mxu0 %v2116
    %2131 = vmatprep.subr.bf16.mxu0 0
    %2132 = vmatpush1.bf16.msra.mxu0 %v2115
    %2133 = vmatprep.subr.bf16.mxu0 0
    %2134 = vmatpush1.bf16.msra.mxu0 %v2114
    %2135 = vmatprep.subr.bf16.mxu0 0
    %2136 = vmatpush1.bf16.msra.mxu0 %v2113
    %2137 = vmatprep.subr.bf16.mxu0 0
    %2138 = vmatpush2.bf16.msra.mxu0 0
    %2139 = vmatprep.subr.bf16.mxu0 0
    %2140 = vmatpush2.bf16.msra.mxu0 0
    %2141 = vmatprep.subr.bf16.mxu0 0
    %2142 = vmatpush2.bf16.msra.mxu0 0
    %2143 = vmatprep.subr.bf16.mxu0 0
    %2144 = vmatpush2.bf16.msra.mxu0 0
    %2145 = vmatprep.subr.bf16.mxu0 0
    %2146 = vmatpush2.bf16.msra.mxu0 0
    %2147 = vmatprep.subr.bf16.mxu0 0
    %2148 = vmatpush2.bf16.msra.mxu0 0
    %2149 = vmatprep.subr.bf16.mxu0 0
    %2150 = vmatpush2.bf16.msra.mxu0 0
    %2151 = vmatprep.subr.bf16.mxu0 0
    %2152 = vmatpush2.bf16.msra.mxu0 0
    %2153 = vmatprep.mubr.bf16.mxu0 0
    %2154 = vmatmul.mubr.bf16.gmra.mxu0 %v2105
    %v2155 = vpop.f32.mrf.mxu0
    %v2156 = vadd.f32 0.0, %v2155
    %v2157 = vpop.f32.mrf.mxu0
    %v2158 = vpop.f32.mrf.mxu0
    %v2159 = vadd.f32 0.0, %v2158
    %v2160 = vpop.f32.mrf.mxu0
    %2161 = vmatprep.mubr.bf16.mxu0 0
    %2162 = vmatmul.mubr.bf16.gmra.mxu0 %v2106
    %v2163 = vpop.f32.mrf.mxu0
    %v2164 = vadd.f32 0.0, %v2163
    %v2165 = vpop.f32.mrf.mxu0
    %v2166 = vpop.f32.mrf.mxu0
    %v2167 = vadd.f32 0.0, %v2166
    %v2168 = vpop.f32.mrf.mxu0
    %2169 = vmatprep.mubr.bf16.mxu0 0
    %2170 = vmatmul.mubr.bf16.gmra.mxu0 %v2107
    %v2171 = vpop.f32.mrf.mxu0
    %v2172 = vadd.f32 0.0, %v2171
    %v2173 = vpop.f32.mrf.mxu0
    %v2174 = vpop.f32.mrf.mxu0
    %v2175 = vadd.f32 0.0, %v2174
    %v2176 = vpop.f32.mrf.mxu0
    %2177 = vmatprep.mubr.bf16.mxu0 0
    %2178 = vmatmul.mubr.bf16.gmra.mxu0 %v2108
    %v2179 = vpop.f32.mrf.mxu0
    %v2180 = vadd.f32 0.0, %v2179
    %v2181 = vpop.f32.mrf.mxu0
    %v2182 = vpop.f32.mrf.mxu0
    %v2183 = vadd.f32 0.0, %v2182
    %v2184 = vpop.f32.mrf.mxu0
    %2185 = vmatprep.mubr.bf16.mxu0 0
    %2186 = vmatmul.mubr.bf16.gmra.mxu0 %v2109
    %v2187 = vpop.f32.mrf.mxu0
    %v2188 = vadd.f32 0.0, %v2187
    %v2189 = vpop.f32.mrf.mxu0
    %v2190 = vpop.f32.mrf.mxu0
    %v2191 = vadd.f32 0.0, %v2190
    %v2192 = vpop.f32.mrf.mxu0
    %2193 = vmatprep.mubr.bf16.mxu0 0
    %2194 = vmatmul.mubr.bf16.gmra.mxu0 %v2110
    %v2195 = vpop.f32.mrf.mxu0
    %v2196 = vadd.f32 0.0, %v2195
    %v2197 = vpop.f32.mrf.mxu0
    %v2198 = vpop.f32.mrf.mxu0
    %v2199 = vadd.f32 0.0, %v2198
    %v2200 = vpop.f32.mrf.mxu0
    %2201 = vmatprep.mubr.bf16.mxu0 0
    %2202 = vmatmul.mubr.bf16.gmra.mxu0 %v2111
    %v2203 = vpop.f32.mrf.mxu0
    %v2204 = vadd.f32 0.0, %v2203
    %v2205 = vpop.f32.mrf.mxu0
    %v2206 = vpop.f32.mrf.mxu0
    %v2207 = vadd.f32 0.0, %v2206
    %v2208 = vpop.f32.mrf.mxu0
    %2209 = vmatprep.mubr.bf16.mxu0 0
    %2210 = vmatmul.mubr.bf16.gmra.mxu0 %v2112
    %v2211 = vpop.f32.mrf.mxu0
    %v2212 = vadd.f32 0.0, %v2211
    %v2213 = vpop.f32.mrf.mxu0
    %v2214 = vpop.f32.mrf.mxu0
    %v2215 = vadd.f32 0.0, %v2214
    %v2216 = vpop.f32.mrf.mxu0
    %2217 = vdwg.mxu0
    %s2218 = scalar_lea.vmem %s7, 2
    %v2219 = vld [vmem:[%s2218] sm:$0x1]
    %v2221 = vlaneseq
    %v2222 = vshrl.u32 %v2221, 7
    %v2223 = vsub.s32 0, %v2222
    %v2224 = vrot.slane %v2219, %v2223
    %v2226 = vmul.f32 %v2156, %v2224
    %v2227 = vmul.f32 %v2159, %v2224
    %v2228 = vmul.f32 %v2164, %v2224
    %v2229 = vmul.f32 %v2167, %v2224
    %v2230 = vmul.f32 %v2172, %v2224
    %v2231 = vmul.f32 %v2175, %v2224
    %v2232 = vmul.f32 %v2180, %v2224
    %v2233 = vmul.f32 %v2183, %v2224
    %v2234 = vmul.f32 %v2188, %v2224
    %v2235 = vmul.f32 %v2191, %v2224
    %v2236 = vmul.f32 %v2196, %v2224
    %v2237 = vmul.f32 %v2199, %v2224
    %v2238 = vmul.f32 %v2204, %v2224
    %v2239 = vmul.f32 %v2207, %v2224
    %v2240 = vmul.f32 %v2212, %v2224
    %v2241 = vmul.f32 %v2215, %v2224
    %2242 = vadd.xlane.f32.xlu0 %v2226
    %v2243 = vpop.xlane.xlu0 %2242
    %2244 = vadd.xlane.f32.xlu0 %v2227
    %v2245 = vpop.xlane.xlu0 %2244
    %2246 = vadd.xlane.f32.xlu0 %v2228
    %v2247 = vpop.xlane.xlu0 %2246
    %2248 = vadd.xlane.f32.xlu0 %v2229
    %v2249 = vpop.xlane.xlu0 %2248
    %2250 = vadd.xlane.f32.xlu0 %v2230
    %v2251 = vpop.xlane.xlu0 %2250
    %2252 = vadd.xlane.f32.xlu0 %v2231
    %v2253 = vpop.xlane.xlu0 %2252
    %2254 = vadd.xlane.f32.xlu0 %v2232
    %v2255 = vpop.xlane.xlu0 %2254
    %2256 = vadd.xlane.f32.xlu0 %v2233
    %v2257 = vpop.xlane.xlu0 %2256
    %2258 = vadd.xlane.f32.xlu0 %v2234
    %v2259 = vpop.xlane.xlu0 %2258
    %2260 = vadd.xlane.f32.xlu0 %v2235
    %v2261 = vpop.xlane.xlu0 %2260
    %2262 = vadd.xlane.f32.xlu0 %v2236
    %v2263 = vpop.xlane.xlu0 %2262
    %2264 = vadd.xlane.f32.xlu0 %v2237
    %v2265 = vpop.xlane.xlu0 %2264
    %2266 = vadd.xlane.f32.xlu0 %v2238
    %v2267 = vpop.xlane.xlu0 %2266
    %2268 = vadd.xlane.f32.xlu0 %v2239
    %v2269 = vpop.xlane.xlu0 %2268
    %2270 = vadd.xlane.f32.xlu0 %v2240
    %v2271 = vpop.xlane.xlu0 %2270
    %2272 = vadd.xlane.f32.xlu0 %v2241
    %v2273 = vpop.xlane.xlu0 %2272
    %s2274 = scalar_lea.vmem %s6, 2
    %v2275 = vld [vmem:[%s2274] sm:$0x1]
    %2276 = vmatprep.subr.mxu0 0.0
    %2277 = vmatpush1.xpose.msra.mxu0 %v2215
    %2278 = vmatprep.subr.mxu0 0.0
    %2279 = vmatpush1.xpose.msra.mxu0 %v2212
    %2280 = vmatprep.subr.mxu0 0.0
    %2281 = vmatpush1.xpose.msra.mxu0 %v2207
    %2282 = vmatprep.subr.mxu0 0.0
    %2283 = vmatpush1.xpose.msra.mxu0 %v2204
    %2284 = vmatprep.subr.mxu0 0.0
    %2285 = vmatpush1.xpose.msra.mxu0 %v2199
    %2286 = vmatprep.subr.mxu0 0.0
    %2287 = vmatpush1.xpose.msra.mxu0 %v2196
    %2288 = vmatprep.subr.mxu0 0.0
    %2289 = vmatpush1.xpose.msra.mxu0 %v2191
    %2290 = vmatprep.subr.mxu0 0.0
    %2291 = vmatpush1.xpose.msra.mxu0 %v2188
    %2292 = vmatprep.subr.mxu0 0.0
    %2293 = vmatpush1.xpose.msra.mxu0 %v2183
    %2294 = vmatprep.subr.mxu0 0.0
    %2295 = vmatpush1.xpose.msra.mxu0 %v2180
    %2296 = vmatprep.subr.mxu0 0.0
    %2297 = vmatpush1.xpose.msra.mxu0 %v2175
    %2298 = vmatprep.subr.mxu0 0.0
    %2299 = vmatpush1.xpose.msra.mxu0 %v2172
    %2300 = vmatprep.subr.mxu0 0.0
    %2301 = vmatpush1.xpose.msra.mxu0 %v2167
    %2302 = vmatprep.subr.mxu0 0.0
    %2303 = vmatpush1.xpose.msra.mxu0 %v2164
    %2304 = vmatprep.subr.mxu0 0.0
    %2305 = vmatpush1.xpose.msra.mxu0 %v2159
    %2306 = vmatprep.subr.mxu0 0.0
    %2307 = vmatpush1.xpose.msra.mxu0 %v2156
    %2308 = vmatprep.subr.mxu0 0.0
    %2309 = vmatpush2.xpose.msra.mxu0 0.0
    %2310 = vmatprep.subr.mxu0 0.0
    %2311 = vmatpush2.xpose.msra.mxu0 0.0
    %2312 = vmatprep.subr.mxu0 0.0
    %2313 = vmatpush2.xpose.msra.mxu0 0.0
    %2314 = vmatprep.subr.mxu0 0.0
    %2315 = vmatpush2.xpose.msra.mxu0 0.0
    %2316 = vmatprep.subr.mxu0 0.0
    %2317 = vmatpush2.xpose.msra.mxu0 0.0
    %2318 = vmatprep.subr.mxu0 0.0
    %2319 = vmatpush2.xpose.msra.mxu0 0.0
    %2320 = vmatprep.subr.mxu0 0.0
    %2321 = vmatpush2.xpose.msra.mxu0 0.0
    %2322 = vmatprep.subr.mxu0 0.0
    %2323 = vmatpush2.xpose.msra.mxu0 0.0
    %2324 = vmatprep.subr.mxu0 0.0
    %2325 = vmatpush2.xpose.msra.mxu0 0.0
    %2326 = vmatprep.subr.mxu0 0.0
    %2327 = vmatpush2.xpose.msra.mxu0 0.0
    %2328 = vmatprep.subr.mxu0 0.0
    %2329 = vmatpush2.xpose.msra.mxu0 0.0
    %2330 = vmatprep.subr.mxu0 0.0
    %2331 = vmatpush2.xpose.msra.mxu0 0.0
    %2332 = vmatprep.subr.mxu0 0.0
    %2333 = vmatpush2.xpose.msra.mxu0 0.0
    %2334 = vmatprep.subr.mxu0 0.0
    %2335 = vmatpush2.xpose.msra.mxu0 0.0
    %2336 = vmatprep.subr.mxu0 0.0
    %2337 = vmatpush2.xpose.msra.mxu0 0.0
    %2338 = vmatprep.subr.mxu0 0.0
    %2339 = vmatpush2.xpose.msra.mxu0 0.0
    %2340 = vmatprep.mubr.f32.mxu0 0.0
    %2341 = vmatmul.mubr.f32.gmra.mxu0 %v2275
    %v2342 = vpop.f32.mrf.mxu0
    %v2343 = vadd.f32 0.0, %v2342
    %v2344 = vpop.f32.mrf.mxu0
    %2345 = vdwg.mxu0
    %v2346 = vlaneseq
    %v2347 = vshrl.u32 %v2346, 7
    %v2348 = vsub.s32 0, %v2347
    %v2349 = vrot.slane %v2343, %v2348
    %v2350 = vadd.f32 %v2243, %v2349
    %v2351 = vadd.f32 %v2245, %v2349
    %v2352 = vadd.f32 %v2247, %v2349
    %v2353 = vadd.f32 %v2249, %v2349
    %v2354 = vadd.f32 %v2251, %v2349
    %v2355 = vadd.f32 %v2253, %v2349
    %v2356 = vadd.f32 %v2255, %v2349
    %v2357 = vadd.f32 %v2257, %v2349
    %v2358 = vadd.f32 %v2259, %v2349
    %v2359 = vadd.f32 %v2261, %v2349
    %v2360 = vadd.f32 %v2263, %v2349
    %v2361 = vadd.f32 %v2265, %v2349
    %v2362 = vadd.f32 %v2267, %v2349
    %v2363 = vadd.f32 %v2269, %v2349
    %v2364 = vadd.f32 %v2271, %v2349
    %v2365 = vadd.f32 %v2273, %v2349
    %s2366 = sld [smem:[#allocation2 + $0x2]]
    %v2367 = vstv %s2366
    %v2368 = vmul.f32 %v2367, %v172
    %v2369 = vmul.f32 %v2367, %v173
    %v2370 = vmul.f32 %v2367, %v174
    %v2371 = vmul.f32 %v2367, %v175
    %v2372 = vmul.f32 %v2367, %v176
    %v2373 = vmul.f32 %v2367, %v177
    %v2374 = vmul.f32 %v2367, %v178
    %v2375 = vmul.f32 %v2367, %v179
    %v2376 = vmul.f32 %v2367, %v180
    %v2377 = vmul.f32 %v2367, %v181
    %v2378 = vmul.f32 %v2367, %v182
    %v2379 = vmul.f32 %v2367, %v183
    %v2380 = vmul.f32 %v2367, %v184
    %v2381 = vmul.f32 %v2367, %v185
    %v2382 = vmul.f32 %v2367, %v186
    %v2383 = vmul.f32 %v2367, %v187
    %v2384 = vadd.f32 %v2350, %v2368
    %v2385 = vadd.f32 %v2351, %v2369
    %v2386 = vadd.f32 %v2352, %v2370
    %v2387 = vadd.f32 %v2353, %v2371
    %v2388 = vadd.f32 %v2354, %v2372
    %v2389 = vadd.f32 %v2355, %v2373
    %v2390 = vadd.f32 %v2356, %v2374
    %v2391 = vadd.f32 %v2357, %v2375
    %v2392 = vadd.f32 %v2358, %v2376
    %v2393 = vadd.f32 %v2359, %v2377
    %v2394 = vadd.f32 %v2360, %v2378
    %v2395 = vadd.f32 %v2361, %v2379
    %v2396 = vadd.f32 %v2362, %v2380
    %v2397 = vadd.f32 %v2363, %v2381
    %v2398 = vadd.f32 %v2364, %v2382
    %v2399 = vadd.f32 %v2365, %v2383
    %vm2400 = vcmp.gt.f32.partialorder %v2384, 0.0
    %vm2401 = vcmp.gt.f32.partialorder %v2385, 0.0
    %vm2402 = vcmp.gt.f32.partialorder %v2386, 0.0
    %vm2403 = vcmp.gt.f32.partialorder %v2387, 0.0
    %vm2404 = vcmp.gt.f32.partialorder %v2388, 0.0
    %vm2405 = vcmp.gt.f32.partialorder %v2389, 0.0
    %vm2406 = vcmp.gt.f32.partialorder %v2390, 0.0
    %vm2407 = vcmp.gt.f32.partialorder %v2391, 0.0
    %vm2408 = vcmp.gt.f32.partialorder %v2392, 0.0
    %vm2409 = vcmp.gt.f32.partialorder %v2393, 0.0
    %vm2410 = vcmp.gt.f32.partialorder %v2394, 0.0
    %vm2411 = vcmp.gt.f32.partialorder %v2395, 0.0
    %vm2412 = vcmp.gt.f32.partialorder %v2396, 0.0
    %vm2413 = vcmp.gt.f32.partialorder %v2397, 0.0
    %vm2414 = vcmp.gt.f32.partialorder %v2398, 0.0
    %vm2415 = vcmp.gt.f32.partialorder %v2399, 0.0
    %v2416 = vmul.f32 %v2384, 0.2
    %v2417 = vmul.f32 %v2385, 0.2
    %v2418 = vmul.f32 %v2386, 0.2
    %v2419 = vmul.f32 %v2387, 0.2
    %v2420 = vmul.f32 %v2388, 0.2
    %v2421 = vmul.f32 %v2389, 0.2
    %v2422 = vmul.f32 %v2390, 0.2
    %v2423 = vmul.f32 %v2391, 0.2
    %v2424 = vmul.f32 %v2392, 0.2
    %v2425 = vmul.f32 %v2393, 0.2
    %v2426 = vmul.f32 %v2394, 0.2
    %v2427 = vmul.f32 %v2395, 0.2
    %v2428 = vmul.f32 %v2396, 0.2
    %v2429 = vmul.f32 %v2397, 0.2
    %v2430 = vmul.f32 %v2398, 0.2
    %v2431 = vmul.f32 %v2399, 0.2
    %v2432 = vsel %vm2400, %v2384, %v2416
    %v2433 = vsel %vm2401, %v2385, %v2417
    %v2434 = vsel %vm2402, %v2386, %v2418
    %v2435 = vsel %vm2403, %v2387, %v2419
    %v2436 = vsel %vm2404, %v2388, %v2420
    %v2437 = vsel %vm2405, %v2389, %v2421
    %v2438 = vsel %vm2406, %v2390, %v2422
    %v2439 = vsel %vm2407, %v2391, %v2423
    %v2440 = vsel %vm2408, %v2392, %v2424
    %v2441 = vsel %vm2409, %v2393, %v2425
    %v2442 = vsel %vm2410, %v2394, %v2426
    %v2443 = vsel %vm2411, %v2395, %v2427
    %v2444 = vsel %vm2412, %v2396, %v2428
    %v2445 = vsel %vm2413, %v2397, %v2429
    %v2446 = vsel %vm2414, %v2398, %v2430
    %v2447 = vsel %vm2415, %v2399, %v2431
    %v2448 = vadd.f32 %v2432, %v204
    %v2449 = vadd.f32 %v2433, %v205
    %v2450 = vadd.f32 %v2434, %v206
    %v2451 = vadd.f32 %v2435, %v207
    %v2452 = vadd.f32 %v2436, %v208
    %v2453 = vadd.f32 %v2437, %v209
    %v2454 = vadd.f32 %v2438, %v210
    %v2455 = vadd.f32 %v2439, %v211
    %v2456 = vadd.f32 %v2440, %v212
    %v2457 = vadd.f32 %v2441, %v213
    %v2458 = vadd.f32 %v2442, %v214
    %v2459 = vadd.f32 %v2443, %v215
    %v2460 = vadd.f32 %v2444, %v216
    %v2461 = vadd.f32 %v2445, %v217
    %v2462 = vadd.f32 %v2446, %v218
    %v2463 = vadd.f32 %v2447, %v219
    %2464 = vmax.xlane.f32.xlu0 %v2448
    %v2465 = vpop.xlane.xlu0 %2464
    %2466 = vmax.xlane.f32.xlu0 %v2449
    %v2467 = vpop.xlane.xlu0 %2466
    %2468 = vmax.xlane.f32.xlu0 %v2450
    %v2469 = vpop.xlane.xlu0 %2468
    %2470 = vmax.xlane.f32.xlu0 %v2451
    %v2471 = vpop.xlane.xlu0 %2470
    %2472 = vmax.xlane.f32.xlu0 %v2452
    %v2473 = vpop.xlane.xlu0 %2472
    %2474 = vmax.xlane.f32.xlu0 %v2453
    %v2475 = vpop.xlane.xlu0 %2474
    %2476 = vmax.xlane.f32.xlu0 %v2454
    %v2477 = vpop.xlane.xlu0 %2476
    %2478 = vmax.xlane.f32.xlu0 %v2455
    %v2479 = vpop.xlane.xlu0 %2478
    %2480 = vmax.xlane.f32.xlu0 %v2456
    %v2481 = vpop.xlane.xlu0 %2480
    %2482 = vmax.xlane.f32.xlu0 %v2457
    %v2483 = vpop.xlane.xlu0 %2482
    %2484 = vmax.xlane.f32.xlu0 %v2458
    %v2485 = vpop.xlane.xlu0 %2484
    %2486 = vmax.xlane.f32.xlu0 %v2459
    %v2487 = vpop.xlane.xlu0 %2486
    %2488 = vmax.xlane.f32.xlu0 %v2460
    %v2489 = vpop.xlane.xlu0 %2488
    %2490 = vmax.xlane.f32.xlu0 %v2461
    %v2491 = vpop.xlane.xlu0 %2490
    %2492 = vmax.xlane.f32.xlu0 %v2462
    %v2493 = vpop.xlane.xlu0 %2492
    %2494 = vmax.xlane.f32.xlu0 %v2463
    %v2495 = vpop.xlane.xlu0 %2494
    %v2496 = vsub.f32 %v2448, %v2465
    %v2497 = vsub.f32 %v2449, %v2467
    %v2498 = vsub.f32 %v2450, %v2469
    %v2499 = vsub.f32 %v2451, %v2471
    %v2500 = vsub.f32 %v2452, %v2473
    %v2501 = vsub.f32 %v2453, %v2475
    %v2502 = vsub.f32 %v2454, %v2477
    %v2503 = vsub.f32 %v2455, %v2479
    %v2504 = vsub.f32 %v2456, %v2481
    %v2505 = vsub.f32 %v2457, %v2483
    %v2506 = vsub.f32 %v2458, %v2485
    %v2507 = vsub.f32 %v2459, %v2487
    %v2508 = vsub.f32 %v2460, %v2489
    %v2509 = vsub.f32 %v2461, %v2491
    %v2510 = vsub.f32 %v2462, %v2493
    %v2511 = vsub.f32 %v2463, %v2495
    %v2512 = vmul.f32 %v2496, 1.442695
    %v2513 = vpow.pop %v2512
    %v2514 = vmul.f32 %v2497, 1.442695
    %v2515 = vpow.pop %v2514
    %v2516 = vmul.f32 %v2498, 1.442695
    %v2517 = vpow.pop %v2516
    %v2518 = vmul.f32 %v2499, 1.442695
    %v2519 = vpow.pop %v2518
    %v2520 = vmul.f32 %v2500, 1.442695
    %v2521 = vpow.pop %v2520
    %v2522 = vmul.f32 %v2501, 1.442695
    %v2523 = vpow.pop %v2522
    %v2524 = vmul.f32 %v2502, 1.442695
    %v2525 = vpow.pop %v2524
    %v2526 = vmul.f32 %v2503, 1.442695
    %v2527 = vpow.pop %v2526
    %v2528 = vmul.f32 %v2504, 1.442695
    %v2529 = vpow.pop %v2528
    %v2530 = vmul.f32 %v2505, 1.442695
    %v2531 = vpow.pop %v2530
    %v2532 = vmul.f32 %v2506, 1.442695
    %v2533 = vpow.pop %v2532
    %v2534 = vmul.f32 %v2507, 1.442695
    %v2535 = vpow.pop %v2534
    %v2536 = vmul.f32 %v2508, 1.442695
    %v2537 = vpow.pop %v2536
    %v2538 = vmul.f32 %v2509, 1.442695
    %v2539 = vpow.pop %v2538
    %v2540 = vmul.f32 %v2510, 1.442695
    %v2541 = vpow.pop %v2540
    %v2542 = vmul.f32 %v2511, 1.442695
    %v2543 = vpow.pop %v2542
    %2544 = vadd.xlane.f32.xlu0 %v2513
    %v2545 = vpop.xlane.xlu0 %2544
    %2546 = vadd.xlane.f32.xlu0 %v2515
    %v2547 = vpop.xlane.xlu0 %2546
    %2548 = vadd.xlane.f32.xlu0 %v2517
    %v2549 = vpop.xlane.xlu0 %2548
    %2550 = vadd.xlane.f32.xlu0 %v2519
    %v2551 = vpop.xlane.xlu0 %2550
    %2552 = vadd.xlane.f32.xlu0 %v2521
    %v2553 = vpop.xlane.xlu0 %2552
    %2554 = vadd.xlane.f32.xlu0 %v2523
    %v2555 = vpop.xlane.xlu0 %2554
    %2556 = vadd.xlane.f32.xlu0 %v2525
    %v2557 = vpop.xlane.xlu0 %2556
    %2558 = vadd.xlane.f32.xlu0 %v2527
    %v2559 = vpop.xlane.xlu0 %2558
    %2560 = vadd.xlane.f32.xlu0 %v2529
    %v2561 = vpop.xlane.xlu0 %2560
    %2562 = vadd.xlane.f32.xlu0 %v2531
    %v2563 = vpop.xlane.xlu0 %2562
    %2564 = vadd.xlane.f32.xlu0 %v2533
    %v2565 = vpop.xlane.xlu0 %2564
    %2566 = vadd.xlane.f32.xlu0 %v2535
    %v2567 = vpop.xlane.xlu0 %2566
    %2568 = vadd.xlane.f32.xlu0 %v2537
    %v2569 = vpop.xlane.xlu0 %2568
    %2570 = vadd.xlane.f32.xlu0 %v2539
    %v2571 = vpop.xlane.xlu0 %2570
    %2572 = vadd.xlane.f32.xlu0 %v2541
    %v2573 = vpop.xlane.xlu0 %2572
    %2574 = vadd.xlane.f32.xlu0 %v2543
    %v2575 = vpop.xlane.xlu0 %2574
    %v2576 = vrcp.pop %v2545
    %v2577 = vrcp.pop %v2547
    %v2578 = vrcp.pop %v2549
    %v2579 = vrcp.pop %v2551
    %v2580 = vrcp.pop %v2553
    %v2581 = vrcp.pop %v2555
    %v2582 = vrcp.pop %v2557
    %v2583 = vrcp.pop %v2559
    %v2584 = vrcp.pop %v2561
    %v2585 = vrcp.pop %v2563
    %v2586 = vrcp.pop %v2565
    %v2587 = vrcp.pop %v2567
    %v2588 = vrcp.pop %v2569
    %v2589 = vrcp.pop %v2571
    %v2590 = vrcp.pop %v2573
    %v2591 = vrcp.pop %v2575
    %v2592 = vmul.f32 %v2513, %v2576
    %v2593 = vmul.f32 %v2515, %v2577
    %v2594 = vmul.f32 %v2517, %v2578
    %v2595 = vmul.f32 %v2519, %v2579
    %v2596 = vmul.f32 %v2521, %v2580
    %v2597 = vmul.f32 %v2523, %v2581
    %v2598 = vmul.f32 %v2525, %v2582
    %v2599 = vmul.f32 %v2527, %v2583
    %v2600 = vmul.f32 %v2529, %v2584
    %v2601 = vmul.f32 %v2531, %v2585
    %v2602 = vmul.f32 %v2533, %v2586
    %v2603 = vmul.f32 %v2535, %v2587
    %v2604 = vmul.f32 %v2537, %v2588
    %v2605 = vmul.f32 %v2539, %v2589
    %v2606 = vmul.f32 %v2541, %v2590
    %v2607 = vmul.f32 %v2543, %v2591
    %v2608 = vpack.c.bf16 %v2593, %v2592
    %v2609 = vpack.c.bf16 %v2595, %v2594
    %v2610 = vpack.c.bf16 %v2597, %v2596
    %v2611 = vpack.c.bf16 %v2599, %v2598
    %v2612 = vpack.c.bf16 %v2601, %v2600
    %v2613 = vpack.c.bf16 %v2603, %v2602
    %v2614 = vpack.c.bf16 %v2605, %v2604
    %v2615 = vpack.c.bf16 %v2607, %v2606
    %v2616 = vpack.c.bf16 %v2159, %v2156
    %v2617 = vpack.c.bf16 %v2167, %v2164
    %v2618 = vpack.c.bf16 %v2175, %v2172
    %v2619 = vpack.c.bf16 %v2183, %v2180
    %v2620 = vpack.c.bf16 %v2191, %v2188
    %v2621 = vpack.c.bf16 %v2199, %v2196
    %v2622 = vpack.c.bf16 %v2207, %v2204
    %v2623 = vpack.c.bf16 %v2215, %v2212
    %s2624 = scalar_lea.vmem %s8, 2
    %v2625 = vld [vmem:[%s2624] sm:$0x1]
    %v2627 = vlaneseq
    %v2628 = vshrl.u32 %v2627, 7
    %v2629 = vsub.s32 0, %v2628
    %v2630 = vrot.slane %v2625, %v2629
    %2632 = vmatprep.subr.bf16.mxu0 0
    %2633 = vmatpush1.bf16.msra.mxu0 %v2623
    %2634 = vmatprep.subr.bf16.mxu0 0
    %2635 = vmatpush1.bf16.msra.mxu0 %v2622
    %2636 = vmatprep.subr.bf16.mxu0 0
    %2637 = vmatpush1.bf16.msra.mxu0 %v2621
    %2638 = vmatprep.subr.bf16.mxu0 0
    %2639 = vmatpush1.bf16.msra.mxu0 %v2620
    %2640 = vmatprep.subr.bf16.mxu0 0
    %2641 = vmatpush1.bf16.msra.mxu0 %v2619
    %2642 = vmatprep.subr.bf16.mxu0 0
    %2643 = vmatpush1.bf16.msra.mxu0 %v2618
    %2644 = vmatprep.subr.bf16.mxu0 0
    %2645 = vmatpush1.bf16.msra.mxu0 %v2617
    %2646 = vmatprep.subr.bf16.mxu0 0
    %2647 = vmatpush1.bf16.msra.mxu0 %v2616
    %2648 = vmatprep.subr.bf16.mxu0 0
    %2649 = vmatpush2.bf16.msra.mxu0 0
    %2650 = vmatprep.subr.bf16.mxu0 0
    %2651 = vmatpush2.bf16.msra.mxu0 0
    %2652 = vmatprep.subr.bf16.mxu0 0
    %2653 = vmatpush2.bf16.msra.mxu0 0
    %2654 = vmatprep.subr.bf16.mxu0 0
    %2655 = vmatpush2.bf16.msra.mxu0 0
    %2656 = vmatprep.subr.bf16.mxu0 0
    %2657 = vmatpush2.bf16.msra.mxu0 0
    %2658 = vmatprep.subr.bf16.mxu0 0
    %2659 = vmatpush2.bf16.msra.mxu0 0
    %2660 = vmatprep.subr.bf16.mxu0 0
    %2661 = vmatpush2.bf16.msra.mxu0 0
    %2662 = vmatprep.subr.bf16.mxu0 0
    %2663 = vmatpush2.bf16.msra.mxu0 0
    %2664 = vmatprep.mubr.bf16.mxu0 0
    %2665 = vmatmul.mubr.bf16.gmra.mxu0 %v2608
    %v2666 = vpop.f32.mrf.mxu0
    %v2667 = vadd.f32 %v2630, %v2666
    %v2668 = vpop.f32.mrf.mxu0
    %v2669 = vpop.f32.mrf.mxu0
    %v2670 = vadd.f32 %v2630, %v2669
    %v2671 = vpop.f32.mrf.mxu0
    %2672 = vmatprep.mubr.bf16.mxu0 0
    %2673 = vmatmul.mubr.bf16.gmra.mxu0 %v2609
    %v2674 = vpop.f32.mrf.mxu0
    %v2675 = vadd.f32 %v2630, %v2674
    %v2676 = vpop.f32.mrf.mxu0
    %v2677 = vpop.f32.mrf.mxu0
    %v2678 = vadd.f32 %v2630, %v2677
    %v2679 = vpop.f32.mrf.mxu0
    %2680 = vmatprep.mubr.bf16.mxu0 0
    %2681 = vmatmul.mubr.bf16.gmra.mxu0 %v2610
    %v2682 = vpop.f32.mrf.mxu0
    %v2683 = vadd.f32 %v2630, %v2682
    %v2684 = vpop.f32.mrf.mxu0
    %v2685 = vpop.f32.mrf.mxu0
    %v2686 = vadd.f32 %v2630, %v2685
    %v2687 = vpop.f32.mrf.mxu0
    %2688 = vmatprep.mubr.bf16.mxu0 0
    %2689 = vmatmul.mubr.bf16.gmra.mxu0 %v2611
    %v2690 = vpop.f32.mrf.mxu0
    %v2691 = vadd.f32 %v2630, %v2690
    %v2692 = vpop.f32.mrf.mxu0
    %v2693 = vpop.f32.mrf.mxu0
    %v2694 = vadd.f32 %v2630, %v2693
    %v2695 = vpop.f32.mrf.mxu0
    %2696 = vmatprep.mubr.bf16.mxu0 0
    %2697 = vmatmul.mubr.bf16.gmra.mxu0 %v2612
    %v2698 = vpop.f32.mrf.mxu0
    %v2699 = vadd.f32 %v2630, %v2698
    %v2700 = vpop.f32.mrf.mxu0
    %v2701 = vpop.f32.mrf.mxu0
    %v2702 = vadd.f32 %v2630, %v2701
    %v2703 = vpop.f32.mrf.mxu0
    %2704 = vmatprep.mubr.bf16.mxu0 0
    %2705 = vmatmul.mubr.bf16.gmra.mxu0 %v2613
    %v2706 = vpop.f32.mrf.mxu0
    %v2707 = vadd.f32 %v2630, %v2706
    %v2708 = vpop.f32.mrf.mxu0
    %v2709 = vpop.f32.mrf.mxu0
    %v2710 = vadd.f32 %v2630, %v2709
    %v2711 = vpop.f32.mrf.mxu0
    %2712 = vmatprep.mubr.bf16.mxu0 0
    %2713 = vmatmul.mubr.bf16.gmra.mxu0 %v2614
    %v2714 = vpop.f32.mrf.mxu0
    %v2715 = vadd.f32 %v2630, %v2714
    %v2716 = vpop.f32.mrf.mxu0
    %v2717 = vpop.f32.mrf.mxu0
    %v2718 = vadd.f32 %v2630, %v2717
    %v2719 = vpop.f32.mrf.mxu0
    %2720 = vmatprep.mubr.bf16.mxu0 0
    %2721 = vmatmul.mubr.bf16.gmra.mxu0 %v2615
    %v2722 = vpop.f32.mrf.mxu0
    %v2723 = vadd.f32 %v2630, %v2722
    %v2724 = vpop.f32.mrf.mxu0
    %v2725 = vpop.f32.mrf.mxu0
    %v2726 = vadd.f32 %v2630, %v2725
    %v2727 = vpop.f32.mrf.mxu0
    %2728 = vdwg.mxu0
    %v2729 = vmax.f32 %v2667, 0.0
    %v2730 = vmax.f32 %v2670, 0.0
    %v2731 = vmax.f32 %v2675, 0.0
    %v2732 = vmax.f32 %v2678, 0.0
    %v2733 = vmax.f32 %v2683, 0.0
    %v2734 = vmax.f32 %v2686, 0.0
    %v2735 = vmax.f32 %v2691, 0.0
    %v2736 = vmax.f32 %v2694, 0.0
    %v2737 = vmax.f32 %v2699, 0.0
    %v2738 = vmax.f32 %v2702, 0.0
    %v2739 = vmax.f32 %v2707, 0.0
    %v2740 = vmax.f32 %v2710, 0.0
    %v2741 = vmax.f32 %v2715, 0.0
    %v2742 = vmax.f32 %v2718, 0.0
    %v2743 = vmax.f32 %v2723, 0.0
    %v2744 = vmax.f32 %v2726, 0.0
    %v2745 = vld [vmem:[#allocation10] sm:$0xff]
    %v2746 = vpack.c.bf16 %v2745, %v2745
    %v2747 = vpack.c.bf16 %v2730, %v2729
    %v2748 = vpack.c.bf16 %v2732, %v2731
    %v2749 = vpack.c.bf16 %v2734, %v2733
    %v2750 = vpack.c.bf16 %v2736, %v2735
    %v2751 = vpack.c.bf16 %v2738, %v2737
    %v2752 = vpack.c.bf16 %v2740, %v2739
    %v2753 = vpack.c.bf16 %v2742, %v2741
    %v2754 = vpack.c.bf16 %v2744, %v2743
    %2755 = vmatprep.subr.bf16.mxu0 0
    %2756 = vmatpush1.bf16.msra.mxu0 %v2754
    %2757 = vmatprep.subr.bf16.mxu0 0
    %2758 = vmatpush1.bf16.msra.mxu0 %v2753
    %2759 = vmatprep.subr.bf16.mxu0 0
    %2760 = vmatpush1.bf16.msra.mxu0 %v2752
    %2761 = vmatprep.subr.bf16.mxu0 0
    %2762 = vmatpush1.bf16.msra.mxu0 %v2751
    %2763 = vmatprep.subr.bf16.mxu0 0
    %2764 = vmatpush1.bf16.msra.mxu0 %v2750
    %2765 = vmatprep.subr.bf16.mxu0 0
    %2766 = vmatpush1.bf16.msra.mxu0 %v2749
    %2767 = vmatprep.subr.bf16.mxu0 0
    %2768 = vmatpush1.bf16.msra.mxu0 %v2748
    %2769 = vmatprep.subr.bf16.mxu0 0
    %2770 = vmatpush1.bf16.msra.mxu0 %v2747
    %2771 = vmatprep.subr.bf16.mxu0 0
    %2772 = vmatpush2.bf16.msra.mxu0 0
    %2773 = vmatprep.subr.bf16.mxu0 0
    %2774 = vmatpush2.bf16.msra.mxu0 0
    %2775 = vmatprep.subr.bf16.mxu0 0
    %2776 = vmatpush2.bf16.msra.mxu0 0
    %2777 = vmatprep.subr.bf16.mxu0 0
    %2778 = vmatpush2.bf16.msra.mxu0 0
    %2779 = vmatprep.subr.bf16.mxu0 0
    %2780 = vmatpush2.bf16.msra.mxu0 0
    %2781 = vmatprep.subr.bf16.mxu0 0
    %2782 = vmatpush2.bf16.msra.mxu0 0
    %2783 = vmatprep.subr.bf16.mxu0 0
    %2784 = vmatpush2.bf16.msra.mxu0 0
    %2785 = vmatprep.subr.bf16.mxu0 0
    %2786 = vmatpush2.bf16.msra.mxu0 0
    %2787 = vmatprep.mubr.bf16.mxu0 0
    %2788 = vmatmul.mubr.bf16.gmra.mxu0 %v2746
    %v2789 = vpop.f32.mrf.mxu0
    %v2790 = vadd.f32 0.0, %v2789
    %v2791 = vpop.f32.mrf.mxu0
    %v2792 = vpop.f32.mrf.mxu0
    %v2793 = vpop.f32.mrf.mxu0
    %2794 = vdwg.mxu0
    %v2795 = vpack.c.bf16 %v2790, %v2790
    %v2796 = vld [vmem:[#allocation13] sm:$0xff]
    %v2797 = vld [vmem:[#allocation13 + $0x8] sm:$0xff]
    %v2798 = vld [vmem:[#allocation13 + $0x10] sm:$0xff]
    %v2799 = vld [vmem:[#allocation13 + $0x18] sm:$0xff]
    %v2800 = vld [vmem:[#allocation13 + $0x20] sm:$0xff]
    %v2801 = vld [vmem:[#allocation13 + $0x28] sm:$0xff]
    %v2802 = vld [vmem:[#allocation13 + $0x30] sm:$0xff]
    %v2803 = vld [vmem:[#allocation13 + $0x38] sm:$0xff]
    %v2804 = vld [vmem:[#allocation13 + $0x40] sm:$0xff]
    %v2805 = vld [vmem:[#allocation13 + $0x48] sm:$0xff]
    %v2806 = vld [vmem:[#allocation13 + $0x50] sm:$0xff]
    %v2807 = vld [vmem:[#allocation13 + $0x58] sm:$0xff]
    %v2808 = vld [vmem:[#allocation13 + $0x60] sm:$0xff]
    %v2809 = vld [vmem:[#allocation13 + $0x68] sm:$0xff]
    %v2810 = vld [vmem:[#allocation13 + $0x70] sm:$0xff]
    %v2811 = vld [vmem:[#allocation13 + $0x78] sm:$0xff]
    %v2812 = vpack.c.bf16 %v2797, %v2796
    %v2813 = vpack.c.bf16 %v2799, %v2798
    %v2814 = vpack.c.bf16 %v2801, %v2800
    %v2815 = vpack.c.bf16 %v2803, %v2802
    %v2816 = vpack.c.bf16 %v2805, %v2804
    %v2817 = vpack.c.bf16 %v2807, %v2806
    %v2818 = vpack.c.bf16 %v2809, %v2808
    %v2819 = vpack.c.bf16 %v2811, %v2810
    %v2820 = vld [vmem:[%s12] sm:$0x1]
    %v2822 = vlaneseq
    %v2823 = vshrl.u32 %v2822, 7
    %v2824 = vsub.s32 0, %v2823
    %v2825 = vrot.slane %v2820, %v2824
    %2827 = vmatprep.subr.bf16.mxu0 0
    %2828 = vmatpush1.bf16.msra.mxu0 %v2819
    %2829 = vmatprep.subr.bf16.mxu0 0
    %2830 = vmatpush1.bf16.msra.mxu0 %v2818
    %2831 = vmatprep.subr.bf16.mxu0 0
    %2832 = vmatpush1.bf16.msra.mxu0 %v2817
    %2833 = vmatprep.subr.bf16.mxu0 0
    %2834 = vmatpush1.bf16.msra.mxu0 %v2816
    %2835 = vmatprep.subr.bf16.mxu0 0
    %2836 = vmatpush1.bf16.msra.mxu0 %v2815
    %2837 = vmatprep.subr.bf16.mxu0 0
    %2838 = vmatpush1.bf16.msra.mxu0 %v2814
    %2839 = vmatprep.subr.bf16.mxu0 0
    %2840 = vmatpush1.bf16.msra.mxu0 %v2813
    %2841 = vmatprep.subr.bf16.mxu0 0
    %2842 = vmatpush1.bf16.msra.mxu0 %v2812
    %2843 = vmatprep.subr.bf16.mxu0 0
    %2844 = vmatpush2.bf16.msra.mxu0 0
    %2845 = vmatprep.subr.bf16.mxu0 0
    %2846 = vmatpush2.bf16.msra.mxu0 0
    %2847 = vmatprep.subr.bf16.mxu0 0
    %2848 = vmatpush2.bf16.msra.mxu0 0
    %2849 = vmatprep.subr.bf16.mxu0 0
    %2850 = vmatpush2.bf16.msra.mxu0 0
    %2851 = vmatprep.subr.bf16.mxu0 0
    %2852 = vmatpush2.bf16.msra.mxu0 0
    %2853 = vmatprep.subr.bf16.mxu0 0
    %2854 = vmatpush2.bf16.msra.mxu0 0
    %2855 = vmatprep.subr.bf16.mxu0 0
    %2856 = vmatpush2.bf16.msra.mxu0 0
    %2857 = vmatprep.subr.bf16.mxu0 0
    %2858 = vmatpush2.bf16.msra.mxu0 0
    %2859 = vmatprep.mubr.bf16.mxu0 0
    %2860 = vmatmul.mubr.bf16.gmra.mxu0 %v2795
    %v2861 = vpop.f32.mrf.mxu0
    %v2862 = vadd.f32 %v2825, %v2861
    %v2863 = vpop.f32.mrf.mxu0
    %v2864 = vpop.f32.mrf.mxu0
    %v2865 = vpop.f32.mrf.mxu0
    %2866 = vdwg.mxu0
    %v2867 = vpack.c.bf16 %v2862, %v2862
    %v2868 = vld [vmem:[#allocation15] sm:$0xff]
    %v2869 = vld [vmem:[#allocation15 + $0x8] sm:$0xff]
    %v2870 = vld [vmem:[#allocation15 + $0x10] sm:$0xff]
    %v2871 = vld [vmem:[#allocation15 + $0x18] sm:$0xff]
    %v2872 = vld [vmem:[#allocation15 + $0x20] sm:$0xff]
    %v2873 = vld [vmem:[#allocation15 + $0x28] sm:$0xff]
    %v2874 = vld [vmem:[#allocation15 + $0x30] sm:$0xff]
    %v2875 = vld [vmem:[#allocation15 + $0x38] sm:$0xff]
    %v2876 = vld [vmem:[#allocation15 + $0x40] sm:$0xff]
    %v2877 = vld [vmem:[#allocation15 + $0x48] sm:$0xff]
    %v2878 = vld [vmem:[#allocation15 + $0x50] sm:$0xff]
    %v2879 = vld [vmem:[#allocation15 + $0x58] sm:$0xff]
    %v2880 = vld [vmem:[#allocation15 + $0x60] sm:$0xff]
    %v2881 = vld [vmem:[#allocation15 + $0x68] sm:$0xff]
    %v2882 = vld [vmem:[#allocation15 + $0x70] sm:$0xff]
    %v2883 = vld [vmem:[#allocation15 + $0x78] sm:$0xff]
    %v2884 = vpack.c.bf16 %v2869, %v2868
    %v2885 = vpack.c.bf16 %v2871, %v2870
    %v2886 = vpack.c.bf16 %v2873, %v2872
    %v2887 = vpack.c.bf16 %v2875, %v2874
    %v2888 = vpack.c.bf16 %v2877, %v2876
    %v2889 = vpack.c.bf16 %v2879, %v2878
    %v2890 = vpack.c.bf16 %v2881, %v2880
    %v2891 = vpack.c.bf16 %v2883, %v2882
    %v2892 = vld [vmem:[%s14] sm:$0x1]
    %v2894 = vlaneseq
    %v2895 = vshrl.u32 %v2894, 7
    %v2896 = vsub.s32 0, %v2895
    %v2897 = vrot.slane %v2892, %v2896
    %2899 = vmatprep.subr.bf16.mxu0 0
    %2900 = vmatpush1.bf16.msra.mxu0 %v2891
    %2901 = vmatprep.subr.bf16.mxu0 0
    %2902 = vmatpush1.bf16.msra.mxu0 %v2890
    %2903 = vmatprep.subr.bf16.mxu0 0
    %2904 = vmatpush1.bf16.msra.mxu0 %v2889
    %2905 = vmatprep.subr.bf16.mxu0 0
    %2906 = vmatpush1.bf16.msra.mxu0 %v2888
    %2907 = vmatprep.subr.bf16.mxu0 0
    %2908 = vmatpush1.bf16.msra.mxu0 %v2887
    %2909 = vmatprep.subr.bf16.mxu0 0
    %2910 = vmatpush1.bf16.msra.mxu0 %v2886
    %2911 = vmatprep.subr.bf16.mxu0 0
    %2912 = vmatpush1.bf16.msra.mxu0 %v2885
    %2913 = vmatprep.subr.bf16.mxu0 0
    %2914 = vmatpush1.bf16.msra.mxu0 %v2884
    %2915 = vmatprep.subr.bf16.mxu0 0
    %2916 = vmatpush2.bf16.msra.mxu0 0
    %2917 = vmatprep.subr.bf16.mxu0 0
    %2918 = vmatpush2.bf16.msra.mxu0 0
    %2919 = vmatprep.subr.bf16.mxu0 0
    %2920 = vmatpush2.bf16.msra.mxu0 0
    %2921 = vmatprep.subr.bf16.mxu0 0
    %2922 = vmatpush2.bf16.msra.mxu0 0
    %2923 = vmatprep.subr.bf16.mxu0 0
    %2924 = vmatpush2.bf16.msra.mxu0 0
    %2925 = vmatprep.subr.bf16.mxu0 0
    %2926 = vmatpush2.bf16.msra.mxu0 0
    %2927 = vmatprep.subr.bf16.mxu0 0
    %2928 = vmatpush2.bf16.msra.mxu0 0
    %2929 = vmatprep.subr.bf16.mxu0 0
    %2930 = vmatpush2.bf16.msra.mxu0 0
    %2931 = vmatprep.mubr.bf16.mxu0 0
    %2932 = vmatmul.mubr.bf16.gmra.mxu0 %v2867
    %v2933 = vpop.f32.mrf.mxu0
    %v2934 = vadd.f32 %v2897, %v2933
    %v2935 = vpop.f32.mrf.mxu0
    %v2936 = vpop.f32.mrf.mxu0
    %v2937 = vpop.f32.mrf.mxu0
    %2938 = vdwg.mxu0
    %v2939 = vlaneseq
    %v2940 = vand.u32 %v2939, 127
    %vm2941 = vcmp.lt.s32.totalorder %v2940, 8
    %v2942 = vsel %vm2941, %v2934, -1e+30
    %2943 = vmax.xlane.f32.xlu0 %v2942
    %v2944 = vpop.xlane.xlu0 %2943
    %v2945 = vsub.f32 %v2942, %v2944
    %v2946 = vmul.f32 %v2945, 1.442695
    %v2947 = vpow.pop %v2946
    %2948 = vadd.xlane.f32.xlu0 %v2947
    %v2949 = vpop.xlane.xlu0 %2948
    %v2950 = vlog2.pop %v2949
    %v2951 = vmul.f32 %v2950, 0.6931472
    %v2952 = vsub.f32 %v2945, %v2951
    %2953 = vst [vmem:[#allocation16] sm:$0xff] %v2952
    // Predicated region
    $region94: #{tpu_custom_call.1} parent=1 // pred_check
      _
    $region95: #{tpu_custom_call.1} parent=1 // pred_check_branch
      %2955 = sbr.rel (0) target = $region97
    $region96: #{tpu_custom_call.1} parent=1 // pred_region
      %s2957 = ssub.s32 128, 128
      %2958 = vsyncadd [#allocation4], %s2957
      %s2960 = sshll.u32 [#allocation16], 4
      %s2961 = int_to_ptr.vmem [resolvable:$true] %s2960
      %2963 = dma.vmem_to_hbm [thread:$0]  %s2961, 128, %s15, [#allocation4]
    $region97: #{tpu_custom_call.1} parent=1 // pred_fallthru
      _
    // Predicated region
    $region98: #{tpu_custom_call.1} parent=1 // pred_check
      _
    $region99: #{tpu_custom_call.1} parent=1 // pred_check_branch
      %2965 = sbr.rel (0) target = $region101
    $region100: #{tpu_custom_call.1} parent=1 // pred_region
      %2966 = dma.done [#allocation4], 128
    $region101: #{tpu_custom_call.1} parent=1 // pred_fallthru
      _
    %2967 = vsyncpa [#allocation3], 1
    %2968 = vsyncpa [#allocation8], 1
    %2969 = vsyncpa [#allocation11], 1
    %2970 = vsyncpa [#allocation14], 1
    %2971 = vsyncpa [#allocation4], 1
    %2972 = vsyncpa [#allocation5], 1

</llo_original>
